<compile_context>
chip_gen: v5e
topology: v5e:2x2
jax: 0.10.0
libtpu: 0.0.40
codegen_flags: <defaults>
</compile_context>

<pallas_src>
import math

import numpy as np
import jax
import jax.numpy as jnp
from jax.experimental import pallas as pl
from jax.experimental.pallas import tpu as pltpu

# ----------------------------------------------------------------------------
# Small test configuration, consistent with BilinearUpsample(in_res, dim, out_dim)
# ----------------------------------------------------------------------------
BS = 2
IN_RES = 16          # H = W
DIM = 32             # C (LayerNorm / reduction input dim)
OUT_DIM = 16         # out_dim (divisible by 4: sinusoidal emb_dim = out_dim//2 must be even)
LN_EPS = 1e-5


# ----------------------------------------------------------------------------
# Host-side constant builders (exact PyTorch semantics)
# ----------------------------------------------------------------------------
def _cubic_k(x, A=-0.75):
    # torch bicubic kernel (cubic convolution, A = -0.75)
    x = abs(x)
    if x <= 1.0:
        return (A + 2.0) * x ** 3 - (A + 3.0) * x ** 2 + 1.0
    if x < 2.0:
        return A * x ** 3 - 5.0 * A * x ** 2 + 8.0 * A * x - 4.0 * A
    return 0.0


def _up2_taps(n):
    """4 clamped source indices + cubic weights per output row
    (scale_factor=2, align_corners=False -> half-pixel mapping)."""
    idx = np.zeros((2 * n, 4), np.int32)
    wts = np.zeros((2 * n, 4), np.float32)
    for j in range(2 * n):
        s = (j + 0.5) / 2.0 - 0.5
        fl = int(np.floor(s))
        t = s - fl
        for m in range(4):
            idx[j, m] = min(max(fl - 1 + m, 0), n - 1)
            wts[j, m] = _cubic_k(t + 1 - m)
    return idx, wts


def _up2_matrix(n):
    """Dense (2n, n) 1-D bicubic x2 interpolation matrix."""
    idx, wts = _up2_taps(n)
    U = np.zeros((2 * n, n), np.float32)
    for j in range(2 * n):
        for m in range(4):
            U[j, idx[j, m]] += wts[j, m]
    return U


def _bicubic_up2_matrix(h, w):
    """(4hw, hw) combined 2-D interpolation matrix over row-major (h, w) tokens."""
    return np.kron(_up2_matrix(h), _up2_matrix(w)).astype(np.float32)


def _sin_table(num_pos, emb_dim):
    # SinusoidalPositionalEmbedding.get_embedding (div_half_dim=False, padding_idx=0)
    half = emb_dim // 2
    e = np.log(10000) / (half - 1)
    freqs = np.exp(np.arange(half) * -e)
    pos = np.arange(num_pos)[:, None] * freqs[None, :]
    emb = np.concatenate([np.sin(pos), np.cos(pos)], axis=1)
    emb[0, :] = 0.0
    return emb.astype(np.float32)


def _pos_grid_tokens(h, w, out_dim):
    """make_grid2d(h, w) flattened token-major to (h*w, out_dim);
    channel order [x-embedding ; y-embedding] matches torch.cat(dim=1)."""
    emb = out_dim // 2
    tx = _sin_table(w + 1, emb)[1:w + 1]       # (w, emb)  positions 1..w
    ty = _sin_table(h + 1, emb)[1:h + 1]       # (h, emb)  positions 1..h
    gx = np.broadcast_to(tx[None, :, :], (h, w, emb))
    gy = np.broadcast_to(ty[:, None, :], (h, w, emb))
    g = np.concatenate([gx, gy], axis=-1)      # (h, w, out_dim)
    return g.reshape(h * w, out_dim).astype(np.float32)


def _pos_grid_nchw(h, w, b, out_dim):
    """make_grid2d exactly as the PyTorch module builds it: (B, out_dim, h, w)."""
    emb = out_dim // 2
    tx = _sin_table(w + 1, emb)[1:w + 1].T     # (emb, w)
    ty = _sin_table(h + 1, emb)[1:h + 1].T     # (emb, h)
    x_grid = np.broadcast_to(tx[None, :, None, :], (b, emb, h, w))
    y_grid = np.broadcast_to(ty[None, :, :, None], (b, emb, h, w))
    return np.concatenate([x_grid, y_grid], axis=1).astype(np.float32)


# ----------------------------------------------------------------------------
# Fused Pallas kernel: bicubic-as-matmul -> LayerNorm -> Linear -> + alpha*grid
# ----------------------------------------------------------------------------
def _bilinear_upsample_kernel(x_ref, up_ref, lnw_ref, lnb_ref, rw_ref, rb_ref,
                              pos_ref, alpha_ref, o_ref):
    x = x_ref[0]                                                        # (N, C)

    # bicubic x2 upsample of this batch element as a single MXU matmul: (4N,N)@(N,C)
    y = jnp.dot(up_ref[...], x, preferred_element_type=jnp.float32)    # (4N, C)

    # LayerNorm over channels -- intermediate stays in VMEM / vregs
    mean = jnp.mean(y, axis=-1, keepdims=True)
    var = jnp.mean(jnp.square(y - mean), axis=-1, keepdims=True)
    yn = (y - mean) * jax.lax.rsqrt(var + LN_EPS)
    yn = yn * lnw_ref[...] + lnb_ref[...]

    # channel reduction (Linear C -> out_dim) on the MXU
    z = jnp.dot(yn, rw_ref[...], preferred_element_type=jnp.float32) + rb_ref[...]

    # + alpha * sinusoidal positional grid (token-major layout)
    z = z + alpha_ref[...] * pos_ref[...]

    o_ref[0] = z.astype(o_ref.dtype)


def bilinear_upsample(x, params, in_res):
    """x: (B, N, C) with N = in_res**2 -> (B, 4N, out_dim)."""
    B, N, C = x.shape
    assert N == in_res * in_res
    out_dim = params['red_w'].shape[1]
    N4 = 4 * N

    up_mat = jnp.asarray(_bicubic_up2_matrix(in_res, in_res))                  # (4N, N)
    pos_grid = jnp.asarray(_pos_grid_tokens(2 * in_res, 2 * in_res, out_dim))  # (4N, out_dim)

    return pl.pallas_call(
        _bilinear_upsample_kernel,
        out_shape=jax.ShapeDtypeStruct((B, N4, out_dim), jnp.float32),
        grid=(B,),
        in_specs=[
            pl.BlockSpec((1, N, C), lambda b: (b, 0, 0)),        # per-batch tokens
            pl.BlockSpec((N4, N), lambda b: (0, 0)),             # bicubic interp matrix
            pl.BlockSpec((1, C), lambda b: (0, 0)),              # LN weight
            pl.BlockSpec((1, C), lambda b: (0, 0)),              # LN bias
            pl.BlockSpec((C, out_dim), lambda b: (0, 0)),        # reduction weight
            pl.BlockSpec((1, out_dim), lambda b: (0, 0)),        # reduction bias
            pl.BlockSpec((N4, out_dim), lambda b: (0, 0)),       # positional grid (tokens)
            pl.BlockSpec((1, 1), lambda b: (0, 0)),              # alpha
        ],
        out_specs=pl.BlockSpec((1, N4, out_dim), lambda b: (b, 0, 0)),
        compiler_params=pltpu.CompilerParams(
            dimension_semantics=("parallel",)),   # one batch element per TC on v7x
    )(x, up_mat,
      params['ln_w'].reshape(1, C), params['ln_b'].reshape(1, C),
      params['red_w'], params['red_b'].reshape(1, out_dim),
      pos_grid, params['alpha'].reshape(1, 1))


# ----------------------------------------------------------------------------
# Plain-JAX reference (gather-based bicubic; mirrors the PyTorch op ordering)
# ----------------------------------------------------------------------------
def reference_forward(x, params, in_res):
    B, N, C = x.shape
    H = W = in_res
    out_dim = params['red_w'].shape[1]

    xi = x.reshape(B, H, W, C).transpose(0, 3, 1, 2)          # NCHW

    def up_last(t):
        n = t.shape[-1]
        idx, wts = _up2_taps(n)
        return jnp.sum(t[..., jnp.asarray(idx)] * jnp.asarray(wts), axis=-1)

    xi = up_last(xi)                                          # along W
    xi = jnp.swapaxes(xi, -1, -2)
    xi = up_last(xi)                                          # along H
    xi = jnp.swapaxes(xi, -1, -2)                             # (B, C, 2H, 2W)

    xt = xi.transpose(0, 2, 3, 1).reshape(B, 4 * N, C)
    mean = jnp.mean(xt, axis=-1, keepdims=True)
    var = jnp.mean(jnp.square(xt - mean), axis=-1, keepdims=True)
    xt = (xt - mean) * jax.lax.rsqrt(var + LN_EPS)
    xt = xt * params['ln_w'] + params['ln_b']

    z = xt @ params['red_w'] + params['red_b']                # (B, 4N, out_dim)

    zimg = z.reshape(B, 2 * H, 2 * W, out_dim).transpose(0, 3, 1, 2)
    grid = jnp.asarray(_pos_grid_nchw(2 * H, 2 * W, B, out_dim))
    zimg = zimg + grid * params['alpha']
    return zimg.transpose(0, 2, 3, 1).reshape(B, 4 * N, out_dim)


# ----------------------------------------------------------------------------
if __name__ == "__main__":
    key = jax.random.PRNGKey(0)
    kx, kw, kb, ka = jax.random.split(key, 4)
    N = IN_RES * IN_RES

    x = jax.random.normal(kx, (BS, N, DIM), jnp.float32)
    params = {
        'ln_w': jnp.ones((DIM,), jnp.float32),
        'ln_b': jnp.zeros((DIM,), jnp.float32),
        'red_w': jax.random.normal(kw, (DIM, OUT_DIM), jnp.float32) / math.sqrt(DIM),
        'red_b': jax.random.normal(kb, (OUT_DIM,), jnp.float32) * 0.1,
        # module default init is zeros(1); nonzero here to exercise the grid path
        'alpha': jax.random.normal(ka, (1,), jnp.float32) * 0.5,
    }

    out = bilinear_upsample(x, params, IN_RES)
    out = jax.block_until_ready(out)

    assert out.shape == (BS, 4 * N, OUT_DIM), out.shape
    assert bool(jnp.all(jnp.isfinite(out)))

    # sanity check against an independent (gather-based) plain-JAX reference;
    # loose tolerance absorbs MXU vs. XLA default f32-matmul precision differences
    ref = jax.block_until_ready(reference_forward(x, params, IN_RES))
    np.testing.assert_allclose(np.asarray(out), np.asarray(ref), rtol=2e-2, atol=2e-2)

    print("KERNEL_OK")
</pallas_src>

<mosaic_0001>
module attributes {stable_mosaic.version = 11 : i64} {
  func.func @_bilinear_upsample_kernel(%arg0: i32, %arg1: memref<1x256x32xf32, #tpu.memory_space<vmem>>, %arg2: memref<1024x256xf32, #tpu.memory_space<vmem>>, %arg3: memref<1x32xf32, #tpu.memory_space<vmem>>, %arg4: memref<1x32xf32, #tpu.memory_space<vmem>>, %arg5: memref<32x16xf32, #tpu.memory_space<vmem>>, %arg6: memref<1x16xf32, #tpu.memory_space<vmem>>, %arg7: memref<1024x16xf32, #tpu.memory_space<vmem>>, %arg8: memref<1x1xf32, #tpu.memory_space<vmem>>, %arg9: memref<1x1024x16xf32, #tpu.memory_space<vmem>>) attributes {dimension_semantics = [#tpu.dimension_semantics<parallel>], iteration_bounds = array<i64: 2>, scalar_prefetch = 0 : i64, scratch_operands = 0 : i64, tpu.core_type = #tpu.core_type<tc>, window_params = [{transform_indices = @transform_0, window_bounds = array<i64: 1, 256, 32>}, {pipeline_mode = #tpu.pipeline_mode<synchronous>, transform_indices = @transform_1, window_bounds = array<i64: 1024, 256>}, {pipeline_mode = #tpu.pipeline_mode<synchronous>, transform_indices = @transform_2, window_bounds = array<i64: 1, 32>}, {pipeline_mode = #tpu.pipeline_mode<synchronous>, transform_indices = @transform_3, window_bounds = array<i64: 1, 32>}, {pipeline_mode = #tpu.pipeline_mode<synchronous>, transform_indices = @transform_4, window_bounds = array<i64: 32, 16>}, {pipeline_mode = #tpu.pipeline_mode<synchronous>, transform_indices = @transform_5, window_bounds = array<i64: 1, 16>}, {pipeline_mode = #tpu.pipeline_mode<synchronous>, transform_indices = @transform_6, window_bounds = array<i64: 1024, 16>}, {pipeline_mode = #tpu.pipeline_mode<synchronous>, transform_indices = @transform_7, window_bounds = array<i64: 1, 1>}, {transform_indices = @transform_8, window_bounds = array<i64: 1, 1024, 16>}]} {
    %c0 = arith.constant 0 : index
    %c0_0 = arith.constant 0 : index
    %c0_1 = arith.constant 0 : index
    %0 = vector.load %arg1[%c0, %c0_0, %c0_1] : memref<1x256x32xf32, #tpu.memory_space<vmem>>, vector<1x256x32xf32>
    %1 = vector.shape_cast %0 : vector<1x256x32xf32> to vector<256x32xf32>
    %c0_2 = arith.constant 0 : index
    %c0_3 = arith.constant 0 : index
    %2 = vector.load %arg2[%c0_2, %c0_3] : memref<1024x256xf32, #tpu.memory_space<vmem>>, vector<1024x256xf32>
    %cst = arith.constant dense<0.000000e+00> : vector<1024x32xf32>
    %3 = tpu.matmul %2, %1, %cst {dimension_numbers = #tpu.dot_dimension_numbers<[1], [0], [0], [1], [0, 0, 1, 1], [], []>} : vector<1024x256xf32>, vector<256x32xf32>, vector<1024x32xf32> -> vector<1024x32xf32>
    %cst_4 = arith.constant dense<0.000000e+00> : vector<1024xf32>
    %4 = vector.multi_reduction <add>, %3, %cst_4 [1] : vector<1024x32xf32> to vector<1024xf32>
    %5 = vector.shape_cast %4 : vector<1024xf32> to vector<1024x1xf32>
    %cst_5 = arith.constant 3.200000e+01 : f32
    %6 = vector.broadcast %cst_5 : f32 to vector<1024x1xf32>
    %7 = arith.divf %5, %6 : vector<1024x1xf32>
    %8 = vector.broadcast %7 : vector<1024x1xf32> to vector<1024x32xf32>
    %9 = arith.subf %3, %8 : vector<1024x32xf32>
    %10 = arith.mulf %9, %9 : vector<1024x32xf32>
    %cst_6 = arith.constant dense<0.000000e+00> : vector<1024xf32>
    %11 = vector.multi_reduction <add>, %10, %cst_6 [1] : vector<1024x32xf32> to vector<1024xf32>
    %12 = vector.shape_cast %11 : vector<1024xf32> to vector<1024x1xf32>
    %cst_7 = arith.constant 3.200000e+01 : f32
    %13 = vector.broadcast %cst_7 : f32 to vector<1024x1xf32>
    %14 = arith.divf %12, %13 : vector<1024x1xf32>
    %15 = vector.broadcast %7 : vector<1024x1xf32> to vector<1024x32xf32>
    %16 = arith.subf %3, %15 : vector<1024x32xf32>
    %cst_8 = arith.constant 9.99999974E-6 : f32
    %17 = vector.broadcast %cst_8 : f32 to vector<1024x1xf32>
    %18 = arith.addf %14, %17 : vector<1024x1xf32>
    %19 = math.rsqrt %18 : vector<1024x1xf32>
    %20 = vector.broadcast %19 : vector<1024x1xf32> to vector<1024x32xf32>
    %21 = arith.mulf %16, %20 : vector<1024x32xf32>
    %c0_9 = arith.constant 0 : index
    %c0_10 = arith.constant 0 : index
    %22 = vector.load %arg3[%c0_9, %c0_10] : memref<1x32xf32, #tpu.memory_space<vmem>>, vector<1x32xf32>
    %23 = vector.broadcast %22 : vector<1x32xf32> to vector<1024x32xf32>
    %24 = arith.mulf %21, %23 : vector<1024x32xf32>
    %c0_11 = arith.constant 0 : index
    %c0_12 = arith.constant 0 : index
    %25 = vector.load %arg4[%c0_11, %c0_12] : memref<1x32xf32, #tpu.memory_space<vmem>>, vector<1x32xf32>
    %26 = vector.broadcast %25 : vector<1x32xf32> to vector<1024x32xf32>
    %27 = arith.addf %24, %26 : vector<1024x32xf32>
    %c0_13 = arith.constant 0 : index
    %c0_14 = arith.constant 0 : index
    %28 = vector.load %arg5[%c0_13, %c0_14] : memref<32x16xf32, #tpu.memory_space<vmem>>, vector<32x16xf32>
    %cst_15 = arith.constant dense<0.000000e+00> : vector<1024x16xf32>
    %29 = tpu.matmul %27, %28, %cst_15 {dimension_numbers = #tpu.dot_dimension_numbers<[1], [0], [0], [1], [0, 0, 1, 1], [], []>} : vector<1024x32xf32>, vector<32x16xf32>, vector<1024x16xf32> -> vector<1024x16xf32>
    %c0_16 = arith.constant 0 : index
    %c0_17 = arith.constant 0 : index
    %30 = vector.load %arg6[%c0_16, %c0_17] : memref<1x16xf32, #tpu.memory_space<vmem>>, vector<1x16xf32>
    %31 = vector.broadcast %30 : vector<1x16xf32> to vector<1024x16xf32>
    %32 = arith.addf %29, %31 : vector<1024x16xf32>
    %c0_18 = arith.constant 0 : index
    %c0_19 = arith.constant 0 : index
    %33 = vector.load %arg8[%c0_18, %c0_19] : memref<1x1xf32, #tpu.memory_space<vmem>>, vector<1x1xf32>
    %c0_20 = arith.constant 0 : index
    %c0_21 = arith.constant 0 : index
    %34 = vector.load %arg7[%c0_20, %c0_21] : memref<1024x16xf32, #tpu.memory_space<vmem>>, vector<1024x16xf32>
    %35 = vector.broadcast %33 : vector<1x1xf32> to vector<1024x16xf32>
    %36 = arith.mulf %35, %34 : vector<1024x16xf32>
    %37 = arith.addf %32, %36 : vector<1024x16xf32>
    %c0_22 = arith.constant 0 : index
    %c0_23 = arith.constant 0 : index
    %c0_24 = arith.constant 0 : index
    %38 = vector.load %arg9[%c0_22, %c0_23, %c0_24] : memref<1x1024x16xf32, #tpu.memory_space<vmem>>, vector<1x1024x16xf32>
    %39 = vector.shape_cast %38 : vector<1x1024x16xf32> to vector<1024x16xf32>
    %40 = vector.shape_cast %37 : vector<1024x16xf32> to vector<1x1024x16xf32>
    tpu.vector_store %arg9[%c0_22, %c0_23, %c0_24], %40 {strides = array<i32>} : memref<1x1024x16xf32, #tpu.memory_space<vmem>>, vector<1x1024x16xf32>,
    return
  }
  func.func @transform_0(%arg0: i32) -> (i32, i32, i32) {
    %c0_i32 = arith.constant 0 : i32
    %c0_i32_0 = arith.constant 0 : i32
    %c0_i32_1 = arith.constant 0 : i32
    return %arg0, %c0_i32, %c0_i32_0 : i32, i32, i32
  }
  func.func @transform_1(%arg0: i32) -> (i32, i32) {
    %c0_i32 = arith.constant 0 : i32
    %c0_i32_0 = arith.constant 0 : i32
    %c0_i32_1 = arith.constant 0 : i32
    return %c0_i32, %c0_i32_0 : i32, i32
  }
  func.func @transform_2(%arg0: i32) -> (i32, i32) {
    %c0_i32 = arith.constant 0 : i32
    %c0_i32_0 = arith.constant 0 : i32
    %c0_i32_1 = arith.constant 0 : i32
    return %c0_i32, %c0_i32_0 : i32, i32
  }
  func.func @transform_3(%arg0: i32) -> (i32, i32) {
    %c0_i32 = arith.constant 0 : i32
    %c0_i32_0 = arith.constant 0 : i32
    %c0_i32_1 = arith.constant 0 : i32
    return %c0_i32, %c0_i32_0 : i32, i32
  }
  func.func @transform_4(%arg0: i32) -> (i32, i32) {
    %c0_i32 = arith.constant 0 : i32
    %c0_i32_0 = arith.constant 0 : i32
    %c0_i32_1 = arith.constant 0 : i32
    return %c0_i32, %c0_i32_0 : i32, i32
  }
  func.func @transform_5(%arg0: i32) -> (i32, i32) {
    %c0_i32 = arith.constant 0 : i32
    %c0_i32_0 = arith.constant 0 : i32
    %c0_i32_1 = arith.constant 0 : i32
    return %c0_i32, %c0_i32_0 : i32, i32
  }
  func.func @transform_6(%arg0: i32) -> (i32, i32) {
    %c0_i32 = arith.constant 0 : i32
    %c0_i32_0 = arith.constant 0 : i32
    %c0_i32_1 = arith.constant 0 : i32
    return %c0_i32, %c0_i32_0 : i32, i32
  }
  func.func @transform_7(%arg0: i32) -> (i32, i32) {
    %c0_i32 = arith.constant 0 : i32
    %c0_i32_0 = arith.constant 0 : i32
    %c0_i32_1 = arith.constant 0 : i32
    return %c0_i32, %c0_i32_0 : i32, i32
  }
  func.func @transform_8(%arg0: i32) -> (i32, i32, i32) {
    %c0_i32 = arith.constant 0 : i32
    %c0_i32_0 = arith.constant 0 : i32
    %c0_i32_1 = arith.constant 0 : i32
    return %arg0, %c0_i32, %c0_i32_0 : i32, i32, i32
  }
}

</mosaic_0001>

<llo_original>
// kernel: tpu_custom_call.1
$region0: #{tpu_custom_call.1}
  #allocation0 [shape = 'u32[]', space=smem, size = 0x4, offset = 0x4, fixed_abs, tag = 'smem constant byte address 0x4 - core index']
  #allocation1 [shape = 'u32[72,128]{1,0:T(1,128)}', space=vmem, size = 0x9000, scoped, tag = 'internal scratch']
  #allocation2 [shape = 'f32[1,1]{1,0:T(1,128)S(1)}', space=vmem, size = 0x200, scoped, tag = 'scoped memory for tpu_custom_call.1']
  %s0 = inlined_call_operand.vmem [shape: f32[2,256,32], index: 0, kind: input, shape index: {}]
  %s1 = inlined_call_operand.hbm [shape: f32[1024,256], index: 1, kind: input, shape index: {}]
  %s2 = inlined_call_operand.vmem [shape: f32[1,32], index: 2, kind: input, shape index: {}]
  %s3 = inlined_call_operand.vmem [shape: f32[1,32], index: 3, kind: input, shape index: {}]
  %s4 = inlined_call_operand.vmem [shape: f32[32,16], index: 4, kind: input, shape index: {}]
  %s5 = inlined_call_operand.vmem [shape: f32[1,16], index: 5, kind: input, shape index: {}]
  %s6 = inlined_call_operand.vmem [shape: f32[1024,16], index: 6, kind: input, shape index: {}]
  %s7 = inlined_call_operand.<no memory space> [shape: f32[1,1], index: 7, kind: input, shape index: {}]
  %s8 = inlined_call_operand.vmem [shape: f32[2,1024,16], index: 8, kind: output, shape index: {}]
  %s9 = sld [smem:[#allocation0]]
  $region69: #{tpu_custom_call.1} parent=0
    _
  %s11 = ssub.s32 1, %s9
  %s12 = scalar_select 0, %s11, %s9
  %v13 = vstv %s7
  %14 = vst [vmem:[#allocation2] sm:$0x1] %v13
  $region1: #{tpu_custom_call.1} parent=0
    #allocation3 [shape = 'u8[1048576]{0}', space=vmem, size = 0x100000, scoped, tag = 'input window, operand 1, single buffered']
    #allocation4 [shape = 's32[2]{0}', space=sflag, size = 0x8, scoped, tag = 'scoped memory for tpu_custom_call.1']
    %15 = vsyncpa [#allocation4], 0
    loop: start=0, step=1, limit=4
    $region2: #{tpu_custom_call.1} parent=1 // loop_pre_header
      _
    $region3: #{tpu_custom_call.1} parent=1 // loop_header
      %s17 = sphi 0, %s21
      %p18 = scmp.ge.s32.totalorder %s17, 4
      %s27 = sphi 0, %s29
      %s30 = sphi 0, %s27
      %s31 = sphi 0, %s30
      %s47 = sphi 0, %s31
      %s51 = sphi 0, %s51
      %s53 = sphi 0, %s51
      %s54 = sphi 0, %s53
      %s68 = sphi 0, %s54
      %s72 = sphi 0, %s72
      %s74 = sphi 0, %s72
      %s75 = sphi 0, %s74
      %s89 = sphi 0, %s75
      %s93 = sphi 0, %s93
      %s95 = sphi 0, %s93
      %s96 = sphi 0, %s95
      %s110 = sphi 0, %s96
      %s114 = sphi 0, %s114
      %s116 = sphi 0, %s114
      %s117 = sphi 0, %s116
      %s131 = sphi 0, %s117
      %s135 = sphi 0, %s135
      %s137 = sphi 0, %s135
      %s138 = sphi 0, %s137
      %s152 = sphi 0, %s138
      %s156 = sphi 0, %s156
      %s158 = sphi 0, %s156
      %s159 = sphi 0, %s158
      %s173 = sphi 0, %s159
      %s177 = sphi 0, %s177
      %s179 = sphi 0, %s177
      %s180 = sphi 0, %s179
      %s194 = sphi 0, %s180
      %s200 = sphi 0, %s202
      %s203 = sphi 0, %s200
      %s204 = sphi 0, %s203
      %s220 = sphi 0, %s204
    $region4: #{tpu_custom_call.1} parent=1 // loop_header_branch
      %20 = sbr.rel (%p18) target = $region8
    $region5: #{tpu_custom_call.1} parent=1 // loop_body
      %s22 = ssub.s32 %s17, 1
      %s23 = ssub.s32 %s17, 2
      %s24 = sadd.s32 %s17, 1
      %s25 = ssub.s32 %s17, %s24
      %p26 = scmp.eq.s32.totalorder %s25, 0
      %s28 = sadd.s32 %s27, 1
      %s29 = scalar_select %p26, %s27, %s28
      %p32 = pneg %p26
      %p33 = scmp.eq.s32.totalorder %s17, 1
      %p34 = por %p32, %p33
      %p35 = scmp.ne.s32.totalorder %s27, %s30
      %p36 = scmp.eq.s32.totalorder %s17, 0
      %p37 = por %p35, %p36
      %p38 = scmp.ne.s32.totalorder %s27, %s30
      %p39 = scmp.eq.s32.totalorder %s22, 1
      %p40 = por %p38, %p39
      %p41 = scmp.ne.s32.totalorder %s30, %s31
      %p42 = scmp.eq.s32.totalorder %s22, 0
      %p43 = por %p41, %p42
      %p44 = scmp.ne.s32.totalorder %s30, %s31
      %p45 = scmp.eq.s32.totalorder %s23, 1
      %p46 = por %p44, %p45
      %p48 = scmp.ne.s32.totalorder %s31, %s47
      %p49 = scmp.eq.s32.totalorder %s23, 0
      %p50 = por %p48, %p49
      %s52 = sadd.s32 %s51, 1
      %p55 = scmp.eq.s32.totalorder %s17, 1
      %p56 = scmp.ne.s32.totalorder %s51, %s53
      %p57 = scmp.eq.s32.totalorder %s17, 0
      %p58 = por %p56, %p57
      %p59 = scmp.ne.s32.totalorder %s51, %s53
      %p60 = scmp.eq.s32.totalorder %s22, 1
      %p61 = por %p59, %p60
      %p62 = scmp.ne.s32.totalorder %s53, %s54
      %p63 = scmp.eq.s32.totalorder %s22, 0
      %p64 = por %p62, %p63
      %p65 = scmp.ne.s32.totalorder %s53, %s54
      %p66 = scmp.eq.s32.totalorder %s23, 1
      %p67 = por %p65, %p66
      %p69 = scmp.ne.s32.totalorder %s54, %s68
      %p70 = scmp.eq.s32.totalorder %s23, 0
      %p71 = por %p69, %p70
      %s73 = sadd.s32 %s72, 1
      %p76 = scmp.eq.s32.totalorder %s17, 1
      %p77 = scmp.ne.s32.totalorder %s72, %s74
      %p78 = scmp.eq.s32.totalorder %s17, 0
      %p79 = por %p77, %p78
      %p80 = scmp.ne.s32.totalorder %s72, %s74
      %p81 = scmp.eq.s32.totalorder %s22, 1
      %p82 = por %p80, %p81
      %p83 = scmp.ne.s32.totalorder %s74, %s75
      %p84 = scmp.eq.s32.totalorder %s22, 0
      %p85 = por %p83, %p84
      %p86 = scmp.ne.s32.totalorder %s74, %s75
      %p87 = scmp.eq.s32.totalorder %s23, 1
      %p88 = por %p86, %p87
      %p90 = scmp.ne.s32.totalorder %s75, %s89
      %p91 = scmp.eq.s32.totalorder %s23, 0
      %p92 = por %p90, %p91
      %s94 = sadd.s32 %s93, 1
      %p97 = scmp.eq.s32.totalorder %s17, 1
      %p98 = scmp.ne.s32.totalorder %s93, %s95
      %p99 = scmp.eq.s32.totalorder %s17, 0
      %p100 = por %p98, %p99
      %p101 = scmp.ne.s32.totalorder %s93, %s95
      %p102 = scmp.eq.s32.totalorder %s22, 1
      %p103 = por %p101, %p102
      %p104 = scmp.ne.s32.totalorder %s95, %s96
      %p105 = scmp.eq.s32.totalorder %s22, 0
      %p106 = por %p104, %p105
      %p107 = scmp.ne.s32.totalorder %s95, %s96
      %p108 = scmp.eq.s32.totalorder %s23, 1
      %p109 = por %p107, %p108
      %p111 = scmp.ne.s32.totalorder %s96, %s110
      %p112 = scmp.eq.s32.totalorder %s23, 0
      %p113 = por %p111, %p112
      %s115 = sadd.s32 %s114, 1
      %p118 = scmp.eq.s32.totalorder %s17, 1
      %p119 = scmp.ne.s32.totalorder %s114, %s116
      %p120 = scmp.eq.s32.totalorder %s17, 0
      %p121 = por %p119, %p120
      %p122 = scmp.ne.s32.totalorder %s114, %s116
      %p123 = scmp.eq.s32.totalorder %s22, 1
      %p124 = por %p122, %p123
      %p125 = scmp.ne.s32.totalorder %s116, %s117
      %p126 = scmp.eq.s32.totalorder %s22, 0
      %p127 = por %p125, %p126
      %p128 = scmp.ne.s32.totalorder %s116, %s117
      %p129 = scmp.eq.s32.totalorder %s23, 1
      %p130 = por %p128, %p129
      %p132 = scmp.ne.s32.totalorder %s117, %s131
      %p133 = scmp.eq.s32.totalorder %s23, 0
      %p134 = por %p132, %p133
      %s136 = sadd.s32 %s135, 1
      %p139 = scmp.eq.s32.totalorder %s17, 1
      %p140 = scmp.ne.s32.totalorder %s135, %s137
      %p141 = scmp.eq.s32.totalorder %s17, 0
      %p142 = por %p140, %p141
      %p143 = scmp.ne.s32.totalorder %s135, %s137
      %p144 = scmp.eq.s32.totalorder %s22, 1
      %p145 = por %p143, %p144
      %p146 = scmp.ne.s32.totalorder %s137, %s138
      %p147 = scmp.eq.s32.totalorder %s22, 0
      %p148 = por %p146, %p147
      %p149 = scmp.ne.s32.totalorder %s137, %s138
      %p150 = scmp.eq.s32.totalorder %s23, 1
      %p151 = por %p149, %p150
      %p153 = scmp.ne.s32.totalorder %s138, %s152
      %p154 = scmp.eq.s32.totalorder %s23, 0
      %p155 = por %p153, %p154
      %s157 = sadd.s32 %s156, 1
      %p160 = scmp.eq.s32.totalorder %s17, 1
      %p161 = scmp.ne.s32.totalorder %s156, %s158
      %p162 = scmp.eq.s32.totalorder %s17, 0
      %p163 = por %p161, %p162
      %p164 = scmp.ne.s32.totalorder %s156, %s158
      %p165 = scmp.eq.s32.totalorder %s22, 1
      %p166 = por %p164, %p165
      %p167 = scmp.ne.s32.totalorder %s158, %s159
      %p168 = scmp.eq.s32.totalorder %s22, 0
      %p169 = por %p167, %p168
      %p170 = scmp.ne.s32.totalorder %s158, %s159
      %p171 = scmp.eq.s32.totalorder %s23, 1
      %p172 = por %p170, %p171
      %p174 = scmp.ne.s32.totalorder %s159, %s173
      %p175 = scmp.eq.s32.totalorder %s23, 0
      %p176 = por %p174, %p175
      %s178 = sadd.s32 %s177, 1
      %p181 = scmp.eq.s32.totalorder %s17, 1
      %p182 = scmp.ne.s32.totalorder %s177, %s179
      %p183 = scmp.eq.s32.totalorder %s17, 0
      %p184 = por %p182, %p183
      %p185 = scmp.ne.s32.totalorder %s177, %s179
      %p186 = scmp.eq.s32.totalorder %s22, 1
      %p187 = por %p185, %p186
      %p188 = scmp.ne.s32.totalorder %s179, %s180
      %p189 = scmp.eq.s32.totalorder %s22, 0
      %p190 = por %p188, %p189
      %p191 = scmp.ne.s32.totalorder %s179, %s180
      %p192 = scmp.eq.s32.totalorder %s23, 1
      %p193 = por %p191, %p192
      %p195 = scmp.ne.s32.totalorder %s180, %s194
      %p196 = scmp.eq.s32.totalorder %s23, 0
      %p197 = por %p195, %p196
      %s198 = ssub.s32 %s17, %s24
      %p199 = scmp.eq.s32.totalorder %s198, 0
      %s201 = sadd.s32 %s200, 1
      %s202 = scalar_select %p199, %s200, %s201
      %p205 = pneg %p199
      %p206 = scmp.eq.s32.totalorder %s17, 1
      %p207 = por %p205, %p206
      %p208 = scmp.ne.s32.totalorder %s200, %s203
      %p209 = scmp.eq.s32.totalorder %s17, 0
      %p210 = por %p208, %p209
      %p211 = scmp.ne.s32.totalorder %s200, %s203
      %p212 = scmp.eq.s32.totalorder %s22, 1
      %p213 = por %p211, %p212
      %p214 = scmp.ne.s32.totalorder %s203, %s204
      %p215 = scmp.eq.s32.totalorder %s22, 0
      %p216 = por %p214, %p215
      %p217 = scmp.ne.s32.totalorder %s203, %s204
      %p218 = scmp.eq.s32.totalorder %s23, 1
      %p219 = por %p217, %p218
      %p221 = scmp.ne.s32.totalorder %s204, %s220
      %p222 = scmp.eq.s32.totalorder %s23, 0
      %p223 = por %p221, %p222
      %p224 = scmp.le.s32.totalorder 1, %s17
      %p225 = scmp.lt.s32.totalorder %s17, 3
      %p226 = pnand %p224, %p225
      %p227 = pneg %p226
      // Predicated region
      $region9: #{tpu_custom_call.1} parent=5 // pred_check
        _
      $region10: #{tpu_custom_call.1} parent=5 // pred_check_branch
        %229 = sbr.rel (%p226) target = $region12
      $region11: #{tpu_custom_call.1} parent=5 // pred_region
        %s230 = ssub.s32 %s17, 1
        // Predicated region
        $region13: #{tpu_custom_call.1} parent=11 // pred_check
          %p231 = pneg %p64
        $region14: #{tpu_custom_call.1} parent=11 // pred_check_branch
          %233 = sbr.rel (%p231) target = $region16
        $region15: #{tpu_custom_call.1} parent=11 // pred_region
          %235 = vsyncadd [#allocation4], 0
          %s236 = sshll.u32 %s1, 4
          %s237 = int_to_ptr.hbm [resolvable:$true] %s236
          %s238 = sshll.u32 [#allocation3], 4
          %s239 = int_to_ptr.vmem [resolvable:$true] %s238
          %244 = dma.hbm_to_vmem [thread:$0]  %s237, 32768, %s239, [#allocation4], 256, 256, 16
        $region16: #{tpu_custom_call.1} parent=11 // pred_fallthru
          _
        // Predicated region
        $region17: #{tpu_custom_call.1} parent=11 // pred_check
          %p245 = pneg %p85
        $region18: #{tpu_custom_call.1} parent=11 // pred_check_branch
          %247 = sbr.rel (%p245) target = $region20
        $region19: #{tpu_custom_call.1} parent=11 // pred_region
          _
        $region20: #{tpu_custom_call.1} parent=11 // pred_fallthru
          _
        // Predicated region
        $region21: #{tpu_custom_call.1} parent=11 // pred_check
          %p248 = pneg %p106
        $region22: #{tpu_custom_call.1} parent=11 // pred_check_branch
          %250 = sbr.rel (%p248) target = $region24
        $region23: #{tpu_custom_call.1} parent=11 // pred_region
          _
        $region24: #{tpu_custom_call.1} parent=11 // pred_fallthru
          _
        // Predicated region
        $region25: #{tpu_custom_call.1} parent=11 // pred_check
          %p251 = pneg %p127
        $region26: #{tpu_custom_call.1} parent=11 // pred_check_branch
          %253 = sbr.rel (%p251) target = $region28
        $region27: #{tpu_custom_call.1} parent=11 // pred_region
          _
        $region28: #{tpu_custom_call.1} parent=11 // pred_fallthru
          _
        // Predicated region
        $region29: #{tpu_custom_call.1} parent=11 // pred_check
          %p254 = pneg %p148
        $region30: #{tpu_custom_call.1} parent=11 // pred_check_branch
          %256 = sbr.rel (%p254) target = $region32
        $region31: #{tpu_custom_call.1} parent=11 // pred_region
          _
        $region32: #{tpu_custom_call.1} parent=11 // pred_fallthru
          _
        // Predicated region
        $region33: #{tpu_custom_call.1} parent=11 // pred_check
          %p257 = pneg %p169
        $region34: #{tpu_custom_call.1} parent=11 // pred_check_branch
          %259 = sbr.rel (%p257) target = $region36
        $region35: #{tpu_custom_call.1} parent=11 // pred_region
          _
        $region36: #{tpu_custom_call.1} parent=11 // pred_fallthru
          _
        // Predicated region
        $region37: #{tpu_custom_call.1} parent=11 // pred_check
          %p260 = pneg %p190
        $region38: #{tpu_custom_call.1} parent=11 // pred_check_branch
          %262 = sbr.rel (%p260) target = $region40
        $region39: #{tpu_custom_call.1} parent=11 // pred_region
          _
        $region40: #{tpu_custom_call.1} parent=11 // pred_fallthru
          _
      $region12: #{tpu_custom_call.1} parent=5 // pred_fallthru
        _
      %p263 = scmp.lt.s32.totalorder %s17, 2
      // Predicated region
      $region41: #{tpu_custom_call.1} parent=5 // pred_check
        %p264 = pneg %p263
      $region42: #{tpu_custom_call.1} parent=5 // pred_check_branch
        %266 = sbr.rel (%p264) target = $region44
      $region43: #{tpu_custom_call.1} parent=5 // pred_region
        // Predicated region
        $region45: #{tpu_custom_call.1} parent=43 // pred_check
          %p267 = pneg %p37
        $region46: #{tpu_custom_call.1} parent=43 // pred_check_branch
          %269 = sbr.rel (%p267) target = $region48
        $region47: #{tpu_custom_call.1} parent=43 // pred_region
          %p270 = scmp.lt.s32.totalorder %s17, 1
          %s271 = scalar_select %p270, %s17, 1
          %s272 = smul.addr %s271, 32
          %s273 = smul.addr %s272, 8
          %s274 = scalar_lea.vmem %s0, %s273
        $region48: #{tpu_custom_call.1} parent=43 // pred_fallthru
          _
      $region44: #{tpu_custom_call.1} parent=5 // pred_fallthru
        _
      %p275 = scmp.le.s32.totalorder 1, %s17
      %p276 = scmp.lt.s32.totalorder %s17, 3
      %p277 = pnand %p275, %p276
      %p278 = pneg %p277
      // Predicated region
      $region49: #{tpu_custom_call.1} parent=5 // pred_check
        _
      $region50: #{tpu_custom_call.1} parent=5 // pred_check_branch
        %280 = sbr.rel (%p277) target = $region52
      $region51: #{tpu_custom_call.1} parent=5 // pred_region
        %s281 = ssub.s32 %s17, 1
        // Predicated region
        $region53: #{tpu_custom_call.1} parent=51 // pred_check
          %p282 = pneg %p64
        $region54: #{tpu_custom_call.1} parent=51 // pred_check_branch
          %284 = sbr.rel (%p282) target = $region56
        $region55: #{tpu_custom_call.1} parent=51 // pred_region
          %286 = dma.done [#allocation4], 32768
        $region56: #{tpu_custom_call.1} parent=51 // pred_fallthru
          _
        %p287 = scmp.lt.s32.totalorder %s22, 1
        %s288 = scalar_select %p287, %s22, 1
        %s289 = smul.addr %s288, 32
        %s290 = smul.addr %s289, 8
        %s291 = scalar_lea.vmem %s0, %s290
        %p292 = pneg %p43
        %p293 = pneg %p40
        %p294 = pneg %p64
        %p295 = pneg %p61
        %p296 = pneg %p85
        %p297 = pneg %p82
        %p298 = pneg %p106
        %p299 = pneg %p103
        %p300 = pneg %p127
        %p301 = pneg %p124
        %p302 = pneg %p148
        %p303 = pneg %p145
        %p304 = pneg %p169
        %p305 = pneg %p166
        %p306 = pneg %p190
        %p307 = pneg %p187
        %p308 = pneg %p216
        %p309 = pneg %p213
        %p310 = scmp.lt.s32.totalorder %s22, 1
        %s311 = scalar_select %p310, %s22, 1
        %s312 = smul.addr %s311, 128
        %s313 = smul.addr %s312, 8
        %s314 = scalar_lea.vmem %s8, %s313
        %p315 = scmp.lt.s32.totalorder %s22, 1
        %s316 = scalar_select %p315, %s22, 1
        %s317 = smul.addr %s316, 32
        %s318 = smul.addr %s317, 8
        %s319 = scalar_lea.vmem %s0, %s318
        %p320 = scmp.lt.s32.totalorder %s22, 1
        %s321 = scalar_select %p320, %s22, 1
        %s322 = smul.addr %s321, 128
        %s323 = smul.addr %s322, 8
        %s324 = scalar_lea.vmem %s8, %s323
        %v325 = vld [vmem:[%s319] sm:$0xff]
        %v326 = vld [vmem:[%s319 + $0x8] sm:$0xff]
        %v327 = vld [vmem:[%s319 + $0x10] sm:$0xff]
        %v328 = vld [vmem:[%s319 + $0x18] sm:$0xff]
        %v329 = vld [vmem:[%s319 + $0x20] sm:$0xff]
        %v330 = vld [vmem:[%s319 + $0x28] sm:$0xff]
        %v331 = vld [vmem:[%s319 + $0x30] sm:$0xff]
        %v332 = vld [vmem:[%s319 + $0x38] sm:$0xff]
        %v333 = vld [vmem:[%s319 + $0x40] sm:$0xff]
        %v334 = vld [vmem:[%s319 + $0x48] sm:$0xff]
        %v335 = vld [vmem:[%s319 + $0x50] sm:$0xff]
        %v336 = vld [vmem:[%s319 + $0x58] sm:$0xff]
        %v337 = vld [vmem:[%s319 + $0x60] sm:$0xff]
        %v338 = vld [vmem:[%s319 + $0x68] sm:$0xff]
        %v339 = vld [vmem:[%s319 + $0x70] sm:$0xff]
        %v340 = vld [vmem:[%s319 + $0x78] sm:$0xff]
        %v341 = vld [vmem:[%s319 + $0x80] sm:$0xff]
        %v342 = vld [vmem:[%s319 + $0x88] sm:$0xff]
        %v343 = vld [vmem:[%s319 + $0x90] sm:$0xff]
        %v344 = vld [vmem:[%s319 + $0x98] sm:$0xff]
        %v345 = vld [vmem:[%s319 + $0xa0] sm:$0xff]
        %v346 = vld [vmem:[%s319 + $0xa8] sm:$0xff]
        %v347 = vld [vmem:[%s319 + $0xb0] sm:$0xff]
        %v348 = vld [vmem:[%s319 + $0xb8] sm:$0xff]
        %v349 = vld [vmem:[%s319 + $0xc0] sm:$0xff]
        %v350 = vld [vmem:[%s319 + $0xc8] sm:$0xff]
        %v351 = vld [vmem:[%s319 + $0xd0] sm:$0xff]
        %v352 = vld [vmem:[%s319 + $0xd8] sm:$0xff]
        %v353 = vld [vmem:[%s319 + $0xe0] sm:$0xff]
        %v354 = vld [vmem:[%s319 + $0xe8] sm:$0xff]
        %v355 = vld [vmem:[%s319 + $0xf0] sm:$0xff]
        %v356 = vld [vmem:[%s319 + $0xf8] sm:$0xff]
        %v357 = vld [vmem:[#allocation3] sm:$0xff]
        %v358 = vld [vmem:[#allocation3 + $0x8] sm:$0xff]
        %v359 = vld [vmem:[#allocation3 + $0x10] sm:$0xff]
        %v360 = vld [vmem:[#allocation3 + $0x18] sm:$0xff]
        %v361 = vld [vmem:[#allocation3 + $0x20] sm:$0xff]
        %v362 = vld [vmem:[#allocation3 + $0x28] sm:$0xff]
        %v363 = vld [vmem:[#allocation3 + $0x30] sm:$0xff]
        %v364 = vld [vmem:[#allocation3 + $0x38] sm:$0xff]
        %v365 = vld [vmem:[#allocation3 + $0x40] sm:$0xff]
        %v366 = vld [vmem:[#allocation3 + $0x48] sm:$0xff]
        %v367 = vld [vmem:[#allocation3 + $0x50] sm:$0xff]
        %v368 = vld [vmem:[#allocation3 + $0x58] sm:$0xff]
        %v369 = vld [vmem:[#allocation3 + $0x60] sm:$0xff]
        %v370 = vld [vmem:[#allocation3 + $0x68] sm:$0xff]
        %v371 = vld [vmem:[#allocation3 + $0x70] sm:$0xff]
        %v372 = vld [vmem:[#allocation3 + $0x78] sm:$0xff]
        %v373 = vld [vmem:[#allocation3 + $0x80] sm:$0xff]
        %v374 = vld [vmem:[#allocation3 + $0x88] sm:$0xff]
        %v375 = vld [vmem:[#allocation3 + $0x90] sm:$0xff]
        %v376 = vld [vmem:[#allocation3 + $0x98] sm:$0xff]
        %v377 = vld [vmem:[#allocation3 + $0xa0] sm:$0xff]
        %v378 = vld [vmem:[#allocation3 + $0xa8] sm:$0xff]
        %v379 = vld [vmem:[#allocation3 + $0xb0] sm:$0xff]
        %v380 = vld [vmem:[#allocation3 + $0xb8] sm:$0xff]
        %v381 = vld [vmem:[#allocation3 + $0xc0] sm:$0xff]
        %v382 = vld [vmem:[#allocation3 + $0xc8] sm:$0xff]
        %v383 = vld [vmem:[#allocation3 + $0xd0] sm:$0xff]
        %v384 = vld [vmem:[#allocation3 + $0xd8] sm:$0xff]
        %v385 = vld [vmem:[#allocation3 + $0xe0] sm:$0xff]
        %v386 = vld [vmem:[#allocation3 + $0xe8] sm:$0xff]
        %v387 = vld [vmem:[#allocation3 + $0xf0] sm:$0xff]
        %v388 = vld [vmem:[#allocation3 + $0xf8] sm:$0xff]
        %v389 = vld [vmem:[#allocation3 + $0x100] sm:$0xff]
        %v390 = vld [vmem:[#allocation3 + $0x108] sm:$0xff]
        %v391 = vld [vmem:[#allocation3 + $0x110] sm:$0xff]
        %v392 = vld [vmem:[#allocation3 + $0x118] sm:$0xff]
        %v393 = vld [vmem:[#allocation3 + $0x120] sm:$0xff]
        %v394 = vld [vmem:[#allocation3 + $0x128] sm:$0xff]
        %v395 = vld [vmem:[#allocation3 + $0x130] sm:$0xff]
        %v396 = vld [vmem:[#allocation3 + $0x138] sm:$0xff]
        %v397 = vld [vmem:[#allocation3 + $0x140] sm:$0xff]
        %v398 = vld [vmem:[#allocation3 + $0x148] sm:$0xff]
        %v399 = vld [vmem:[#allocation3 + $0x150] sm:$0xff]
        %v400 = vld [vmem:[#allocation3 + $0x158] sm:$0xff]
        %v401 = vld [vmem:[#allocation3 + $0x160] sm:$0xff]
        %v402 = vld [vmem:[#allocation3 + $0x168] sm:$0xff]
        %v403 = vld [vmem:[#allocation3 + $0x170] sm:$0xff]
        %v404 = vld [vmem:[#allocation3 + $0x178] sm:$0xff]
        %v405 = vld [vmem:[#allocation3 + $0x180] sm:$0xff]
        %v406 = vld [vmem:[#allocation3 + $0x188] sm:$0xff]
        %v407 = vld [vmem:[#allocation3 + $0x190] sm:$0xff]
        %v408 = vld [vmem:[#allocation3 + $0x198] sm:$0xff]
        %v409 = vld [vmem:[#allocation3 + $0x1a0] sm:$0xff]
        %v410 = vld [vmem:[#allocation3 + $0x1a8] sm:$0xff]
        %v411 = vld [vmem:[#allocation3 + $0x1b0] sm:$0xff]
        %v412 = vld [vmem:[#allocation3 + $0x1b8] sm:$0xff]
        %v413 = vld [vmem:[#allocation3 + $0x1c0] sm:$0xff]
        %v414 = vld [vmem:[#allocation3 + $0x1c8] sm:$0xff]
        %v415 = vld [vmem:[#allocation3 + $0x1d0] sm:$0xff]
        %v416 = vld [vmem:[#allocation3 + $0x1d8] sm:$0xff]
        %v417 = vld [vmem:[#allocation3 + $0x1e0] sm:$0xff]
        %v418 = vld [vmem:[#allocation3 + $0x1e8] sm:$0xff]
        %v419 = vld [vmem:[#allocation3 + $0x1f0] sm:$0xff]
        %v420 = vld [vmem:[#allocation3 + $0x1f8] sm:$0xff]
        %v421 = vld [vmem:[#allocation3 + $0x200] sm:$0xff]
        %v422 = vld [vmem:[#allocation3 + $0x208] sm:$0xff]
        %v423 = vld [vmem:[#allocation3 + $0x210] sm:$0xff]
        %v424 = vld [vmem:[#allocation3 + $0x218] sm:$0xff]
        %v425 = vld [vmem:[#allocation3 + $0x220] sm:$0xff]
        %v426 = vld [vmem:[#allocation3 + $0x228] sm:$0xff]
        %v427 = vld [vmem:[#allocation3 + $0x230] sm:$0xff]
        %v428 = vld [vmem:[#allocation3 + $0x238] sm:$0xff]
        %v429 = vld [vmem:[#allocation3 + $0x240] sm:$0xff]
        %v430 = vld [vmem:[#allocation3 + $0x248] sm:$0xff]
        %v431 = vld [vmem:[#allocation3 + $0x250] sm:$0xff]
        %v432 = vld [vmem:[#allocation3 + $0x258] sm:$0xff]
        %v433 = vld [vmem:[#allocation3 + $0x260] sm:$0xff]
        %v434 = vld [vmem:[#allocation3 + $0x268] sm:$0xff]
        %v435 = vld [vmem:[#allocation3 + $0x270] sm:$0xff]
        %v436 = vld [vmem:[#allocation3 + $0x278] sm:$0xff]
        %v437 = vld [vmem:[#allocation3 + $0x280] sm:$0xff]
        %v438 = vld [vmem:[#allocation3 + $0x288] sm:$0xff]
        %v439 = vld [vmem:[#allocation3 + $0x290] sm:$0xff]
        %v440 = vld [vmem:[#allocation3 + $0x298] sm:$0xff]
        %v441 = vld [vmem:[#allocation3 + $0x2a0] sm:$0xff]
        %v442 = vld [vmem:[#allocation3 + $0x2a8] sm:$0xff]
        %v443 = vld [vmem:[#allocation3 + $0x2b0] sm:$0xff]
        %v444 = vld [vmem:[#allocation3 + $0x2b8] sm:$0xff]
        %v445 = vld [vmem:[#allocation3 + $0x2c0] sm:$0xff]
        %v446 = vld [vmem:[#allocation3 + $0x2c8] sm:$0xff]
        %v447 = vld [vmem:[#allocation3 + $0x2d0] sm:$0xff]
        %v448 = vld [vmem:[#allocation3 + $0x2d8] sm:$0xff]
        %v449 = vld [vmem:[#allocation3 + $0x2e0] sm:$0xff]
        %v450 = vld [vmem:[#allocation3 + $0x2e8] sm:$0xff]
        %v451 = vld [vmem:[#allocation3 + $0x2f0] sm:$0xff]
        %v452 = vld [vmem:[#allocation3 + $0x2f8] sm:$0xff]
        %v453 = vld [vmem:[#allocation3 + $0x300] sm:$0xff]
        %v454 = vld [vmem:[#allocation3 + $0x308] sm:$0xff]
        %v455 = vld [vmem:[#allocation3 + $0x310] sm:$0xff]
        %v456 = vld [vmem:[#allocation3 + $0x318] sm:$0xff]
        %v457 = vld [vmem:[#allocation3 + $0x320] sm:$0xff]
        %v458 = vld [vmem:[#allocation3 + $0x328] sm:$0xff]
        %v459 = vld [vmem:[#allocation3 + $0x330] sm:$0xff]
        %v460 = vld [vmem:[#allocation3 + $0x338] sm:$0xff]
        %v461 = vld [vmem:[#allocation3 + $0x340] sm:$0xff]
        %v462 = vld [vmem:[#allocation3 + $0x348] sm:$0xff]
        %v463 = vld [vmem:[#allocation3 + $0x350] sm:$0xff]
        %v464 = vld [vmem:[#allocation3 + $0x358] sm:$0xff]
        %v465 = vld [vmem:[#allocation3 + $0x360] sm:$0xff]
        %v466 = vld [vmem:[#allocation3 + $0x368] sm:$0xff]
        %v467 = vld [vmem:[#allocation3 + $0x370] sm:$0xff]
        %v468 = vld [vmem:[#allocation3 + $0x378] sm:$0xff]
        %v469 = vld [vmem:[#allocation3 + $0x380] sm:$0xff]
        %v470 = vld [vmem:[#allocation3 + $0x388] sm:$0xff]
        %v471 = vld [vmem:[#allocation3 + $0x390] sm:$0xff]
        %v472 = vld [vmem:[#allocation3 + $0x398] sm:$0xff]
        %v473 = vld [vmem:[#allocation3 + $0x3a0] sm:$0xff]
        %v474 = vld [vmem:[#allocation3 + $0x3a8] sm:$0xff]
        %v475 = vld [vmem:[#allocation3 + $0x3b0] sm:$0xff]
        %v476 = vld [vmem:[#allocation3 + $0x3b8] sm:$0xff]
        %v477 = vld [vmem:[#allocation3 + $0x3c0] sm:$0xff]
        %v478 = vld [vmem:[#allocation3 + $0x3c8] sm:$0xff]
        %v479 = vld [vmem:[#allocation3 + $0x3d0] sm:$0xff]
        %v480 = vld [vmem:[#allocation3 + $0x3d8] sm:$0xff]
        %v481 = vld [vmem:[#allocation3 + $0x3e0] sm:$0xff]
        %v482 = vld [vmem:[#allocation3 + $0x3e8] sm:$0xff]
        %v483 = vld [vmem:[#allocation3 + $0x3f0] sm:$0xff]
        %v484 = vld [vmem:[#allocation3 + $0x3f8] sm:$0xff]
        %v485 = vld [vmem:[#allocation3 + $0x400] sm:$0xff]
        %v486 = vld [vmem:[#allocation3 + $0x408] sm:$0xff]
        %v487 = vld [vmem:[#allocation3 + $0x410] sm:$0xff]
        %v488 = vld [vmem:[#allocation3 + $0x418] sm:$0xff]
        %v489 = vld [vmem:[#allocation3 + $0x420] sm:$0xff]
        %v490 = vld [vmem:[#allocation3 + $0x428] sm:$0xff]
        %v491 = vld [vmem:[#allocation3 + $0x430] sm:$0xff]
        %v492 = vld [vmem:[#allocation3 + $0x438] sm:$0xff]
        %v493 = vld [vmem:[#allocation3 + $0x440] sm:$0xff]
        %v494 = vld [vmem:[#allocation3 + $0x448] sm:$0xff]
        %v495 = vld [vmem:[#allocation3 + $0x450] sm:$0xff]
        %v496 = vld [vmem:[#allocation3 + $0x458] sm:$0xff]
        %v497 = vld [vmem:[#allocation3 + $0x460] sm:$0xff]
        %v498 = vld [vmem:[#allocation3 + $0x468] sm:$0xff]
        %v499 = vld [vmem:[#allocation3 + $0x470] sm:$0xff]
        %v500 = vld [vmem:[#allocation3 + $0x478] sm:$0xff]
        %v501 = vld [vmem:[#allocation3 + $0x480] sm:$0xff]
        %v502 = vld [vmem:[#allocation3 + $0x488] sm:$0xff]
        %v503 = vld [vmem:[#allocation3 + $0x490] sm:$0xff]
        %v504 = vld [vmem:[#allocation3 + $0x498] sm:$0xff]
        %v505 = vld [vmem:[#allocation3 + $0x4a0] sm:$0xff]
        %v506 = vld [vmem:[#allocation3 + $0x4a8] sm:$0xff]
        %v507 = vld [vmem:[#allocation3 + $0x4b0] sm:$0xff]
        %v508 = vld [vmem:[#allocation3 + $0x4b8] sm:$0xff]
        %v509 = vld [vmem:[#allocation3 + $0x4c0] sm:$0xff]
        %v510 = vld [vmem:[#allocation3 + $0x4c8] sm:$0xff]
        %v511 = vld [vmem:[#allocation3 + $0x4d0] sm:$0xff]
        %v512 = vld [vmem:[#allocation3 + $0x4d8] sm:$0xff]
        %v513 = vld [vmem:[#allocation3 + $0x4e0] sm:$0xff]
        %v514 = vld [vmem:[#allocation3 + $0x4e8] sm:$0xff]
        %v515 = vld [vmem:[#allocation3 + $0x4f0] sm:$0xff]
        %v516 = vld [vmem:[#allocation3 + $0x4f8] sm:$0xff]
        %v517 = vld [vmem:[#allocation3 + $0x500] sm:$0xff]
        %v518 = vld [vmem:[#allocation3 + $0x508] sm:$0xff]
        %v519 = vld [vmem:[#allocation3 + $0x510] sm:$0xff]
        %v520 = vld [vmem:[#allocation3 + $0x518] sm:$0xff]
        %v521 = vld [vmem:[#allocation3 + $0x520] sm:$0xff]
        %v522 = vld [vmem:[#allocation3 + $0x528] sm:$0xff]
        %v523 = vld [vmem:[#allocation3 + $0x530] sm:$0xff]
        %v524 = vld [vmem:[#allocation3 + $0x538] sm:$0xff]
        %v525 = vld [vmem:[#allocation3 + $0x540] sm:$0xff]
        %v526 = vld [vmem:[#allocation3 + $0x548] sm:$0xff]
        %v527 = vld [vmem:[#allocation3 + $0x550] sm:$0xff]
        %v528 = vld [vmem:[#allocation3 + $0x558] sm:$0xff]
        %v529 = vld [vmem:[#allocation3 + $0x560] sm:$0xff]
        %v530 = vld [vmem:[#allocation3 + $0x568] sm:$0xff]
        %v531 = vld [vmem:[#allocation3 + $0x570] sm:$0xff]
        %v532 = vld [vmem:[#allocation3 + $0x578] sm:$0xff]
        %v533 = vld [vmem:[#allocation3 + $0x580] sm:$0xff]
        %v534 = vld [vmem:[#allocation3 + $0x588] sm:$0xff]
        %v535 = vld [vmem:[#allocation3 + $0x590] sm:$0xff]
        %v536 = vld [vmem:[#allocation3 + $0x598] sm:$0xff]
        %v537 = vld [vmem:[#allocation3 + $0x5a0] sm:$0xff]
        %v538 = vld [vmem:[#allocation3 + $0x5a8] sm:$0xff]
        %v539 = vld [vmem:[#allocation3 + $0x5b0] sm:$0xff]
        %v540 = vld [vmem:[#allocation3 + $0x5b8] sm:$0xff]
        %v541 = vld [vmem:[#allocation3 + $0x5c0] sm:$0xff]
        %v542 = vld [vmem:[#allocation3 + $0x5c8] sm:$0xff]
        %v543 = vld [vmem:[#allocation3 + $0x5d0] sm:$0xff]
        %v544 = vld [vmem:[#allocation3 + $0x5d8] sm:$0xff]
        %v545 = vld [vmem:[#allocation3 + $0x5e0] sm:$0xff]
        %v546 = vld [vmem:[#allocation3 + $0x5e8] sm:$0xff]
        %v547 = vld [vmem:[#allocation3 + $0x5f0] sm:$0xff]
        %v548 = vld [vmem:[#allocation3 + $0x5f8] sm:$0xff]
        %v549 = vld [vmem:[#allocation3 + $0x600] sm:$0xff]
        %v550 = vld [vmem:[#allocation3 + $0x608] sm:$0xff]
        %v551 = vld [vmem:[#allocation3 + $0x610] sm:$0xff]
        %v552 = vld [vmem:[#allocation3 + $0x618] sm:$0xff]
        %v553 = vld [vmem:[#allocation3 + $0x620] sm:$0xff]
        %v554 = vld [vmem:[#allocation3 + $0x628] sm:$0xff]
        %v555 = vld [vmem:[#allocation3 + $0x630] sm:$0xff]
        %v556 = vld [vmem:[#allocation3 + $0x638] sm:$0xff]
        %v557 = vld [vmem:[#allocation3 + $0x640] sm:$0xff]
        %v558 = vld [vmem:[#allocation3 + $0x648] sm:$0xff]
        %v559 = vld [vmem:[#allocation3 + $0x650] sm:$0xff]
        %v560 = vld [vmem:[#allocation3 + $0x658] sm:$0xff]
        %v561 = vld [vmem:[#allocation3 + $0x660] sm:$0xff]
        %v562 = vld [vmem:[#allocation3 + $0x668] sm:$0xff]
        %v563 = vld [vmem:[#allocation3 + $0x670] sm:$0xff]
        %v564 = vld [vmem:[#allocation3 + $0x678] sm:$0xff]
        %v565 = vld [vmem:[#allocation3 + $0x680] sm:$0xff]
        %v566 = vld [vmem:[#allocation3 + $0x688] sm:$0xff]
        %v567 = vld [vmem:[#allocation3 + $0x690] sm:$0xff]
        %v568 = vld [vmem:[#allocation3 + $0x698] sm:$0xff]
        %v569 = vld [vmem:[#allocation3 + $0x6a0] sm:$0xff]
        %v570 = vld [vmem:[#allocation3 + $0x6a8] sm:$0xff]
        %v571 = vld [vmem:[#allocation3 + $0x6b0] sm:$0xff]
        %v572 = vld [vmem:[#allocation3 + $0x6b8] sm:$0xff]
        %v573 = vld [vmem:[#allocation3 + $0x6c0] sm:$0xff]
        %v574 = vld [vmem:[#allocation3 + $0x6c8] sm:$0xff]
        %v575 = vld [vmem:[#allocation3 + $0x6d0] sm:$0xff]
        %v576 = vld [vmem:[#allocation3 + $0x6d8] sm:$0xff]
        %v577 = vld [vmem:[#allocation3 + $0x6e0] sm:$0xff]
        %v578 = vld [vmem:[#allocation3 + $0x6e8] sm:$0xff]
        %v579 = vld [vmem:[#allocation3 + $0x6f0] sm:$0xff]
        %v580 = vld [vmem:[#allocation3 + $0x6f8] sm:$0xff]
        %v581 = vld [vmem:[#allocation3 + $0x700] sm:$0xff]
        %v582 = vld [vmem:[#allocation3 + $0x708] sm:$0xff]
        %v583 = vld [vmem:[#allocation3 + $0x710] sm:$0xff]
        %v584 = vld [vmem:[#allocation3 + $0x718] sm:$0xff]
        %v585 = vld [vmem:[#allocation3 + $0x720] sm:$0xff]
        %v586 = vld [vmem:[#allocation3 + $0x728] sm:$0xff]
        %v587 = vld [vmem:[#allocation3 + $0x730] sm:$0xff]
        %v588 = vld [vmem:[#allocation3 + $0x738] sm:$0xff]
        %v589 = vld [vmem:[#allocation3 + $0x740] sm:$0xff]
        %v590 = vld [vmem:[#allocation3 + $0x748] sm:$0xff]
        %v591 = vld [vmem:[#allocation3 + $0x750] sm:$0xff]
        %v592 = vld [vmem:[#allocation3 + $0x758] sm:$0xff]
        %v593 = vld [vmem:[#allocation3 + $0x760] sm:$0xff]
        %v594 = vld [vmem:[#allocation3 + $0x768] sm:$0xff]
        %v595 = vld [vmem:[#allocation3 + $0x770] sm:$0xff]
        %v596 = vld [vmem:[#allocation3 + $0x778] sm:$0xff]
        %v597 = vld [vmem:[#allocation3 + $0x780] sm:$0xff]
        %v598 = vld [vmem:[#allocation3 + $0x788] sm:$0xff]
        %v599 = vld [vmem:[#allocation3 + $0x790] sm:$0xff]
        %v600 = vld [vmem:[#allocation3 + $0x798] sm:$0xff]
        %v601 = vld [vmem:[#allocation3 + $0x7a0] sm:$0xff]
        %v602 = vld [vmem:[#allocation3 + $0x7a8] sm:$0xff]
        %v603 = vld [vmem:[#allocation3 + $0x7b0] sm:$0xff]
        %v604 = vld [vmem:[#allocation3 + $0x7b8] sm:$0xff]
        %v605 = vld [vmem:[#allocation3 + $0x7c0] sm:$0xff]
        %v606 = vld [vmem:[#allocation3 + $0x7c8] sm:$0xff]
        %v607 = vld [vmem:[#allocation3 + $0x7d0] sm:$0xff]
        %v608 = vld [vmem:[#allocation3 + $0x7d8] sm:$0xff]
        %v609 = vld [vmem:[#allocation3 + $0x7e0] sm:$0xff]
        %v610 = vld [vmem:[#allocation3 + $0x7e8] sm:$0xff]
        %v611 = vld [vmem:[#allocation3 + $0x7f0] sm:$0xff]
        %v612 = vld [vmem:[#allocation3 + $0x7f8] sm:$0xff]
        %613 = vmatpush.msra.mxu0 %v340
        %614 = vmatpush.msra.mxu0 %v339
        %615 = vmatpush.msra.mxu0 %v338
        %616 = vmatpush.msra.mxu0 %v337
        %617 = vmatpush.msra.mxu0 %v336
        %618 = vmatpush.msra.mxu0 %v335
        %619 = vmatpush.msra.mxu0 %v334
        %620 = vmatpush.msra.mxu0 %v333
        %621 = vmatpush.msra.mxu0 %v332
        %622 = vmatpush.msra.mxu0 %v331
        %623 = vmatpush.msra.mxu0 %v330
        %624 = vmatpush.msra.mxu0 %v329
        %625 = vmatpush.msra.mxu0 %v328
        %626 = vmatpush.msra.mxu0 %v327
        %627 = vmatpush.msra.mxu0 %v326
        %628 = vmatpush.msra.mxu0 %v325
        %629 = vmatmul.f32.gmra.mxu0 %v357
        %v630 = vpop.f32.mrf.mxu0
        %v631 = vadd.f32 0.0, %v630
        %632 = vmatmul.f32.gmra.mxu0 %v359
        %v633 = vpop.f32.mrf.mxu0
        %v634 = vadd.f32 0.0, %v633
        %635 = vmatmul.f32.gmra.mxu0 %v361
        %v636 = vpop.f32.mrf.mxu0
        %v637 = vadd.f32 0.0, %v636
        %638 = vmatmul.f32.gmra.mxu0 %v363
        %v639 = vpop.f32.mrf.mxu0
        %v640 = vadd.f32 0.0, %v639
        %641 = vmatmul.f32.gmra.mxu0 %v365
        %v642 = vpop.f32.mrf.mxu0
        %v643 = vadd.f32 0.0, %v642
        %644 = vmatmul.f32.gmra.mxu0 %v367
        %v645 = vpop.f32.mrf.mxu0
        %v646 = vadd.f32 0.0, %v645
        %647 = vmatmul.f32.gmra.mxu0 %v369
        %v648 = vpop.f32.mrf.mxu0
        %v649 = vadd.f32 0.0, %v648
        %650 = vmatmul.f32.gmra.mxu0 %v371
        %v651 = vpop.f32.mrf.mxu0
        %v652 = vadd.f32 0.0, %v651
        %653 = vmatmul.f32.gmra.mxu0 %v373
        %v654 = vpop.f32.mrf.mxu0
        %v655 = vadd.f32 0.0, %v654
        %656 = vmatmul.f32.gmra.mxu0 %v375
        %v657 = vpop.f32.mrf.mxu0
        %v658 = vadd.f32 0.0, %v657
        %659 = vmatmul.f32.gmra.mxu0 %v377
        %v660 = vpop.f32.mrf.mxu0
        %v661 = vadd.f32 0.0, %v660
        %662 = vmatmul.f32.gmra.mxu0 %v379
        %v663 = vpop.f32.mrf.mxu0
        %v664 = vadd.f32 0.0, %v663
        %665 = vmatmul.f32.gmra.mxu0 %v381
        %v666 = vpop.f32.mrf.mxu0
        %v667 = vadd.f32 0.0, %v666
        %668 = vmatmul.f32.gmra.mxu0 %v383
        %v669 = vpop.f32.mrf.mxu0
        %v670 = vadd.f32 0.0, %v669
        %671 = vmatmul.f32.gmra.mxu0 %v385
        %v672 = vpop.f32.mrf.mxu0
        %v673 = vadd.f32 0.0, %v672
        %674 = vmatmul.f32.gmra.mxu0 %v387
        %v675 = vpop.f32.mrf.mxu0
        %v676 = vadd.f32 0.0, %v675
        %677 = vmatmul.f32.gmra.mxu0 %v389
        %v678 = vpop.f32.mrf.mxu0
        %v679 = vadd.f32 0.0, %v678
        %680 = vmatmul.f32.gmra.mxu0 %v391
        %v681 = vpop.f32.mrf.mxu0
        %v682 = vadd.f32 0.0, %v681
        %683 = vmatmul.f32.gmra.mxu0 %v393
        %v684 = vpop.f32.mrf.mxu0
        %v685 = vadd.f32 0.0, %v684
        %686 = vmatmul.f32.gmra.mxu0 %v395
        %v687 = vpop.f32.mrf.mxu0
        %v688 = vadd.f32 0.0, %v687
        %689 = vmatmul.f32.gmra.mxu0 %v397
        %v690 = vpop.f32.mrf.mxu0
        %v691 = vadd.f32 0.0, %v690
        %692 = vmatmul.f32.gmra.mxu0 %v399
        %v693 = vpop.f32.mrf.mxu0
        %v694 = vadd.f32 0.0, %v693
        %695 = vmatmul.f32.gmra.mxu0 %v401
        %v696 = vpop.f32.mrf.mxu0
        %v697 = vadd.f32 0.0, %v696
        %698 = vmatmul.f32.gmra.mxu0 %v403
        %v699 = vpop.f32.mrf.mxu0
        %v700 = vadd.f32 0.0, %v699
        %701 = vmatmul.f32.gmra.mxu0 %v405
        %v702 = vpop.f32.mrf.mxu0
        %v703 = vadd.f32 0.0, %v702
        %704 = vmatmul.f32.gmra.mxu0 %v407
        %v705 = vpop.f32.mrf.mxu0
        %v706 = vadd.f32 0.0, %v705
        %707 = vmatmul.f32.gmra.mxu0 %v409
        %v708 = vpop.f32.mrf.mxu0
        %v709 = vadd.f32 0.0, %v708
        %710 = vmatmul.f32.gmra.mxu0 %v411
        %v711 = vpop.f32.mrf.mxu0
        %v712 = vadd.f32 0.0, %v711
        %713 = vmatmul.f32.gmra.mxu0 %v413
        %v714 = vpop.f32.mrf.mxu0
        %v715 = vadd.f32 0.0, %v714
        %716 = vmatmul.f32.gmra.mxu0 %v415
        %v717 = vpop.f32.mrf.mxu0
        %v718 = vadd.f32 0.0, %v717
        %719 = vmatmul.f32.gmra.mxu0 %v417
        %v720 = vpop.f32.mrf.mxu0
        %v721 = vadd.f32 0.0, %v720
        %722 = vmatmul.f32.gmra.mxu0 %v419
        %v723 = vpop.f32.mrf.mxu0
        %v724 = vadd.f32 0.0, %v723
        %725 = vmatmul.f32.gmra.mxu0 %v421
        %v726 = vpop.f32.mrf.mxu0
        %v727 = vadd.f32 0.0, %v726
        %728 = vmatmul.f32.gmra.mxu0 %v423
        %v729 = vpop.f32.mrf.mxu0
        %v730 = vadd.f32 0.0, %v729
        %731 = vmatmul.f32.gmra.mxu0 %v425
        %v732 = vpop.f32.mrf.mxu0
        %v733 = vadd.f32 0.0, %v732
        %734 = vmatmul.f32.gmra.mxu0 %v427
        %v735 = vpop.f32.mrf.mxu0
        %v736 = vadd.f32 0.0, %v735
        %737 = vmatmul.f32.gmra.mxu0 %v429
        %v738 = vpop.f32.mrf.mxu0
        %v739 = vadd.f32 0.0, %v738
        %740 = vmatmul.f32.gmra.mxu0 %v431
        %v741 = vpop.f32.mrf.mxu0
        %v742 = vadd.f32 0.0, %v741
        %743 = vmatmul.f32.gmra.mxu0 %v433
        %v744 = vpop.f32.mrf.mxu0
        %v745 = vadd.f32 0.0, %v744
        %746 = vmatmul.f32.gmra.mxu0 %v435
        %v747 = vpop.f32.mrf.mxu0
        %v748 = vadd.f32 0.0, %v747
        %749 = vmatmul.f32.gmra.mxu0 %v437
        %v750 = vpop.f32.mrf.mxu0
        %v751 = vadd.f32 0.0, %v750
        %752 = vmatmul.f32.gmra.mxu0 %v439
        %v753 = vpop.f32.mrf.mxu0
        %v754 = vadd.f32 0.0, %v753
        %755 = vmatmul.f32.gmra.mxu0 %v441
        %v756 = vpop.f32.mrf.mxu0
        %v757 = vadd.f32 0.0, %v756
        %758 = vmatmul.f32.gmra.mxu0 %v443
        %v759 = vpop.f32.mrf.mxu0
        %v760 = vadd.f32 0.0, %v759
        %761 = vmatmul.f32.gmra.mxu0 %v445
        %v762 = vpop.f32.mrf.mxu0
        %v763 = vadd.f32 0.0, %v762
        %764 = vmatmul.f32.gmra.mxu0 %v447
        %v765 = vpop.f32.mrf.mxu0
        %v766 = vadd.f32 0.0, %v765
        %767 = vmatmul.f32.gmra.mxu0 %v449
        %v768 = vpop.f32.mrf.mxu0
        %v769 = vadd.f32 0.0, %v768
        %770 = vmatmul.f32.gmra.mxu0 %v451
        %v771 = vpop.f32.mrf.mxu0
        %v772 = vadd.f32 0.0, %v771
        %773 = vmatmul.f32.gmra.mxu0 %v453
        %v774 = vpop.f32.mrf.mxu0
        %v775 = vadd.f32 0.0, %v774
        %776 = vmatmul.f32.gmra.mxu0 %v455
        %v777 = vpop.f32.mrf.mxu0
        %v778 = vadd.f32 0.0, %v777
        %779 = vmatmul.f32.gmra.mxu0 %v457
        %v780 = vpop.f32.mrf.mxu0
        %v781 = vadd.f32 0.0, %v780
        %782 = vmatmul.f32.gmra.mxu0 %v459
        %v783 = vpop.f32.mrf.mxu0
        %v784 = vadd.f32 0.0, %v783
        %785 = vmatmul.f32.gmra.mxu0 %v461
        %v786 = vpop.f32.mrf.mxu0
        %v787 = vadd.f32 0.0, %v786
        %788 = vmatmul.f32.gmra.mxu0 %v463
        %v789 = vpop.f32.mrf.mxu0
        %v790 = vadd.f32 0.0, %v789
        %791 = vmatmul.f32.gmra.mxu0 %v465
        %v792 = vpop.f32.mrf.mxu0
        %v793 = vadd.f32 0.0, %v792
        %794 = vmatmul.f32.gmra.mxu0 %v467
        %v795 = vpop.f32.mrf.mxu0
        %v796 = vadd.f32 0.0, %v795
        %797 = vmatmul.f32.gmra.mxu0 %v469
        %v798 = vpop.f32.mrf.mxu0
        %v799 = vadd.f32 0.0, %v798
        %800 = vmatmul.f32.gmra.mxu0 %v471
        %v801 = vpop.f32.mrf.mxu0
        %v802 = vadd.f32 0.0, %v801
        %803 = vmatmul.f32.gmra.mxu0 %v473
        %v804 = vpop.f32.mrf.mxu0
        %v805 = vadd.f32 0.0, %v804
        %806 = vmatmul.f32.gmra.mxu0 %v475
        %v807 = vpop.f32.mrf.mxu0
        %v808 = vadd.f32 0.0, %v807
        %809 = vmatmul.f32.gmra.mxu0 %v477
        %v810 = vpop.f32.mrf.mxu0
        %v811 = vadd.f32 0.0, %v810
        %812 = vmatmul.f32.gmra.mxu0 %v479
        %v813 = vpop.f32.mrf.mxu0
        %v814 = vadd.f32 0.0, %v813
        %815 = vmatmul.f32.gmra.mxu0 %v481
        %v816 = vpop.f32.mrf.mxu0
        %v817 = vadd.f32 0.0, %v816
        %818 = vmatmul.f32.gmra.mxu0 %v483
        %v819 = vpop.f32.mrf.mxu0
        %v820 = vadd.f32 0.0, %v819
        %821 = vmatmul.f32.gmra.mxu0 %v485
        %v822 = vpop.f32.mrf.mxu0
        %v823 = vadd.f32 0.0, %v822
        %824 = vmatmul.f32.gmra.mxu0 %v487
        %v825 = vpop.f32.mrf.mxu0
        %v826 = vadd.f32 0.0, %v825
        %827 = vmatmul.f32.gmra.mxu0 %v489
        %v828 = vpop.f32.mrf.mxu0
        %v829 = vadd.f32 0.0, %v828
        %830 = vmatmul.f32.gmra.mxu0 %v491
        %v831 = vpop.f32.mrf.mxu0
        %v832 = vadd.f32 0.0, %v831
        %833 = vmatmul.f32.gmra.mxu0 %v493
        %v834 = vpop.f32.mrf.mxu0
        %v835 = vadd.f32 0.0, %v834
        %836 = vmatmul.f32.gmra.mxu0 %v495
        %v837 = vpop.f32.mrf.mxu0
        %v838 = vadd.f32 0.0, %v837
        %839 = vmatmul.f32.gmra.mxu0 %v497
        %v840 = vpop.f32.mrf.mxu0
        %v841 = vadd.f32 0.0, %v840
        %842 = vmatmul.f32.gmra.mxu0 %v499
        %v843 = vpop.f32.mrf.mxu0
        %v844 = vadd.f32 0.0, %v843
        %845 = vmatmul.f32.gmra.mxu0 %v501
        %v846 = vpop.f32.mrf.mxu0
        %v847 = vadd.f32 0.0, %v846
        %848 = vmatmul.f32.gmra.mxu0 %v503
        %v849 = vpop.f32.mrf.mxu0
        %v850 = vadd.f32 0.0, %v849
        %851 = vmatmul.f32.gmra.mxu0 %v505
        %v852 = vpop.f32.mrf.mxu0
        %v853 = vadd.f32 0.0, %v852
        %854 = vmatmul.f32.gmra.mxu0 %v507
        %v855 = vpop.f32.mrf.mxu0
        %v856 = vadd.f32 0.0, %v855
        %857 = vmatmul.f32.gmra.mxu0 %v509
        %v858 = vpop.f32.mrf.mxu0
        %v859 = vadd.f32 0.0, %v858
        %860 = vmatmul.f32.gmra.mxu0 %v511
        %v861 = vpop.f32.mrf.mxu0
        %v862 = vadd.f32 0.0, %v861
        %863 = vmatmul.f32.gmra.mxu0 %v513
        %v864 = vpop.f32.mrf.mxu0
        %v865 = vadd.f32 0.0, %v864
        %866 = vmatmul.f32.gmra.mxu0 %v515
        %v867 = vpop.f32.mrf.mxu0
        %v868 = vadd.f32 0.0, %v867
        %869 = vmatmul.f32.gmra.mxu0 %v517
        %v870 = vpop.f32.mrf.mxu0
        %v871 = vadd.f32 0.0, %v870
        %872 = vmatmul.f32.gmra.mxu0 %v519
        %v873 = vpop.f32.mrf.mxu0
        %v874 = vadd.f32 0.0, %v873
        %875 = vmatmul.f32.gmra.mxu0 %v521
        %v876 = vpop.f32.mrf.mxu0
        %v877 = vadd.f32 0.0, %v876
        %878 = vmatmul.f32.gmra.mxu0 %v523
        %v879 = vpop.f32.mrf.mxu0
        %v880 = vadd.f32 0.0, %v879
        %881 = vmatmul.f32.gmra.mxu0 %v525
        %v882 = vpop.f32.mrf.mxu0
        %v883 = vadd.f32 0.0, %v882
        %884 = vmatmul.f32.gmra.mxu0 %v527
        %v885 = vpop.f32.mrf.mxu0
        %v886 = vadd.f32 0.0, %v885
        %887 = vmatmul.f32.gmra.mxu0 %v529
        %v888 = vpop.f32.mrf.mxu0
        %v889 = vadd.f32 0.0, %v888
        %890 = vmatmul.f32.gmra.mxu0 %v531
        %v891 = vpop.f32.mrf.mxu0
        %v892 = vadd.f32 0.0, %v891
        %893 = vmatmul.f32.gmra.mxu0 %v533
        %v894 = vpop.f32.mrf.mxu0
        %v895 = vadd.f32 0.0, %v894
        %896 = vmatmul.f32.gmra.mxu0 %v535
        %v897 = vpop.f32.mrf.mxu0
        %v898 = vadd.f32 0.0, %v897
        %899 = vmatmul.f32.gmra.mxu0 %v537
        %v900 = vpop.f32.mrf.mxu0
        %v901 = vadd.f32 0.0, %v900
        %902 = vmatmul.f32.gmra.mxu0 %v539
        %v903 = vpop.f32.mrf.mxu0
        %v904 = vadd.f32 0.0, %v903
        %905 = vmatmul.f32.gmra.mxu0 %v541
        %v906 = vpop.f32.mrf.mxu0
        %v907 = vadd.f32 0.0, %v906
        %908 = vmatmul.f32.gmra.mxu0 %v543
        %v909 = vpop.f32.mrf.mxu0
        %v910 = vadd.f32 0.0, %v909
        %911 = vmatmul.f32.gmra.mxu0 %v545
        %v912 = vpop.f32.mrf.mxu0
        %v913 = vadd.f32 0.0, %v912
        %914 = vmatmul.f32.gmra.mxu0 %v547
        %v915 = vpop.f32.mrf.mxu0
        %v916 = vadd.f32 0.0, %v915
        %917 = vmatmul.f32.gmra.mxu0 %v549
        %v918 = vpop.f32.mrf.mxu0
        %v919 = vadd.f32 0.0, %v918
        %920 = vmatmul.f32.gmra.mxu0 %v551
        %v921 = vpop.f32.mrf.mxu0
        %v922 = vadd.f32 0.0, %v921
        %923 = vmatmul.f32.gmra.mxu0 %v553
        %v924 = vpop.f32.mrf.mxu0
        %v925 = vadd.f32 0.0, %v924
        %926 = vmatmul.f32.gmra.mxu0 %v555
        %v927 = vpop.f32.mrf.mxu0
        %v928 = vadd.f32 0.0, %v927
        %929 = vmatmul.f32.gmra.mxu0 %v557
        %v930 = vpop.f32.mrf.mxu0
        %v931 = vadd.f32 0.0, %v930
        %932 = vmatmul.f32.gmra.mxu0 %v559
        %v933 = vpop.f32.mrf.mxu0
        %v934 = vadd.f32 0.0, %v933
        %935 = vmatmul.f32.gmra.mxu0 %v561
        %v936 = vpop.f32.mrf.mxu0
        %v937 = vadd.f32 0.0, %v936
        %938 = vmatmul.f32.gmra.mxu0 %v563
        %v939 = vpop.f32.mrf.mxu0
        %v940 = vadd.f32 0.0, %v939
        %941 = vmatmul.f32.gmra.mxu0 %v565
        %v942 = vpop.f32.mrf.mxu0
        %v943 = vadd.f32 0.0, %v942
        %944 = vmatmul.f32.gmra.mxu0 %v567
        %v945 = vpop.f32.mrf.mxu0
        %v946 = vadd.f32 0.0, %v945
        %947 = vmatmul.f32.gmra.mxu0 %v569
        %v948 = vpop.f32.mrf.mxu0
        %v949 = vadd.f32 0.0, %v948
        %950 = vmatmul.f32.gmra.mxu0 %v571
        %v951 = vpop.f32.mrf.mxu0
        %v952 = vadd.f32 0.0, %v951
        %953 = vmatmul.f32.gmra.mxu0 %v573
        %v954 = vpop.f32.mrf.mxu0
        %v955 = vadd.f32 0.0, %v954
        %956 = vmatmul.f32.gmra.mxu0 %v575
        %v957 = vpop.f32.mrf.mxu0
        %v958 = vadd.f32 0.0, %v957
        %959 = vmatmul.f32.gmra.mxu0 %v577
        %v960 = vpop.f32.mrf.mxu0
        %v961 = vadd.f32 0.0, %v960
        %962 = vmatmul.f32.gmra.mxu0 %v579
        %v963 = vpop.f32.mrf.mxu0
        %v964 = vadd.f32 0.0, %v963
        %965 = vmatmul.f32.gmra.mxu0 %v581
        %v966 = vpop.f32.mrf.mxu0
        %v967 = vadd.f32 0.0, %v966
        %968 = vmatmul.f32.gmra.mxu0 %v583
        %v969 = vpop.f32.mrf.mxu0
        %v970 = vadd.f32 0.0, %v969
        %971 = vmatmul.f32.gmra.mxu0 %v585
        %v972 = vpop.f32.mrf.mxu0
        %v973 = vadd.f32 0.0, %v972
        %974 = vmatmul.f32.gmra.mxu0 %v587
        %v975 = vpop.f32.mrf.mxu0
        %v976 = vadd.f32 0.0, %v975
        %977 = vmatmul.f32.gmra.mxu0 %v589
        %v978 = vpop.f32.mrf.mxu0
        %v979 = vadd.f32 0.0, %v978
        %980 = vmatmul.f32.gmra.mxu0 %v591
        %v981 = vpop.f32.mrf.mxu0
        %v982 = vadd.f32 0.0, %v981
        %983 = vmatmul.f32.gmra.mxu0 %v593
        %v984 = vpop.f32.mrf.mxu0
        %v985 = vadd.f32 0.0, %v984
        %986 = vmatmul.f32.gmra.mxu0 %v595
        %v987 = vpop.f32.mrf.mxu0
        %v988 = vadd.f32 0.0, %v987
        %989 = vmatmul.f32.gmra.mxu0 %v597
        %v990 = vpop.f32.mrf.mxu0
        %v991 = vadd.f32 0.0, %v990
        %992 = vmatmul.f32.gmra.mxu0 %v599
        %v993 = vpop.f32.mrf.mxu0
        %v994 = vadd.f32 0.0, %v993
        %995 = vmatmul.f32.gmra.mxu0 %v601
        %v996 = vpop.f32.mrf.mxu0
        %v997 = vadd.f32 0.0, %v996
        %998 = vmatmul.f32.gmra.mxu0 %v603
        %v999 = vpop.f32.mrf.mxu0
        %v1000 = vadd.f32 0.0, %v999
        %1001 = vmatmul.f32.gmra.mxu0 %v605
        %v1002 = vpop.f32.mrf.mxu0
        %v1003 = vadd.f32 0.0, %v1002
        %1004 = vmatmul.f32.gmra.mxu0 %v607
        %v1005 = vpop.f32.mrf.mxu0
        %v1006 = vadd.f32 0.0, %v1005
        %1007 = vmatmul.f32.gmra.mxu0 %v609
        %v1008 = vpop.f32.mrf.mxu0
        %v1009 = vadd.f32 0.0, %v1008
        %1010 = vmatmul.f32.gmra.mxu0 %v611
        %v1011 = vpop.f32.mrf.mxu0
        %v1012 = vadd.f32 0.0, %v1011
        %1013 = vdwg.mxu0
        %1014 = vmatpush.msra.mxu0 %v356
        %1015 = vmatpush.msra.mxu0 %v355
        %1016 = vmatpush.msra.mxu0 %v354
        %1017 = vmatpush.msra.mxu0 %v353
        %1018 = vmatpush.msra.mxu0 %v352
        %1019 = vmatpush.msra.mxu0 %v351
        %1020 = vmatpush.msra.mxu0 %v350
        %1021 = vmatpush.msra.mxu0 %v349
        %1022 = vmatpush.msra.mxu0 %v348
        %1023 = vmatpush.msra.mxu0 %v347
        %1024 = vmatpush.msra.mxu0 %v346
        %1025 = vmatpush.msra.mxu0 %v345
        %1026 = vmatpush.msra.mxu0 %v344
        %1027 = vmatpush.msra.mxu0 %v343
        %1028 = vmatpush.msra.mxu0 %v342
        %1029 = vmatpush.msra.mxu0 %v341
        %1030 = vmatmul.f32.gmra.mxu0 %v358
        %v1031 = vpop.f32.mrf.mxu0
        %v1032 = vadd.f32 %v631, %v1031
        %1033 = vmatmul.f32.gmra.mxu0 %v360
        %v1034 = vpop.f32.mrf.mxu0
        %v1035 = vadd.f32 %v634, %v1034
        %1036 = vmatmul.f32.gmra.mxu0 %v362
        %v1037 = vpop.f32.mrf.mxu0
        %v1038 = vadd.f32 %v637, %v1037
        %1039 = vmatmul.f32.gmra.mxu0 %v364
        %v1040 = vpop.f32.mrf.mxu0
        %v1041 = vadd.f32 %v640, %v1040
        %1042 = vmatmul.f32.gmra.mxu0 %v366
        %v1043 = vpop.f32.mrf.mxu0
        %v1044 = vadd.f32 %v643, %v1043
        %1045 = vmatmul.f32.gmra.mxu0 %v368
        %v1046 = vpop.f32.mrf.mxu0
        %v1047 = vadd.f32 %v646, %v1046
        %1048 = vmatmul.f32.gmra.mxu0 %v370
        %v1049 = vpop.f32.mrf.mxu0
        %v1050 = vadd.f32 %v649, %v1049
        %1051 = vmatmul.f32.gmra.mxu0 %v372
        %v1052 = vpop.f32.mrf.mxu0
        %v1053 = vadd.f32 %v652, %v1052
        %1054 = vmatmul.f32.gmra.mxu0 %v374
        %v1055 = vpop.f32.mrf.mxu0
        %v1056 = vadd.f32 %v655, %v1055
        %1057 = vmatmul.f32.gmra.mxu0 %v376
        %v1058 = vpop.f32.mrf.mxu0
        %v1059 = vadd.f32 %v658, %v1058
        %1060 = vmatmul.f32.gmra.mxu0 %v378
        %v1061 = vpop.f32.mrf.mxu0
        %v1062 = vadd.f32 %v661, %v1061
        %1063 = vmatmul.f32.gmra.mxu0 %v380
        %v1064 = vpop.f32.mrf.mxu0
        %v1065 = vadd.f32 %v664, %v1064
        %1066 = vmatmul.f32.gmra.mxu0 %v382
        %v1067 = vpop.f32.mrf.mxu0
        %v1068 = vadd.f32 %v667, %v1067
        %1069 = vmatmul.f32.gmra.mxu0 %v384
        %v1070 = vpop.f32.mrf.mxu0
        %v1071 = vadd.f32 %v670, %v1070
        %1072 = vmatmul.f32.gmra.mxu0 %v386
        %v1073 = vpop.f32.mrf.mxu0
        %v1074 = vadd.f32 %v673, %v1073
        %1075 = vmatmul.f32.gmra.mxu0 %v388
        %v1076 = vpop.f32.mrf.mxu0
        %v1077 = vadd.f32 %v676, %v1076
        %1078 = vmatmul.f32.gmra.mxu0 %v390
        %v1079 = vpop.f32.mrf.mxu0
        %v1080 = vadd.f32 %v679, %v1079
        %1081 = vmatmul.f32.gmra.mxu0 %v392
        %v1082 = vpop.f32.mrf.mxu0
        %v1083 = vadd.f32 %v682, %v1082
        %1084 = vmatmul.f32.gmra.mxu0 %v394
        %v1085 = vpop.f32.mrf.mxu0
        %v1086 = vadd.f32 %v685, %v1085
        %1087 = vmatmul.f32.gmra.mxu0 %v396
        %v1088 = vpop.f32.mrf.mxu0
        %v1089 = vadd.f32 %v688, %v1088
        %1090 = vmatmul.f32.gmra.mxu0 %v398
        %v1091 = vpop.f32.mrf.mxu0
        %v1092 = vadd.f32 %v691, %v1091
        %1093 = vmatmul.f32.gmra.mxu0 %v400
        %v1094 = vpop.f32.mrf.mxu0
        %v1095 = vadd.f32 %v694, %v1094
        %1096 = vmatmul.f32.gmra.mxu0 %v402
        %v1097 = vpop.f32.mrf.mxu0
        %v1098 = vadd.f32 %v697, %v1097
        %1099 = vmatmul.f32.gmra.mxu0 %v404
        %v1100 = vpop.f32.mrf.mxu0
        %v1101 = vadd.f32 %v700, %v1100
        %1102 = vmatmul.f32.gmra.mxu0 %v406
        %v1103 = vpop.f32.mrf.mxu0
        %v1104 = vadd.f32 %v703, %v1103
        %1105 = vmatmul.f32.gmra.mxu0 %v408
        %v1106 = vpop.f32.mrf.mxu0
        %v1107 = vadd.f32 %v706, %v1106
        %1108 = vmatmul.f32.gmra.mxu0 %v410
        %v1109 = vpop.f32.mrf.mxu0
        %v1110 = vadd.f32 %v709, %v1109
        %1111 = vmatmul.f32.gmra.mxu0 %v412
        %v1112 = vpop.f32.mrf.mxu0
        %v1113 = vadd.f32 %v712, %v1112
        %1114 = vmatmul.f32.gmra.mxu0 %v414
        %v1115 = vpop.f32.mrf.mxu0
        %v1116 = vadd.f32 %v715, %v1115
        %1117 = vmatmul.f32.gmra.mxu0 %v416
        %v1118 = vpop.f32.mrf.mxu0
        %v1119 = vadd.f32 %v718, %v1118
        %1120 = vmatmul.f32.gmra.mxu0 %v418
        %v1121 = vpop.f32.mrf.mxu0
        %v1122 = vadd.f32 %v721, %v1121
        %1123 = vmatmul.f32.gmra.mxu0 %v420
        %v1124 = vpop.f32.mrf.mxu0
        %v1125 = vadd.f32 %v724, %v1124
        %1126 = vmatmul.f32.gmra.mxu0 %v422
        %v1127 = vpop.f32.mrf.mxu0
        %v1128 = vadd.f32 %v727, %v1127
        %1129 = vmatmul.f32.gmra.mxu0 %v424
        %v1130 = vpop.f32.mrf.mxu0
        %v1131 = vadd.f32 %v730, %v1130
        %1132 = vmatmul.f32.gmra.mxu0 %v426
        %v1133 = vpop.f32.mrf.mxu0
        %v1134 = vadd.f32 %v733, %v1133
        %1135 = vmatmul.f32.gmra.mxu0 %v428
        %v1136 = vpop.f32.mrf.mxu0
        %v1137 = vadd.f32 %v736, %v1136
        %1138 = vmatmul.f32.gmra.mxu0 %v430
        %v1139 = vpop.f32.mrf.mxu0
        %v1140 = vadd.f32 %v739, %v1139
        %1141 = vmatmul.f32.gmra.mxu0 %v432
        %v1142 = vpop.f32.mrf.mxu0
        %v1143 = vadd.f32 %v742, %v1142
        %1144 = vmatmul.f32.gmra.mxu0 %v434
        %v1145 = vpop.f32.mrf.mxu0
        %v1146 = vadd.f32 %v745, %v1145
        %1147 = vmatmul.f32.gmra.mxu0 %v436
        %v1148 = vpop.f32.mrf.mxu0
        %v1149 = vadd.f32 %v748, %v1148
        %1150 = vmatmul.f32.gmra.mxu0 %v438
        %v1151 = vpop.f32.mrf.mxu0
        %v1152 = vadd.f32 %v751, %v1151
        %1153 = vmatmul.f32.gmra.mxu0 %v440
        %v1154 = vpop.f32.mrf.mxu0
        %v1155 = vadd.f32 %v754, %v1154
        %1156 = vmatmul.f32.gmra.mxu0 %v442
        %v1157 = vpop.f32.mrf.mxu0
        %v1158 = vadd.f32 %v757, %v1157
        %1159 = vmatmul.f32.gmra.mxu0 %v444
        %v1160 = vpop.f32.mrf.mxu0
        %v1161 = vadd.f32 %v760, %v1160
        %1162 = vmatmul.f32.gmra.mxu0 %v446
        %v1163 = vpop.f32.mrf.mxu0
        %v1164 = vadd.f32 %v763, %v1163
        %1165 = vmatmul.f32.gmra.mxu0 %v448
        %v1166 = vpop.f32.mrf.mxu0
        %v1167 = vadd.f32 %v766, %v1166
        %1168 = vmatmul.f32.gmra.mxu0 %v450
        %v1169 = vpop.f32.mrf.mxu0
        %v1170 = vadd.f32 %v769, %v1169
        %1171 = vmatmul.f32.gmra.mxu0 %v452
        %v1172 = vpop.f32.mrf.mxu0
        %v1173 = vadd.f32 %v772, %v1172
        %1174 = vmatmul.f32.gmra.mxu0 %v454
        %v1175 = vpop.f32.mrf.mxu0
        %v1176 = vadd.f32 %v775, %v1175
        %1177 = vmatmul.f32.gmra.mxu0 %v456
        %v1178 = vpop.f32.mrf.mxu0
        %v1179 = vadd.f32 %v778, %v1178
        %1180 = vmatmul.f32.gmra.mxu0 %v458
        %v1181 = vpop.f32.mrf.mxu0
        %v1182 = vadd.f32 %v781, %v1181
        %1183 = vmatmul.f32.gmra.mxu0 %v460
        %v1184 = vpop.f32.mrf.mxu0
        %v1185 = vadd.f32 %v784, %v1184
        %1186 = vmatmul.f32.gmra.mxu0 %v462
        %v1187 = vpop.f32.mrf.mxu0
        %v1188 = vadd.f32 %v787, %v1187
        %1189 = vmatmul.f32.gmra.mxu0 %v464
        %v1190 = vpop.f32.mrf.mxu0
        %v1191 = vadd.f32 %v790, %v1190
        %1192 = vmatmul.f32.gmra.mxu0 %v466
        %v1193 = vpop.f32.mrf.mxu0
        %v1194 = vadd.f32 %v793, %v1193
        %1195 = vmatmul.f32.gmra.mxu0 %v468
        %v1196 = vpop.f32.mrf.mxu0
        %v1197 = vadd.f32 %v796, %v1196
        %1198 = vmatmul.f32.gmra.mxu0 %v470
        %v1199 = vpop.f32.mrf.mxu0
        %v1200 = vadd.f32 %v799, %v1199
        %1201 = vmatmul.f32.gmra.mxu0 %v472
        %v1202 = vpop.f32.mrf.mxu0
        %v1203 = vadd.f32 %v802, %v1202
        %1204 = vmatmul.f32.gmra.mxu0 %v474
        %v1205 = vpop.f32.mrf.mxu0
        %v1206 = vadd.f32 %v805, %v1205
        %1207 = vmatmul.f32.gmra.mxu0 %v476
        %v1208 = vpop.f32.mrf.mxu0
        %v1209 = vadd.f32 %v808, %v1208
        %1210 = vmatmul.f32.gmra.mxu0 %v478
        %v1211 = vpop.f32.mrf.mxu0
        %v1212 = vadd.f32 %v811, %v1211
        %1213 = vmatmul.f32.gmra.mxu0 %v480
        %v1214 = vpop.f32.mrf.mxu0
        %v1215 = vadd.f32 %v814, %v1214
        %1216 = vmatmul.f32.gmra.mxu0 %v482
        %v1217 = vpop.f32.mrf.mxu0
        %v1218 = vadd.f32 %v817, %v1217
        %1219 = vmatmul.f32.gmra.mxu0 %v484
        %v1220 = vpop.f32.mrf.mxu0
        %v1221 = vadd.f32 %v820, %v1220
        %1222 = vmatmul.f32.gmra.mxu0 %v486
        %v1223 = vpop.f32.mrf.mxu0
        %v1224 = vadd.f32 %v823, %v1223
        %1225 = vmatmul.f32.gmra.mxu0 %v488
        %v1226 = vpop.f32.mrf.mxu0
        %v1227 = vadd.f32 %v826, %v1226
        %1228 = vmatmul.f32.gmra.mxu0 %v490
        %v1229 = vpop.f32.mrf.mxu0
        %v1230 = vadd.f32 %v829, %v1229
        %1231 = vmatmul.f32.gmra.mxu0 %v492
        %v1232 = vpop.f32.mrf.mxu0
        %v1233 = vadd.f32 %v832, %v1232
        %1234 = vmatmul.f32.gmra.mxu0 %v494
        %v1235 = vpop.f32.mrf.mxu0
        %v1236 = vadd.f32 %v835, %v1235
        %1237 = vmatmul.f32.gmra.mxu0 %v496
        %v1238 = vpop.f32.mrf.mxu0
        %v1239 = vadd.f32 %v838, %v1238
        %1240 = vmatmul.f32.gmra.mxu0 %v498
        %v1241 = vpop.f32.mrf.mxu0
        %v1242 = vadd.f32 %v841, %v1241
        %1243 = vmatmul.f32.gmra.mxu0 %v500
        %v1244 = vpop.f32.mrf.mxu0
        %v1245 = vadd.f32 %v844, %v1244
        %1246 = vmatmul.f32.gmra.mxu0 %v502
        %v1247 = vpop.f32.mrf.mxu0
        %v1248 = vadd.f32 %v847, %v1247
        %1249 = vmatmul.f32.gmra.mxu0 %v504
        %v1250 = vpop.f32.mrf.mxu0
        %v1251 = vadd.f32 %v850, %v1250
        %1252 = vmatmul.f32.gmra.mxu0 %v506
        %v1253 = vpop.f32.mrf.mxu0
        %v1254 = vadd.f32 %v853, %v1253
        %1255 = vmatmul.f32.gmra.mxu0 %v508
        %v1256 = vpop.f32.mrf.mxu0
        %v1257 = vadd.f32 %v856, %v1256
        %1258 = vmatmul.f32.gmra.mxu0 %v510
        %v1259 = vpop.f32.mrf.mxu0
        %v1260 = vadd.f32 %v859, %v1259
        %1261 = vmatmul.f32.gmra.mxu0 %v512
        %v1262 = vpop.f32.mrf.mxu0
        %v1263 = vadd.f32 %v862, %v1262
        %1264 = vmatmul.f32.gmra.mxu0 %v514
        %v1265 = vpop.f32.mrf.mxu0
        %v1266 = vadd.f32 %v865, %v1265
        %1267 = vmatmul.f32.gmra.mxu0 %v516
        %v1268 = vpop.f32.mrf.mxu0
        %v1269 = vadd.f32 %v868, %v1268
        %1270 = vmatmul.f32.gmra.mxu0 %v518
        %v1271 = vpop.f32.mrf.mxu0
        %v1272 = vadd.f32 %v871, %v1271
        %1273 = vmatmul.f32.gmra.mxu0 %v520
        %v1274 = vpop.f32.mrf.mxu0
        %v1275 = vadd.f32 %v874, %v1274
        %1276 = vmatmul.f32.gmra.mxu0 %v522
        %v1277 = vpop.f32.mrf.mxu0
        %v1278 = vadd.f32 %v877, %v1277
        %1279 = vmatmul.f32.gmra.mxu0 %v524
        %v1280 = vpop.f32.mrf.mxu0
        %v1281 = vadd.f32 %v880, %v1280
        %1282 = vmatmul.f32.gmra.mxu0 %v526
        %v1283 = vpop.f32.mrf.mxu0
        %v1284 = vadd.f32 %v883, %v1283
        %1285 = vmatmul.f32.gmra.mxu0 %v528
        %v1286 = vpop.f32.mrf.mxu0
        %v1287 = vadd.f32 %v886, %v1286
        %1288 = vmatmul.f32.gmra.mxu0 %v530
        %v1289 = vpop.f32.mrf.mxu0
        %v1290 = vadd.f32 %v889, %v1289
        %1291 = vmatmul.f32.gmra.mxu0 %v532
        %v1292 = vpop.f32.mrf.mxu0
        %v1293 = vadd.f32 %v892, %v1292
        %1294 = vmatmul.f32.gmra.mxu0 %v534
        %v1295 = vpop.f32.mrf.mxu0
        %v1296 = vadd.f32 %v895, %v1295
        %1297 = vmatmul.f32.gmra.mxu0 %v536
        %v1298 = vpop.f32.mrf.mxu0
        %v1299 = vadd.f32 %v898, %v1298
        %1300 = vmatmul.f32.gmra.mxu0 %v538
        %v1301 = vpop.f32.mrf.mxu0
        %v1302 = vadd.f32 %v901, %v1301
        %1303 = vmatmul.f32.gmra.mxu0 %v540
        %v1304 = vpop.f32.mrf.mxu0
        %v1305 = vadd.f32 %v904, %v1304
        %1306 = vmatmul.f32.gmra.mxu0 %v542
        %v1307 = vpop.f32.mrf.mxu0
        %v1308 = vadd.f32 %v907, %v1307
        %1309 = vmatmul.f32.gmra.mxu0 %v544
        %v1310 = vpop.f32.mrf.mxu0
        %v1311 = vadd.f32 %v910, %v1310
        %1312 = vmatmul.f32.gmra.mxu0 %v546
        %v1313 = vpop.f32.mrf.mxu0
        %v1314 = vadd.f32 %v913, %v1313
        %1315 = vmatmul.f32.gmra.mxu0 %v548
        %v1316 = vpop.f32.mrf.mxu0
        %v1317 = vadd.f32 %v916, %v1316
        %1318 = vmatmul.f32.gmra.mxu0 %v550
        %v1319 = vpop.f32.mrf.mxu0
        %v1320 = vadd.f32 %v919, %v1319
        %1321 = vmatmul.f32.gmra.mxu0 %v552
        %v1322 = vpop.f32.mrf.mxu0
        %v1323 = vadd.f32 %v922, %v1322
        %1324 = vmatmul.f32.gmra.mxu0 %v554
        %v1325 = vpop.f32.mrf.mxu0
        %v1326 = vadd.f32 %v925, %v1325
        %1327 = vmatmul.f32.gmra.mxu0 %v556
        %v1328 = vpop.f32.mrf.mxu0
        %v1329 = vadd.f32 %v928, %v1328
        %1330 = vmatmul.f32.gmra.mxu0 %v558
        %v1331 = vpop.f32.mrf.mxu0
        %v1332 = vadd.f32 %v931, %v1331
        %1333 = vmatmul.f32.gmra.mxu0 %v560
        %v1334 = vpop.f32.mrf.mxu0
        %v1335 = vadd.f32 %v934, %v1334
        %1336 = vmatmul.f32.gmra.mxu0 %v562
        %v1337 = vpop.f32.mrf.mxu0
        %v1338 = vadd.f32 %v937, %v1337
        %1339 = vmatmul.f32.gmra.mxu0 %v564
        %v1340 = vpop.f32.mrf.mxu0
        %v1341 = vadd.f32 %v940, %v1340
        %1342 = vmatmul.f32.gmra.mxu0 %v566
        %v1343 = vpop.f32.mrf.mxu0
        %v1344 = vadd.f32 %v943, %v1343
        %1345 = vmatmul.f32.gmra.mxu0 %v568
        %v1346 = vpop.f32.mrf.mxu0
        %v1347 = vadd.f32 %v946, %v1346
        %1348 = vmatmul.f32.gmra.mxu0 %v570
        %v1349 = vpop.f32.mrf.mxu0
        %v1350 = vadd.f32 %v949, %v1349
        %1351 = vmatmul.f32.gmra.mxu0 %v572
        %v1352 = vpop.f32.mrf.mxu0
        %v1353 = vadd.f32 %v952, %v1352
        %1354 = vmatmul.f32.gmra.mxu0 %v574
        %v1355 = vpop.f32.mrf.mxu0
        %v1356 = vadd.f32 %v955, %v1355
        %1357 = vmatmul.f32.gmra.mxu0 %v576
        %v1358 = vpop.f32.mrf.mxu0
        %v1359 = vadd.f32 %v958, %v1358
        %1360 = vmatmul.f32.gmra.mxu0 %v578
        %v1361 = vpop.f32.mrf.mxu0
        %v1362 = vadd.f32 %v961, %v1361
        %1363 = vmatmul.f32.gmra.mxu0 %v580
        %v1364 = vpop.f32.mrf.mxu0
        %v1365 = vadd.f32 %v964, %v1364
        %1366 = vmatmul.f32.gmra.mxu0 %v582
        %v1367 = vpop.f32.mrf.mxu0
        %v1368 = vadd.f32 %v967, %v1367
        %1369 = vmatmul.f32.gmra.mxu0 %v584
        %v1370 = vpop.f32.mrf.mxu0
        %v1371 = vadd.f32 %v970, %v1370
        %1372 = vmatmul.f32.gmra.mxu0 %v586
        %v1373 = vpop.f32.mrf.mxu0
        %v1374 = vadd.f32 %v973, %v1373
        %1375 = vmatmul.f32.gmra.mxu0 %v588
        %v1376 = vpop.f32.mrf.mxu0
        %v1377 = vadd.f32 %v976, %v1376
        %1378 = vmatmul.f32.gmra.mxu0 %v590
        %v1379 = vpop.f32.mrf.mxu0
        %v1380 = vadd.f32 %v979, %v1379
        %1381 = vmatmul.f32.gmra.mxu0 %v592
        %v1382 = vpop.f32.mrf.mxu0
        %v1383 = vadd.f32 %v982, %v1382
        %1384 = vmatmul.f32.gmra.mxu0 %v594
        %v1385 = vpop.f32.mrf.mxu0
        %v1386 = vadd.f32 %v985, %v1385
        %1387 = vmatmul.f32.gmra.mxu0 %v596
        %v1388 = vpop.f32.mrf.mxu0
        %v1389 = vadd.f32 %v988, %v1388
        %1390 = vmatmul.f32.gmra.mxu0 %v598
        %v1391 = vpop.f32.mrf.mxu0
        %v1392 = vadd.f32 %v991, %v1391
        %1393 = vmatmul.f32.gmra.mxu0 %v600
        %v1394 = vpop.f32.mrf.mxu0
        %v1395 = vadd.f32 %v994, %v1394
        %1396 = vmatmul.f32.gmra.mxu0 %v602
        %v1397 = vpop.f32.mrf.mxu0
        %v1398 = vadd.f32 %v997, %v1397
        %1399 = vmatmul.f32.gmra.mxu0 %v604
        %v1400 = vpop.f32.mrf.mxu0
        %v1401 = vadd.f32 %v1000, %v1400
        %1402 = vmatmul.f32.gmra.mxu0 %v606
        %v1403 = vpop.f32.mrf.mxu0
        %v1404 = vadd.f32 %v1003, %v1403
        %1405 = vmatmul.f32.gmra.mxu0 %v608
        %v1406 = vpop.f32.mrf.mxu0
        %v1407 = vadd.f32 %v1006, %v1406
        %1408 = vmatmul.f32.gmra.mxu0 %v610
        %v1409 = vpop.f32.mrf.mxu0
        %v1410 = vadd.f32 %v1009, %v1409
        %1411 = vmatmul.f32.gmra.mxu0 %v612
        %v1412 = vpop.f32.mrf.mxu0
        %v1413 = vadd.f32 %v1012, %v1412
        %1414 = vdwg.mxu0
        %vm1415 = vcmask 261120
        %v1416 = vsel %vm1415, %v1032, 0.0
        %1417 = vadd.xlane.f32.xlu0 %v1416
        %v1418 = vpop.xlane.xlu0 %1417
        %v1419 = vsel %vm1415, %v1035, 0.0
        %1420 = vadd.xlane.f32.xlu0 %v1419
        %v1421 = vpop.xlane.xlu0 %1420
        %v1422 = vsel %vm1415, %v1038, 0.0
        %1423 = vadd.xlane.f32.xlu0 %v1422
        %v1424 = vpop.xlane.xlu0 %1423
        %v1425 = vsel %vm1415, %v1041, 0.0
        %1426 = vadd.xlane.f32.xlu0 %v1425
        %v1427 = vpop.xlane.xlu0 %1426
        %v1428 = vsel %vm1415, %v1044, 0.0
        %1429 = vadd.xlane.f32.xlu0 %v1428
        %v1430 = vpop.xlane.xlu0 %1429
        %v1431 = vsel %vm1415, %v1047, 0.0
        %1432 = vadd.xlane.f32.xlu0 %v1431
        %v1433 = vpop.xlane.xlu0 %1432
        %v1434 = vsel %vm1415, %v1050, 0.0
        %1435 = vadd.xlane.f32.xlu0 %v1434
        %v1436 = vpop.xlane.xlu0 %1435
        %v1437 = vsel %vm1415, %v1053, 0.0
        %1438 = vadd.xlane.f32.xlu0 %v1437
        %v1439 = vpop.xlane.xlu0 %1438
        %v1440 = vsel %vm1415, %v1056, 0.0
        %1441 = vadd.xlane.f32.xlu0 %v1440
        %v1442 = vpop.xlane.xlu0 %1441
        %v1443 = vsel %vm1415, %v1059, 0.0
        %1444 = vadd.xlane.f32.xlu0 %v1443
        %v1445 = vpop.xlane.xlu0 %1444
        %v1446 = vsel %vm1415, %v1062, 0.0
        %1447 = vadd.xlane.f32.xlu0 %v1446
        %v1448 = vpop.xlane.xlu0 %1447
        %v1449 = vsel %vm1415, %v1065, 0.0
        %1450 = vadd.xlane.f32.xlu0 %v1449
        %v1451 = vpop.xlane.xlu0 %1450
        %v1452 = vsel %vm1415, %v1068, 0.0
        %1453 = vadd.xlane.f32.xlu0 %v1452
        %v1454 = vpop.xlane.xlu0 %1453
        %v1455 = vsel %vm1415, %v1071, 0.0
        %1456 = vadd.xlane.f32.xlu0 %v1455
        %v1457 = vpop.xlane.xlu0 %1456
        %v1458 = vsel %vm1415, %v1074, 0.0
        %1459 = vadd.xlane.f32.xlu0 %v1458
        %v1460 = vpop.xlane.xlu0 %1459
        %v1461 = vsel %vm1415, %v1077, 0.0
        %1462 = vadd.xlane.f32.xlu0 %v1461
        %v1463 = vpop.xlane.xlu0 %1462
        %v1464 = vsel %vm1415, %v1080, 0.0
        %1465 = vadd.xlane.f32.xlu0 %v1464
        %v1466 = vpop.xlane.xlu0 %1465
        %v1467 = vsel %vm1415, %v1083, 0.0
        %1468 = vadd.xlane.f32.xlu0 %v1467
        %v1469 = vpop.xlane.xlu0 %1468
        %v1470 = vsel %vm1415, %v1086, 0.0
        %1471 = vadd.xlane.f32.xlu0 %v1470
        %v1472 = vpop.xlane.xlu0 %1471
        %v1473 = vsel %vm1415, %v1089, 0.0
        %1474 = vadd.xlane.f32.xlu0 %v1473
        %v1475 = vpop.xlane.xlu0 %1474
        %v1476 = vsel %vm1415, %v1092, 0.0
        %1477 = vadd.xlane.f32.xlu0 %v1476
        %v1478 = vpop.xlane.xlu0 %1477
        %v1479 = vsel %vm1415, %v1095, 0.0
        %1480 = vadd.xlane.f32.xlu0 %v1479
        %v1481 = vpop.xlane.xlu0 %1480
        %v1482 = vsel %vm1415, %v1098, 0.0
        %1483 = vadd.xlane.f32.xlu0 %v1482
        %v1484 = vpop.xlane.xlu0 %1483
        %v1485 = vsel %vm1415, %v1101, 0.0
        %1486 = vadd.xlane.f32.xlu0 %v1485
        %v1487 = vpop.xlane.xlu0 %1486
        %v1488 = vsel %vm1415, %v1104, 0.0
        %1489 = vadd.xlane.f32.xlu0 %v1488
        %v1490 = vpop.xlane.xlu0 %1489
        %v1491 = vsel %vm1415, %v1107, 0.0
        %1492 = vadd.xlane.f32.xlu0 %v1491
        %v1493 = vpop.xlane.xlu0 %1492
        %v1494 = vsel %vm1415, %v1110, 0.0
        %1495 = vadd.xlane.f32.xlu0 %v1494
        %v1496 = vpop.xlane.xlu0 %1495
        %v1497 = vsel %vm1415, %v1113, 0.0
        %1498 = vadd.xlane.f32.xlu0 %v1497
        %v1499 = vpop.xlane.xlu0 %1498
        %v1500 = vsel %vm1415, %v1116, 0.0
        %1501 = vadd.xlane.f32.xlu0 %v1500
        %v1502 = vpop.xlane.xlu0 %1501
        %v1503 = vsel %vm1415, %v1119, 0.0
        %1504 = vadd.xlane.f32.xlu0 %v1503
        %v1505 = vpop.xlane.xlu0 %1504
        %v1506 = vsel %vm1415, %v1122, 0.0
        %1507 = vadd.xlane.f32.xlu0 %v1506
        %v1508 = vpop.xlane.xlu0 %1507
        %v1509 = vsel %vm1415, %v1125, 0.0
        %1510 = vadd.xlane.f32.xlu0 %v1509
        %v1511 = vpop.xlane.xlu0 %1510
        %v1512 = vsel %vm1415, %v1128, 0.0
        %1513 = vadd.xlane.f32.xlu0 %v1512
        %v1514 = vpop.xlane.xlu0 %1513
        %v1515 = vsel %vm1415, %v1131, 0.0
        %1516 = vadd.xlane.f32.xlu0 %v1515
        %v1517 = vpop.xlane.xlu0 %1516
        %v1518 = vsel %vm1415, %v1134, 0.0
        %1519 = vadd.xlane.f32.xlu0 %v1518
        %v1520 = vpop.xlane.xlu0 %1519
        %v1521 = vsel %vm1415, %v1137, 0.0
        %1522 = vadd.xlane.f32.xlu0 %v1521
        %v1523 = vpop.xlane.xlu0 %1522
        %v1524 = vsel %vm1415, %v1140, 0.0
        %1525 = vadd.xlane.f32.xlu0 %v1524
        %v1526 = vpop.xlane.xlu0 %1525
        %v1527 = vsel %vm1415, %v1143, 0.0
        %1528 = vadd.xlane.f32.xlu0 %v1527
        %v1529 = vpop.xlane.xlu0 %1528
        %v1530 = vsel %vm1415, %v1146, 0.0
        %1531 = vadd.xlane.f32.xlu0 %v1530
        %v1532 = vpop.xlane.xlu0 %1531
        %v1533 = vsel %vm1415, %v1149, 0.0
        %1534 = vadd.xlane.f32.xlu0 %v1533
        %v1535 = vpop.xlane.xlu0 %1534
        %v1536 = vsel %vm1415, %v1152, 0.0
        %1537 = vadd.xlane.f32.xlu0 %v1536
        %v1538 = vpop.xlane.xlu0 %1537
        %v1539 = vsel %vm1415, %v1155, 0.0
        %1540 = vadd.xlane.f32.xlu0 %v1539
        %v1541 = vpop.xlane.xlu0 %1540
        %v1542 = vsel %vm1415, %v1158, 0.0
        %1543 = vadd.xlane.f32.xlu0 %v1542
        %v1544 = vpop.xlane.xlu0 %1543
        %v1545 = vsel %vm1415, %v1161, 0.0
        %1546 = vadd.xlane.f32.xlu0 %v1545
        %v1547 = vpop.xlane.xlu0 %1546
        %v1548 = vsel %vm1415, %v1164, 0.0
        %1549 = vadd.xlane.f32.xlu0 %v1548
        %v1550 = vpop.xlane.xlu0 %1549
        %v1551 = vsel %vm1415, %v1167, 0.0
        %1552 = vadd.xlane.f32.xlu0 %v1551
        %v1553 = vpop.xlane.xlu0 %1552
        %v1554 = vsel %vm1415, %v1170, 0.0
        %1555 = vadd.xlane.f32.xlu0 %v1554
        %v1556 = vpop.xlane.xlu0 %1555
        %v1557 = vsel %vm1415, %v1173, 0.0
        %1558 = vadd.xlane.f32.xlu0 %v1557
        %v1559 = vpop.xlane.xlu0 %1558
        %v1560 = vsel %vm1415, %v1176, 0.0
        %1561 = vadd.xlane.f32.xlu0 %v1560
        %v1562 = vpop.xlane.xlu0 %1561
        %v1563 = vsel %vm1415, %v1179, 0.0
        %1564 = vadd.xlane.f32.xlu0 %v1563
        %v1565 = vpop.xlane.xlu0 %1564
        %v1566 = vsel %vm1415, %v1182, 0.0
        %1567 = vadd.xlane.f32.xlu0 %v1566
        %v1568 = vpop.xlane.xlu0 %1567
        %v1569 = vsel %vm1415, %v1185, 0.0
        %1570 = vadd.xlane.f32.xlu0 %v1569
        %v1571 = vpop.xlane.xlu0 %1570
        %v1572 = vsel %vm1415, %v1188, 0.0
        %1573 = vadd.xlane.f32.xlu0 %v1572
        %v1574 = vpop.xlane.xlu0 %1573
        %v1575 = vsel %vm1415, %v1191, 0.0
        %1576 = vadd.xlane.f32.xlu0 %v1575
        %v1577 = vpop.xlane.xlu0 %1576
        %v1578 = vsel %vm1415, %v1194, 0.0
        %1579 = vadd.xlane.f32.xlu0 %v1578
        %v1580 = vpop.xlane.xlu0 %1579
        %v1581 = vsel %vm1415, %v1197, 0.0
        %1582 = vadd.xlane.f32.xlu0 %v1581
        %v1583 = vpop.xlane.xlu0 %1582
        %v1584 = vsel %vm1415, %v1200, 0.0
        %1585 = vadd.xlane.f32.xlu0 %v1584
        %v1586 = vpop.xlane.xlu0 %1585
        %v1587 = vsel %vm1415, %v1203, 0.0
        %1588 = vadd.xlane.f32.xlu0 %v1587
        %v1589 = vpop.xlane.xlu0 %1588
        %v1590 = vsel %vm1415, %v1206, 0.0
        %1591 = vadd.xlane.f32.xlu0 %v1590
        %v1592 = vpop.xlane.xlu0 %1591
        %v1593 = vsel %vm1415, %v1209, 0.0
        %1594 = vadd.xlane.f32.xlu0 %v1593
        %v1595 = vpop.xlane.xlu0 %1594
        %v1596 = vsel %vm1415, %v1212, 0.0
        %1597 = vadd.xlane.f32.xlu0 %v1596
        %v1598 = vpop.xlane.xlu0 %1597
        %v1599 = vsel %vm1415, %v1215, 0.0
        %1600 = vadd.xlane.f32.xlu0 %v1599
        %v1601 = vpop.xlane.xlu0 %1600
        %v1602 = vsel %vm1415, %v1218, 0.0
        %1603 = vadd.xlane.f32.xlu0 %v1602
        %v1604 = vpop.xlane.xlu0 %1603
        %v1605 = vsel %vm1415, %v1221, 0.0
        %1606 = vadd.xlane.f32.xlu0 %v1605
        %v1607 = vpop.xlane.xlu0 %1606
        %v1608 = vsel %vm1415, %v1224, 0.0
        %1609 = vadd.xlane.f32.xlu0 %v1608
        %v1610 = vpop.xlane.xlu0 %1609
        %v1611 = vsel %vm1415, %v1227, 0.0
        %1612 = vadd.xlane.f32.xlu0 %v1611
        %v1613 = vpop.xlane.xlu0 %1612
        %v1614 = vsel %vm1415, %v1230, 0.0
        %1615 = vadd.xlane.f32.xlu0 %v1614
        %v1616 = vpop.xlane.xlu0 %1615
        %v1617 = vsel %vm1415, %v1233, 0.0
        %1618 = vadd.xlane.f32.xlu0 %v1617
        %v1619 = vpop.xlane.xlu0 %1618
        %v1620 = vsel %vm1415, %v1236, 0.0
        %1621 = vadd.xlane.f32.xlu0 %v1620
        %v1622 = vpop.xlane.xlu0 %1621
        %v1623 = vsel %vm1415, %v1239, 0.0
        %1624 = vadd.xlane.f32.xlu0 %v1623
        %v1625 = vpop.xlane.xlu0 %1624
        %v1626 = vsel %vm1415, %v1242, 0.0
        %1627 = vadd.xlane.f32.xlu0 %v1626
        %v1628 = vpop.xlane.xlu0 %1627
        %v1629 = vsel %vm1415, %v1245, 0.0
        %1630 = vadd.xlane.f32.xlu0 %v1629
        %v1631 = vpop.xlane.xlu0 %1630
        %v1632 = vsel %vm1415, %v1248, 0.0
        %1633 = vadd.xlane.f32.xlu0 %v1632
        %v1634 = vpop.xlane.xlu0 %1633
        %v1635 = vsel %vm1415, %v1251, 0.0
        %1636 = vadd.xlane.f32.xlu0 %v1635
        %v1637 = vpop.xlane.xlu0 %1636
        %v1638 = vsel %vm1415, %v1254, 0.0
        %1639 = vadd.xlane.f32.xlu0 %v1638
        %v1640 = vpop.xlane.xlu0 %1639
        %v1641 = vsel %vm1415, %v1257, 0.0
        %1642 = vadd.xlane.f32.xlu0 %v1641
        %v1643 = vpop.xlane.xlu0 %1642
        %v1644 = vsel %vm1415, %v1260, 0.0
        %1645 = vadd.xlane.f32.xlu0 %v1644
        %v1646 = vpop.xlane.xlu0 %1645
        %v1647 = vsel %vm1415, %v1263, 0.0
        %1648 = vadd.xlane.f32.xlu0 %v1647
        %v1649 = vpop.xlane.xlu0 %1648
        %v1650 = vsel %vm1415, %v1266, 0.0
        %1651 = vadd.xlane.f32.xlu0 %v1650
        %v1652 = vpop.xlane.xlu0 %1651
        %v1653 = vsel %vm1415, %v1269, 0.0
        %1654 = vadd.xlane.f32.xlu0 %v1653
        %v1655 = vpop.xlane.xlu0 %1654
        %v1656 = vsel %vm1415, %v1272, 0.0
        %1657 = vadd.xlane.f32.xlu0 %v1656
        %v1658 = vpop.xlane.xlu0 %1657
        %v1659 = vsel %vm1415, %v1275, 0.0
        %1660 = vadd.xlane.f32.xlu0 %v1659
        %v1661 = vpop.xlane.xlu0 %1660
        %v1662 = vsel %vm1415, %v1278, 0.0
        %1663 = vadd.xlane.f32.xlu0 %v1662
        %v1664 = vpop.xlane.xlu0 %1663
        %v1665 = vsel %vm1415, %v1281, 0.0
        %1666 = vadd.xlane.f32.xlu0 %v1665
        %v1667 = vpop.xlane.xlu0 %1666
        %v1668 = vsel %vm1415, %v1284, 0.0
        %1669 = vadd.xlane.f32.xlu0 %v1668
        %v1670 = vpop.xlane.xlu0 %1669
        %v1671 = vsel %vm1415, %v1287, 0.0
        %1672 = vadd.xlane.f32.xlu0 %v1671
        %v1673 = vpop.xlane.xlu0 %1672
        %v1674 = vsel %vm1415, %v1290, 0.0
        %1675 = vadd.xlane.f32.xlu0 %v1674
        %v1676 = vpop.xlane.xlu0 %1675
        %v1677 = vsel %vm1415, %v1293, 0.0
        %1678 = vadd.xlane.f32.xlu0 %v1677
        %v1679 = vpop.xlane.xlu0 %1678
        %v1680 = vsel %vm1415, %v1296, 0.0
        %1681 = vadd.xlane.f32.xlu0 %v1680
        %v1682 = vpop.xlane.xlu0 %1681
        %v1683 = vsel %vm1415, %v1299, 0.0
        %1684 = vadd.xlane.f32.xlu0 %v1683
        %v1685 = vpop.xlane.xlu0 %1684
        %v1686 = vsel %vm1415, %v1302, 0.0
        %1687 = vadd.xlane.f32.xlu0 %v1686
        %v1688 = vpop.xlane.xlu0 %1687
        %v1689 = vsel %vm1415, %v1305, 0.0
        %1690 = vadd.xlane.f32.xlu0 %v1689
        %v1691 = vpop.xlane.xlu0 %1690
        %v1692 = vsel %vm1415, %v1308, 0.0
        %1693 = vadd.xlane.f32.xlu0 %v1692
        %v1694 = vpop.xlane.xlu0 %1693
        %v1695 = vsel %vm1415, %v1311, 0.0
        %1696 = vadd.xlane.f32.xlu0 %v1695
        %v1697 = vpop.xlane.xlu0 %1696
        %v1698 = vsel %vm1415, %v1314, 0.0
        %1699 = vadd.xlane.f32.xlu0 %v1698
        %v1700 = vpop.xlane.xlu0 %1699
        %v1701 = vsel %vm1415, %v1317, 0.0
        %1702 = vadd.xlane.f32.xlu0 %v1701
        %v1703 = vpop.xlane.xlu0 %1702
        %v1704 = vsel %vm1415, %v1320, 0.0
        %1705 = vadd.xlane.f32.xlu0 %v1704
        %v1706 = vpop.xlane.xlu0 %1705
        %v1707 = vsel %vm1415, %v1323, 0.0
        %1708 = vadd.xlane.f32.xlu0 %v1707
        %v1709 = vpop.xlane.xlu0 %1708
        %v1710 = vsel %vm1415, %v1326, 0.0
        %1711 = vadd.xlane.f32.xlu0 %v1710
        %v1712 = vpop.xlane.xlu0 %1711
        %v1713 = vsel %vm1415, %v1329, 0.0
        %1714 = vadd.xlane.f32.xlu0 %v1713
        %v1715 = vpop.xlane.xlu0 %1714
        %v1716 = vsel %vm1415, %v1332, 0.0
        %1717 = vadd.xlane.f32.xlu0 %v1716
        %v1718 = vpop.xlane.xlu0 %1717
        %v1719 = vsel %vm1415, %v1335, 0.0
        %1720 = vadd.xlane.f32.xlu0 %v1719
        %v1721 = vpop.xlane.xlu0 %1720
        %v1722 = vsel %vm1415, %v1338, 0.0
        %1723 = vadd.xlane.f32.xlu0 %v1722
        %v1724 = vpop.xlane.xlu0 %1723
        %v1725 = vsel %vm1415, %v1341, 0.0
        %1726 = vadd.xlane.f32.xlu0 %v1725
        %v1727 = vpop.xlane.xlu0 %1726
        %v1728 = vsel %vm1415, %v1344, 0.0
        %1729 = vadd.xlane.f32.xlu0 %v1728
        %v1730 = vpop.xlane.xlu0 %1729
        %v1731 = vsel %vm1415, %v1347, 0.0
        %1732 = vadd.xlane.f32.xlu0 %v1731
        %v1733 = vpop.xlane.xlu0 %1732
        %v1734 = vsel %vm1415, %v1350, 0.0
        %1735 = vadd.xlane.f32.xlu0 %v1734
        %v1736 = vpop.xlane.xlu0 %1735
        %v1737 = vsel %vm1415, %v1353, 0.0
        %1738 = vadd.xlane.f32.xlu0 %v1737
        %v1739 = vpop.xlane.xlu0 %1738
        %v1740 = vsel %vm1415, %v1356, 0.0
        %1741 = vadd.xlane.f32.xlu0 %v1740
        %v1742 = vpop.xlane.xlu0 %1741
        %v1743 = vsel %vm1415, %v1359, 0.0
        %1744 = vadd.xlane.f32.xlu0 %v1743
        %v1745 = vpop.xlane.xlu0 %1744
        %v1746 = vsel %vm1415, %v1362, 0.0
        %1747 = vadd.xlane.f32.xlu0 %v1746
        %v1748 = vpop.xlane.xlu0 %1747
        %v1749 = vsel %vm1415, %v1365, 0.0
        %1750 = vadd.xlane.f32.xlu0 %v1749
        %v1751 = vpop.xlane.xlu0 %1750
        %v1752 = vsel %vm1415, %v1368, 0.0
        %1753 = vadd.xlane.f32.xlu0 %v1752
        %v1754 = vpop.xlane.xlu0 %1753
        %v1755 = vsel %vm1415, %v1371, 0.0
        %1756 = vadd.xlane.f32.xlu0 %v1755
        %v1757 = vpop.xlane.xlu0 %1756
        %v1758 = vsel %vm1415, %v1374, 0.0
        %1759 = vadd.xlane.f32.xlu0 %v1758
        %v1760 = vpop.xlane.xlu0 %1759
        %v1761 = vsel %vm1415, %v1377, 0.0
        %1762 = vadd.xlane.f32.xlu0 %v1761
        %v1763 = vpop.xlane.xlu0 %1762
        %v1764 = vsel %vm1415, %v1380, 0.0
        %1765 = vadd.xlane.f32.xlu0 %v1764
        %v1766 = vpop.xlane.xlu0 %1765
        %v1767 = vsel %vm1415, %v1383, 0.0
        %1768 = vadd.xlane.f32.xlu0 %v1767
        %v1769 = vpop.xlane.xlu0 %1768
        %v1770 = vsel %vm1415, %v1386, 0.0
        %1771 = vadd.xlane.f32.xlu0 %v1770
        %v1772 = vpop.xlane.xlu0 %1771
        %v1773 = vsel %vm1415, %v1389, 0.0
        %1774 = vadd.xlane.f32.xlu0 %v1773
        %v1775 = vpop.xlane.xlu0 %1774
        %v1776 = vsel %vm1415, %v1392, 0.0
        %1777 = vadd.xlane.f32.xlu0 %v1776
        %v1778 = vpop.xlane.xlu0 %1777
        %v1779 = vsel %vm1415, %v1395, 0.0
        %1780 = vadd.xlane.f32.xlu0 %v1779
        %v1781 = vpop.xlane.xlu0 %1780
        %v1782 = vsel %vm1415, %v1398, 0.0
        %1783 = vadd.xlane.f32.xlu0 %v1782
        %v1784 = vpop.xlane.xlu0 %1783
        %v1785 = vsel %vm1415, %v1401, 0.0
        %1786 = vadd.xlane.f32.xlu0 %v1785
        %v1787 = vpop.xlane.xlu0 %1786
        %v1788 = vsel %vm1415, %v1404, 0.0
        %1789 = vadd.xlane.f32.xlu0 %v1788
        %v1790 = vpop.xlane.xlu0 %1789
        %v1791 = vsel %vm1415, %v1407, 0.0
        %1792 = vadd.xlane.f32.xlu0 %v1791
        %v1793 = vpop.xlane.xlu0 %1792
        %v1794 = vsel %vm1415, %v1410, 0.0
        %1795 = vadd.xlane.f32.xlu0 %v1794
        %v1796 = vpop.xlane.xlu0 %1795
        %v1797 = vsel %vm1415, %v1413, 0.0
        %1798 = vadd.xlane.f32.xlu0 %v1797
        %v1799 = vpop.xlane.xlu0 %1798
        %v1800 = vrcp.pop 32.0
        %v1801 = vmul.f32 32.0, %v1800
        %v1802 = vsub.f32 1.0, %v1801
        %v1803 = vmul.f32 %v1800, %v1802
        %v1804 = vadd.f32 %v1800, %v1803
        %vm1805 = vweird.f32 %v1800
        %v1806 = vsel %vm1805, %v1800, %v1804
        %v1807 = vmul.f32 %v1418, %v1806
        %v1808 = vmul.f32 %v1421, %v1806
        %v1809 = vmul.f32 %v1424, %v1806
        %v1810 = vmul.f32 %v1427, %v1806
        %v1811 = vmul.f32 %v1430, %v1806
        %v1812 = vmul.f32 %v1433, %v1806
        %v1813 = vmul.f32 %v1436, %v1806
        %v1814 = vmul.f32 %v1439, %v1806
        %v1815 = vmul.f32 %v1442, %v1806
        %v1816 = vmul.f32 %v1445, %v1806
        %v1817 = vmul.f32 %v1448, %v1806
        %v1818 = vmul.f32 %v1451, %v1806
        %v1819 = vmul.f32 %v1454, %v1806
        %v1820 = vmul.f32 %v1457, %v1806
        %v1821 = vmul.f32 %v1460, %v1806
        %v1822 = vmul.f32 %v1463, %v1806
        %v1823 = vmul.f32 %v1466, %v1806
        %v1824 = vmul.f32 %v1469, %v1806
        %v1825 = vmul.f32 %v1472, %v1806
        %v1826 = vmul.f32 %v1475, %v1806
        %v1827 = vmul.f32 %v1478, %v1806
        %v1828 = vmul.f32 %v1481, %v1806
        %v1829 = vmul.f32 %v1484, %v1806
        %v1830 = vmul.f32 %v1487, %v1806
        %v1831 = vmul.f32 %v1490, %v1806
        %v1832 = vmul.f32 %v1493, %v1806
        %v1833 = vmul.f32 %v1496, %v1806
        %v1834 = vmul.f32 %v1499, %v1806
        %v1835 = vmul.f32 %v1502, %v1806
        %v1836 = vmul.f32 %v1505, %v1806
        %v1837 = vmul.f32 %v1508, %v1806
        %v1838 = vmul.f32 %v1511, %v1806
        %v1839 = vmul.f32 %v1514, %v1806
        %v1840 = vmul.f32 %v1517, %v1806
        %v1841 = vmul.f32 %v1520, %v1806
        %v1842 = vmul.f32 %v1523, %v1806
        %v1843 = vmul.f32 %v1526, %v1806
        %v1844 = vmul.f32 %v1529, %v1806
        %v1845 = vmul.f32 %v1532, %v1806
        %v1846 = vmul.f32 %v1535, %v1806
        %v1847 = vmul.f32 %v1538, %v1806
        %v1848 = vmul.f32 %v1541, %v1806
        %v1849 = vmul.f32 %v1544, %v1806
        %v1850 = vmul.f32 %v1547, %v1806
        %v1851 = vmul.f32 %v1550, %v1806
        %v1852 = vmul.f32 %v1553, %v1806
        %v1853 = vmul.f32 %v1556, %v1806
        %v1854 = vmul.f32 %v1559, %v1806
        %v1855 = vmul.f32 %v1562, %v1806
        %v1856 = vmul.f32 %v1565, %v1806
        %v1857 = vmul.f32 %v1568, %v1806
        %v1858 = vmul.f32 %v1571, %v1806
        %v1859 = vmul.f32 %v1574, %v1806
        %v1860 = vmul.f32 %v1577, %v1806
        %v1861 = vmul.f32 %v1580, %v1806
        %v1862 = vmul.f32 %v1583, %v1806
        %v1863 = vmul.f32 %v1586, %v1806
        %v1864 = vmul.f32 %v1589, %v1806
        %v1865 = vmul.f32 %v1592, %v1806
        %v1866 = vmul.f32 %v1595, %v1806
        %v1867 = vmul.f32 %v1598, %v1806
        %v1868 = vmul.f32 %v1601, %v1806
        %v1869 = vmul.f32 %v1604, %v1806
        %v1870 = vmul.f32 %v1607, %v1806
        %v1871 = vmul.f32 %v1610, %v1806
        %v1872 = vmul.f32 %v1613, %v1806
        %v1873 = vmul.f32 %v1616, %v1806
        %v1874 = vmul.f32 %v1619, %v1806
        %v1875 = vmul.f32 %v1622, %v1806
        %v1876 = vmul.f32 %v1625, %v1806
        %v1877 = vmul.f32 %v1628, %v1806
        %v1878 = vmul.f32 %v1631, %v1806
        %v1879 = vmul.f32 %v1634, %v1806
        %v1880 = vmul.f32 %v1637, %v1806
        %v1881 = vmul.f32 %v1640, %v1806
        %v1882 = vmul.f32 %v1643, %v1806
        %v1883 = vmul.f32 %v1646, %v1806
        %v1884 = vmul.f32 %v1649, %v1806
        %v1885 = vmul.f32 %v1652, %v1806
        %v1886 = vmul.f32 %v1655, %v1806
        %v1887 = vmul.f32 %v1658, %v1806
        %v1888 = vmul.f32 %v1661, %v1806
        %v1889 = vmul.f32 %v1664, %v1806
        %v1890 = vmul.f32 %v1667, %v1806
        %v1891 = vmul.f32 %v1670, %v1806
        %v1892 = vmul.f32 %v1673, %v1806
        %v1893 = vmul.f32 %v1676, %v1806
        %v1894 = vmul.f32 %v1679, %v1806
        %v1895 = vmul.f32 %v1682, %v1806
        %v1896 = vmul.f32 %v1685, %v1806
        %v1897 = vmul.f32 %v1688, %v1806
        %v1898 = vmul.f32 %v1691, %v1806
        %v1899 = vmul.f32 %v1694, %v1806
        %v1900 = vmul.f32 %v1697, %v1806
        %v1901 = vmul.f32 %v1700, %v1806
        %v1902 = vmul.f32 %v1703, %v1806
        %v1903 = vmul.f32 %v1706, %v1806
        %v1904 = vmul.f32 %v1709, %v1806
        %v1905 = vmul.f32 %v1712, %v1806
        %v1906 = vmul.f32 %v1715, %v1806
        %v1907 = vmul.f32 %v1718, %v1806
        %v1908 = vmul.f32 %v1721, %v1806
        %v1909 = vmul.f32 %v1724, %v1806
        %v1910 = vmul.f32 %v1727, %v1806
        %v1911 = vmul.f32 %v1730, %v1806
        %v1912 = vmul.f32 %v1733, %v1806
        %v1913 = vmul.f32 %v1736, %v1806
        %v1914 = vmul.f32 %v1739, %v1806
        %v1915 = vmul.f32 %v1742, %v1806
        %v1916 = vmul.f32 %v1745, %v1806
        %v1917 = vmul.f32 %v1748, %v1806
        %v1918 = vmul.f32 %v1751, %v1806
        %v1919 = vmul.f32 %v1754, %v1806
        %v1920 = vmul.f32 %v1757, %v1806
        %v1921 = vmul.f32 %v1760, %v1806
        %v1922 = vmul.f32 %v1763, %v1806
        %v1923 = vmul.f32 %v1766, %v1806
        %v1924 = vmul.f32 %v1769, %v1806
        %v1925 = vmul.f32 %v1772, %v1806
        %v1926 = vmul.f32 %v1775, %v1806
        %v1927 = vmul.f32 %v1778, %v1806
        %v1928 = vmul.f32 %v1781, %v1806
        %v1929 = vmul.f32 %v1784, %v1806
        %v1930 = vmul.f32 %v1787, %v1806
        %v1931 = vmul.f32 %v1790, %v1806
        %v1932 = vmul.f32 %v1793, %v1806
        %v1933 = vmul.f32 %v1796, %v1806
        %v1934 = vmul.f32 %v1799, %v1806
        %v1935 = vsub.f32 %v1032, %v1807
        %v1936 = vsub.f32 %v1035, %v1808
        %v1937 = vsub.f32 %v1038, %v1809
        %v1938 = vsub.f32 %v1041, %v1810
        %v1939 = vsub.f32 %v1044, %v1811
        %v1940 = vsub.f32 %v1047, %v1812
        %v1941 = vsub.f32 %v1050, %v1813
        %v1942 = vsub.f32 %v1053, %v1814
        %v1943 = vsub.f32 %v1056, %v1815
        %v1944 = vsub.f32 %v1059, %v1816
        %v1945 = vsub.f32 %v1062, %v1817
        %v1946 = vsub.f32 %v1065, %v1818
        %v1947 = vsub.f32 %v1068, %v1819
        %v1948 = vsub.f32 %v1071, %v1820
        %v1949 = vsub.f32 %v1074, %v1821
        %v1950 = vsub.f32 %v1077, %v1822
        %v1951 = vsub.f32 %v1080, %v1823
        %v1952 = vsub.f32 %v1083, %v1824
        %v1953 = vsub.f32 %v1086, %v1825
        %v1954 = vsub.f32 %v1089, %v1826
        %v1955 = vsub.f32 %v1092, %v1827
        %v1956 = vsub.f32 %v1095, %v1828
        %v1957 = vsub.f32 %v1098, %v1829
        %v1958 = vsub.f32 %v1101, %v1830
        %v1959 = vsub.f32 %v1104, %v1831
        %v1960 = vsub.f32 %v1107, %v1832
        %v1961 = vsub.f32 %v1110, %v1833
        %v1962 = vsub.f32 %v1113, %v1834
        %v1963 = vsub.f32 %v1116, %v1835
        %v1964 = vsub.f32 %v1119, %v1836
        %v1965 = vsub.f32 %v1122, %v1837
        %v1966 = vsub.f32 %v1125, %v1838
        %v1967 = vsub.f32 %v1128, %v1839
        %v1968 = vsub.f32 %v1131, %v1840
        %v1969 = vsub.f32 %v1134, %v1841
        %v1970 = vsub.f32 %v1137, %v1842
        %v1971 = vsub.f32 %v1140, %v1843
        %v1972 = vsub.f32 %v1143, %v1844
        %v1973 = vsub.f32 %v1146, %v1845
        %v1974 = vsub.f32 %v1149, %v1846
        %v1975 = vsub.f32 %v1152, %v1847
        %v1976 = vsub.f32 %v1155, %v1848
        %v1977 = vsub.f32 %v1158, %v1849
        %v1978 = vsub.f32 %v1161, %v1850
        %v1979 = vsub.f32 %v1164, %v1851
        %v1980 = vsub.f32 %v1167, %v1852
        %v1981 = vsub.f32 %v1170, %v1853
        %v1982 = vsub.f32 %v1173, %v1854
        %v1983 = vsub.f32 %v1176, %v1855
        %v1984 = vsub.f32 %v1179, %v1856
        %v1985 = vsub.f32 %v1182, %v1857
        %v1986 = vsub.f32 %v1185, %v1858
        %v1987 = vsub.f32 %v1188, %v1859
        %v1988 = vsub.f32 %v1191, %v1860
        %v1989 = vsub.f32 %v1194, %v1861
        %v1990 = vsub.f32 %v1197, %v1862
        %v1991 = vsub.f32 %v1200, %v1863
        %v1992 = vsub.f32 %v1203, %v1864
        %v1993 = vsub.f32 %v1206, %v1865
        %v1994 = vsub.f32 %v1209, %v1866
        %v1995 = vsub.f32 %v1212, %v1867
        %v1996 = vsub.f32 %v1215, %v1868
        %v1997 = vsub.f32 %v1218, %v1869
        %v1998 = vsub.f32 %v1221, %v1870
        %v1999 = vsub.f32 %v1224, %v1871
        %v2000 = vsub.f32 %v1227, %v1872
        %v2001 = vsub.f32 %v1230, %v1873
        %v2002 = vsub.f32 %v1233, %v1874
        %v2003 = vsub.f32 %v1236, %v1875
        %v2004 = vsub.f32 %v1239, %v1876
        %v2005 = vsub.f32 %v1242, %v1877
        %v2006 = vsub.f32 %v1245, %v1878
        %v2007 = vsub.f32 %v1248, %v1879
        %v2008 = vsub.f32 %v1251, %v1880
        %v2009 = vsub.f32 %v1254, %v1881
        %v2010 = vsub.f32 %v1257, %v1882
        %v2011 = vsub.f32 %v1260, %v1883
        %v2012 = vsub.f32 %v1263, %v1884
        %v2013 = vsub.f32 %v1266, %v1885
        %v2014 = vsub.f32 %v1269, %v1886
        %v2015 = vsub.f32 %v1272, %v1887
        %v2016 = vsub.f32 %v1275, %v1888
        %v2017 = vsub.f32 %v1278, %v1889
        %v2018 = vsub.f32 %v1281, %v1890
        %v2019 = vsub.f32 %v1284, %v1891
        %v2020 = vsub.f32 %v1287, %v1892
        %v2021 = vsub.f32 %v1290, %v1893
        %v2022 = vsub.f32 %v1293, %v1894
        %v2023 = vsub.f32 %v1296, %v1895
        %v2024 = vsub.f32 %v1299, %v1896
        %v2025 = vsub.f32 %v1302, %v1897
        %v2026 = vsub.f32 %v1305, %v1898
        %v2027 = vsub.f32 %v1308, %v1899
        %v2028 = vsub.f32 %v1311, %v1900
        %v2029 = vsub.f32 %v1314, %v1901
        %v2030 = vsub.f32 %v1317, %v1902
        %v2031 = vsub.f32 %v1320, %v1903
        %v2032 = vsub.f32 %v1323, %v1904
        %v2033 = vsub.f32 %v1326, %v1905
        %v2034 = vsub.f32 %v1329, %v1906
        %v2035 = vsub.f32 %v1332, %v1907
        %v2036 = vsub.f32 %v1335, %v1908
        %v2037 = vsub.f32 %v1338, %v1909
        %v2038 = vsub.f32 %v1341, %v1910
        %v2039 = vsub.f32 %v1344, %v1911
        %v2040 = vsub.f32 %v1347, %v1912
        %v2041 = vsub.f32 %v1350, %v1913
        %v2042 = vsub.f32 %v1353, %v1914
        %v2043 = vsub.f32 %v1356, %v1915
        %v2044 = vsub.f32 %v1359, %v1916
        %v2045 = vsub.f32 %v1362, %v1917
        %v2046 = vsub.f32 %v1365, %v1918
        %v2047 = vsub.f32 %v1368, %v1919
        %v2048 = vsub.f32 %v1371, %v1920
        %v2049 = vsub.f32 %v1374, %v1921
        %v2050 = vsub.f32 %v1377, %v1922
        %v2051 = vsub.f32 %v1380, %v1923
        %v2052 = vsub.f32 %v1383, %v1924
        %v2053 = vsub.f32 %v1386, %v1925
        %v2054 = vsub.f32 %v1389, %v1926
        %v2055 = vsub.f32 %v1392, %v1927
        %v2056 = vsub.f32 %v1395, %v1928
        %v2057 = vsub.f32 %v1398, %v1929
        %v2058 = vsub.f32 %v1401, %v1930
        %v2059 = vsub.f32 %v1404, %v1931
        %v2060 = vsub.f32 %v1407, %v1932
        %v2061 = vsub.f32 %v1410, %v1933
        %v2062 = vsub.f32 %v1413, %v1934
        %v2063 = vmul.f32 %v1935, %v1935
        %v2064 = vmul.f32 %v1936, %v1936
        %v2065 = vmul.f32 %v1937, %v1937
        %v2066 = vmul.f32 %v1938, %v1938
        %v2067 = vmul.f32 %v1939, %v1939
        %v2068 = vmul.f32 %v1940, %v1940
        %v2069 = vmul.f32 %v1941, %v1941
        %v2070 = vmul.f32 %v1942, %v1942
        %v2071 = vmul.f32 %v1943, %v1943
        %v2072 = vmul.f32 %v1944, %v1944
        %v2073 = vmul.f32 %v1945, %v1945
        %v2074 = vmul.f32 %v1946, %v1946
        %v2075 = vmul.f32 %v1947, %v1947
        %v2076 = vmul.f32 %v1948, %v1948
        %v2077 = vmul.f32 %v1949, %v1949
        %v2078 = vmul.f32 %v1950, %v1950
        %v2079 = vmul.f32 %v1951, %v1951
        %v2080 = vmul.f32 %v1952, %v1952
        %v2081 = vmul.f32 %v1953, %v1953
        %v2082 = vmul.f32 %v1954, %v1954
        %v2083 = vmul.f32 %v1955, %v1955
        %v2084 = vmul.f32 %v1956, %v1956
        %v2085 = vmul.f32 %v1957, %v1957
        %v2086 = vmul.f32 %v1958, %v1958
        %v2087 = vmul.f32 %v1959, %v1959
        %v2088 = vmul.f32 %v1960, %v1960
        %v2089 = vmul.f32 %v1961, %v1961
        %v2090 = vmul.f32 %v1962, %v1962
        %v2091 = vmul.f32 %v1963, %v1963
        %v2092 = vmul.f32 %v1964, %v1964
        %v2093 = vmul.f32 %v1965, %v1965
        %v2094 = vmul.f32 %v1966, %v1966
        %v2095 = vmul.f32 %v1967, %v1967
        %v2096 = vmul.f32 %v1968, %v1968
        %v2097 = vmul.f32 %v1969, %v1969
        %v2098 = vmul.f32 %v1970, %v1970
        %v2099 = vmul.f32 %v1971, %v1971
        %v2100 = vmul.f32 %v1972, %v1972
        %v2101 = vmul.f32 %v1973, %v1973
        %v2102 = vmul.f32 %v1974, %v1974
        %v2103 = vmul.f32 %v1975, %v1975
        %v2104 = vmul.f32 %v1976, %v1976
        %v2105 = vmul.f32 %v1977, %v1977
        %v2106 = vmul.f32 %v1978, %v1978
        %v2107 = vmul.f32 %v1979, %v1979
        %v2108 = vmul.f32 %v1980, %v1980
        %v2109 = vmul.f32 %v1981, %v1981
        %v2110 = vmul.f32 %v1982, %v1982
        %v2111 = vmul.f32 %v1983, %v1983
        %v2112 = vmul.f32 %v1984, %v1984
        %v2113 = vmul.f32 %v1985, %v1985
        %v2114 = vmul.f32 %v1986, %v1986
        %v2115 = vmul.f32 %v1987, %v1987
        %v2116 = vmul.f32 %v1988, %v1988
        %v2117 = vmul.f32 %v1989, %v1989
        %v2118 = vmul.f32 %v1990, %v1990
        %v2119 = vmul.f32 %v1991, %v1991
        %v2120 = vmul.f32 %v1992, %v1992
        %v2121 = vmul.f32 %v1993, %v1993
        %v2122 = vmul.f32 %v1994, %v1994
        %v2123 = vmul.f32 %v1995, %v1995
        %v2124 = vmul.f32 %v1996, %v1996
        %v2125 = vmul.f32 %v1997, %v1997
        %v2126 = vmul.f32 %v1998, %v1998
        %v2127 = vmul.f32 %v1999, %v1999
        %v2128 = vmul.f32 %v2000, %v2000
        %v2129 = vmul.f32 %v2001, %v2001
        %v2130 = vmul.f32 %v2002, %v2002
        %v2131 = vmul.f32 %v2003, %v2003
        %v2132 = vmul.f32 %v2004, %v2004
        %v2133 = vmul.f32 %v2005, %v2005
        %v2134 = vmul.f32 %v2006, %v2006
        %v2135 = vmul.f32 %v2007, %v2007
        %v2136 = vmul.f32 %v2008, %v2008
        %v2137 = vmul.f32 %v2009, %v2009
        %v2138 = vmul.f32 %v2010, %v2010
        %v2139 = vmul.f32 %v2011, %v2011
        %v2140 = vmul.f32 %v2012, %v2012
        %v2141 = vmul.f32 %v2013, %v2013
        %v2142 = vmul.f32 %v2014, %v2014
        %v2143 = vmul.f32 %v2015, %v2015
        %v2144 = vmul.f32 %v2016, %v2016
        %v2145 = vmul.f32 %v2017, %v2017
        %v2146 = vmul.f32 %v2018, %v2018
        %v2147 = vmul.f32 %v2019, %v2019
        %v2148 = vmul.f32 %v2020, %v2020
        %v2149 = vmul.f32 %v2021, %v2021
        %v2150 = vmul.f32 %v2022, %v2022
        %v2151 = vmul.f32 %v2023, %v2023
        %v2152 = vmul.f32 %v2024, %v2024
        %v2153 = vmul.f32 %v2025, %v2025
        %v2154 = vmul.f32 %v2026, %v2026
        %v2155 = vmul.f32 %v2027, %v2027
        %v2156 = vmul.f32 %v2028, %v2028
        %v2157 = vmul.f32 %v2029, %v2029
        %v2158 = vmul.f32 %v2030, %v2030
        %v2159 = vmul.f32 %v2031, %v2031
        %v2160 = vmul.f32 %v2032, %v2032
        %v2161 = vmul.f32 %v2033, %v2033
        %v2162 = vmul.f32 %v2034, %v2034
        %v2163 = vmul.f32 %v2035, %v2035
        %v2164 = vmul.f32 %v2036, %v2036
        %v2165 = vmul.f32 %v2037, %v2037
        %v2166 = vmul.f32 %v2038, %v2038
        %v2167 = vmul.f32 %v2039, %v2039
        %v2168 = vmul.f32 %v2040, %v2040
        %v2169 = vmul.f32 %v2041, %v2041
        %v2170 = vmul.f32 %v2042, %v2042
        %v2171 = vmul.f32 %v2043, %v2043
        %v2172 = vmul.f32 %v2044, %v2044
        %v2173 = vmul.f32 %v2045, %v2045
        %v2174 = vmul.f32 %v2046, %v2046
        %v2175 = vmul.f32 %v2047, %v2047
        %v2176 = vmul.f32 %v2048, %v2048
        %v2177 = vmul.f32 %v2049, %v2049
        %v2178 = vmul.f32 %v2050, %v2050
        %v2179 = vmul.f32 %v2051, %v2051
        %v2180 = vmul.f32 %v2052, %v2052
        %v2181 = vmul.f32 %v2053, %v2053
        %v2182 = vmul.f32 %v2054, %v2054
        %v2183 = vmul.f32 %v2055, %v2055
        %v2184 = vmul.f32 %v2056, %v2056
        %v2185 = vmul.f32 %v2057, %v2057
        %v2186 = vmul.f32 %v2058, %v2058
        %v2187 = vmul.f32 %v2059, %v2059
        %v2188 = vmul.f32 %v2060, %v2060
        %v2189 = vmul.f32 %v2061, %v2061
        %v2190 = vmul.f32 %v2062, %v2062
        %v2191 = vsel %vm1415, %v2063, 0.0
        %2192 = vadd.xlane.f32.xlu0 %v2191
        %v2193 = vpop.xlane.xlu0 %2192
        %v2194 = vsel %vm1415, %v2064, 0.0
        %2195 = vadd.xlane.f32.xlu0 %v2194
        %v2196 = vpop.xlane.xlu0 %2195
        %v2197 = vsel %vm1415, %v2065, 0.0
        %2198 = vadd.xlane.f32.xlu0 %v2197
        %v2199 = vpop.xlane.xlu0 %2198
        %v2200 = vsel %vm1415, %v2066, 0.0
        %2201 = vadd.xlane.f32.xlu0 %v2200
        %v2202 = vpop.xlane.xlu0 %2201
        %v2203 = vsel %vm1415, %v2067, 0.0
        %2204 = vadd.xlane.f32.xlu0 %v2203
        %v2205 = vpop.xlane.xlu0 %2204
        %v2206 = vsel %vm1415, %v2068, 0.0
        %2207 = vadd.xlane.f32.xlu0 %v2206
        %v2208 = vpop.xlane.xlu0 %2207
        %v2209 = vsel %vm1415, %v2069, 0.0
        %2210 = vadd.xlane.f32.xlu0 %v2209
        %v2211 = vpop.xlane.xlu0 %2210
        %v2212 = vsel %vm1415, %v2070, 0.0
        %2213 = vadd.xlane.f32.xlu0 %v2212
        %v2214 = vpop.xlane.xlu0 %2213
        %v2215 = vsel %vm1415, %v2071, 0.0
        %2216 = vadd.xlane.f32.xlu0 %v2215
        %v2217 = vpop.xlane.xlu0 %2216
        %v2218 = vsel %vm1415, %v2072, 0.0
        %2219 = vadd.xlane.f32.xlu0 %v2218
        %v2220 = vpop.xlane.xlu0 %2219
        %v2221 = vsel %vm1415, %v2073, 0.0
        %2222 = vadd.xlane.f32.xlu0 %v2221
        %v2223 = vpop.xlane.xlu0 %2222
        %v2224 = vsel %vm1415, %v2074, 0.0
        %2225 = vadd.xlane.f32.xlu0 %v2224
        %v2226 = vpop.xlane.xlu0 %2225
        %v2227 = vsel %vm1415, %v2075, 0.0
        %2228 = vadd.xlane.f32.xlu0 %v2227
        %v2229 = vpop.xlane.xlu0 %2228
        %v2230 = vsel %vm1415, %v2076, 0.0
        %2231 = vadd.xlane.f32.xlu0 %v2230
        %v2232 = vpop.xlane.xlu0 %2231
        %v2233 = vsel %vm1415, %v2077, 0.0
        %2234 = vadd.xlane.f32.xlu0 %v2233
        %v2235 = vpop.xlane.xlu0 %2234
        %v2236 = vsel %vm1415, %v2078, 0.0
        %2237 = vadd.xlane.f32.xlu0 %v2236
        %v2238 = vpop.xlane.xlu0 %2237
        %v2239 = vsel %vm1415, %v2079, 0.0
        %2240 = vadd.xlane.f32.xlu0 %v2239
        %v2241 = vpop.xlane.xlu0 %2240
        %v2242 = vsel %vm1415, %v2080, 0.0
        %2243 = vadd.xlane.f32.xlu0 %v2242
        %v2244 = vpop.xlane.xlu0 %2243
        %v2245 = vsel %vm1415, %v2081, 0.0
        %2246 = vadd.xlane.f32.xlu0 %v2245
        %v2247 = vpop.xlane.xlu0 %2246
        %v2248 = vsel %vm1415, %v2082, 0.0
        %2249 = vadd.xlane.f32.xlu0 %v2248
        %v2250 = vpop.xlane.xlu0 %2249
        %v2251 = vsel %vm1415, %v2083, 0.0
        %2252 = vadd.xlane.f32.xlu0 %v2251
        %v2253 = vpop.xlane.xlu0 %2252
        %v2254 = vsel %vm1415, %v2084, 0.0
        %2255 = vadd.xlane.f32.xlu0 %v2254
        %v2256 = vpop.xlane.xlu0 %2255
        %v2257 = vsel %vm1415, %v2085, 0.0
        %2258 = vadd.xlane.f32.xlu0 %v2257
        %v2259 = vpop.xlane.xlu0 %2258
        %v2260 = vsel %vm1415, %v2086, 0.0
        %2261 = vadd.xlane.f32.xlu0 %v2260
        %v2262 = vpop.xlane.xlu0 %2261
        %v2263 = vsel %vm1415, %v2087, 0.0
        %2264 = vadd.xlane.f32.xlu0 %v2263
        %v2265 = vpop.xlane.xlu0 %2264
        %v2266 = vsel %vm1415, %v2088, 0.0
        %2267 = vadd.xlane.f32.xlu0 %v2266
        %v2268 = vpop.xlane.xlu0 %2267
        %v2269 = vsel %vm1415, %v2089, 0.0
        %2270 = vadd.xlane.f32.xlu0 %v2269
        %v2271 = vpop.xlane.xlu0 %2270
        %v2272 = vsel %vm1415, %v2090, 0.0
        %2273 = vadd.xlane.f32.xlu0 %v2272
        %v2274 = vpop.xlane.xlu0 %2273
        %v2275 = vsel %vm1415, %v2091, 0.0
        %2276 = vadd.xlane.f32.xlu0 %v2275
        %v2277 = vpop.xlane.xlu0 %2276
        %v2278 = vsel %vm1415, %v2092, 0.0
        %2279 = vadd.xlane.f32.xlu0 %v2278
        %v2280 = vpop.xlane.xlu0 %2279
        %v2281 = vsel %vm1415, %v2093, 0.0
        %2282 = vadd.xlane.f32.xlu0 %v2281
        %v2283 = vpop.xlane.xlu0 %2282
        %v2284 = vsel %vm1415, %v2094, 0.0
        %2285 = vadd.xlane.f32.xlu0 %v2284
        %v2286 = vpop.xlane.xlu0 %2285
        %v2287 = vsel %vm1415, %v2095, 0.0
        %2288 = vadd.xlane.f32.xlu0 %v2287
        %v2289 = vpop.xlane.xlu0 %2288
        %v2290 = vsel %vm1415, %v2096, 0.0
        %2291 = vadd.xlane.f32.xlu0 %v2290
        %v2292 = vpop.xlane.xlu0 %2291
        %v2293 = vsel %vm1415, %v2097, 0.0
        %2294 = vadd.xlane.f32.xlu0 %v2293
        %v2295 = vpop.xlane.xlu0 %2294
        %v2296 = vsel %vm1415, %v2098, 0.0
        %2297 = vadd.xlane.f32.xlu0 %v2296
        %v2298 = vpop.xlane.xlu0 %2297
        %v2299 = vsel %vm1415, %v2099, 0.0
        %2300 = vadd.xlane.f32.xlu0 %v2299
        %v2301 = vpop.xlane.xlu0 %2300
        %v2302 = vsel %vm1415, %v2100, 0.0
        %2303 = vadd.xlane.f32.xlu0 %v2302
        %v2304 = vpop.xlane.xlu0 %2303
        %v2305 = vsel %vm1415, %v2101, 0.0
        %2306 = vadd.xlane.f32.xlu0 %v2305
        %v2307 = vpop.xlane.xlu0 %2306
        %v2308 = vsel %vm1415, %v2102, 0.0
        %2309 = vadd.xlane.f32.xlu0 %v2308
        %v2310 = vpop.xlane.xlu0 %2309
        %v2311 = vsel %vm1415, %v2103, 0.0
        %2312 = vadd.xlane.f32.xlu0 %v2311
        %v2313 = vpop.xlane.xlu0 %2312
        %v2314 = vsel %vm1415, %v2104, 0.0
        %2315 = vadd.xlane.f32.xlu0 %v2314
        %v2316 = vpop.xlane.xlu0 %2315
        %v2317 = vsel %vm1415, %v2105, 0.0
        %2318 = vadd.xlane.f32.xlu0 %v2317
        %v2319 = vpop.xlane.xlu0 %2318
        %v2320 = vsel %vm1415, %v2106, 0.0
        %2321 = vadd.xlane.f32.xlu0 %v2320
        %v2322 = vpop.xlane.xlu0 %2321
        %v2323 = vsel %vm1415, %v2107, 0.0
        %2324 = vadd.xlane.f32.xlu0 %v2323
        %v2325 = vpop.xlane.xlu0 %2324
        %v2326 = vsel %vm1415, %v2108, 0.0
        %2327 = vadd.xlane.f32.xlu0 %v2326
        %v2328 = vpop.xlane.xlu0 %2327
        %v2329 = vsel %vm1415, %v2109, 0.0
        %2330 = vadd.xlane.f32.xlu0 %v2329
        %v2331 = vpop.xlane.xlu0 %2330
        %v2332 = vsel %vm1415, %v2110, 0.0
        %2333 = vadd.xlane.f32.xlu0 %v2332
        %v2334 = vpop.xlane.xlu0 %2333
        %v2335 = vsel %vm1415, %v2111, 0.0
        %2336 = vadd.xlane.f32.xlu0 %v2335
        %v2337 = vpop.xlane.xlu0 %2336
        %v2338 = vsel %vm1415, %v2112, 0.0
        %2339 = vadd.xlane.f32.xlu0 %v2338
        %v2340 = vpop.xlane.xlu0 %2339
        %v2341 = vsel %vm1415, %v2113, 0.0
        %2342 = vadd.xlane.f32.xlu0 %v2341
        %v2343 = vpop.xlane.xlu0 %2342
        %v2344 = vsel %vm1415, %v2114, 0.0
        %2345 = vadd.xlane.f32.xlu0 %v2344
        %v2346 = vpop.xlane.xlu0 %2345
        %v2347 = vsel %vm1415, %v2115, 0.0
        %2348 = vadd.xlane.f32.xlu0 %v2347
        %v2349 = vpop.xlane.xlu0 %2348
        %v2350 = vsel %vm1415, %v2116, 0.0
        %2351 = vadd.xlane.f32.xlu0 %v2350
        %v2352 = vpop.xlane.xlu0 %2351
        %v2353 = vsel %vm1415, %v2117, 0.0
        %2354 = vadd.xlane.f32.xlu0 %v2353
        %v2355 = vpop.xlane.xlu0 %2354
        %v2356 = vsel %vm1415, %v2118, 0.0
        %2357 = vadd.xlane.f32.xlu0 %v2356
        %v2358 = vpop.xlane.xlu0 %2357
        %v2359 = vsel %vm1415, %v2119, 0.0
        %2360 = vadd.xlane.f32.xlu0 %v2359
        %v2361 = vpop.xlane.xlu0 %2360
        %v2362 = vsel %vm1415, %v2120, 0.0
        %2363 = vadd.xlane.f32.xlu0 %v2362
        %v2364 = vpop.xlane.xlu0 %2363
        %v2365 = vsel %vm1415, %v2121, 0.0
        %2366 = vadd.xlane.f32.xlu0 %v2365
        %v2367 = vpop.xlane.xlu0 %2366
        %v2368 = vsel %vm1415, %v2122, 0.0
        %2369 = vadd.xlane.f32.xlu0 %v2368
        %v2370 = vpop.xlane.xlu0 %2369
        %v2371 = vsel %vm1415, %v2123, 0.0
        %2372 = vadd.xlane.f32.xlu0 %v2371
        %v2373 = vpop.xlane.xlu0 %2372
        %v2374 = vsel %vm1415, %v2124, 0.0
        %2375 = vadd.xlane.f32.xlu0 %v2374
        %v2376 = vpop.xlane.xlu0 %2375
        %v2377 = vsel %vm1415, %v2125, 0.0
        %2378 = vadd.xlane.f32.xlu0 %v2377
        %v2379 = vpop.xlane.xlu0 %2378
        %v2380 = vsel %vm1415, %v2126, 0.0
        %2381 = vadd.xlane.f32.xlu0 %v2380
        %v2382 = vpop.xlane.xlu0 %2381
        %v2383 = vsel %vm1415, %v2127, 0.0
        %2384 = vadd.xlane.f32.xlu0 %v2383
        %v2385 = vpop.xlane.xlu0 %2384
        %v2386 = vsel %vm1415, %v2128, 0.0
        %2387 = vadd.xlane.f32.xlu0 %v2386
        %v2388 = vpop.xlane.xlu0 %2387
        %v2389 = vsel %vm1415, %v2129, 0.0
        %2390 = vadd.xlane.f32.xlu0 %v2389
        %v2391 = vpop.xlane.xlu0 %2390
        %v2392 = vsel %vm1415, %v2130, 0.0
        %2393 = vadd.xlane.f32.xlu0 %v2392
        %v2394 = vpop.xlane.xlu0 %2393
        %v2395 = vsel %vm1415, %v2131, 0.0
        %2396 = vadd.xlane.f32.xlu0 %v2395
        %v2397 = vpop.xlane.xlu0 %2396
        %v2398 = vsel %vm1415, %v2132, 0.0
        %2399 = vadd.xlane.f32.xlu0 %v2398
        %v2400 = vpop.xlane.xlu0 %2399
        %v2401 = vsel %vm1415, %v2133, 0.0
        %2402 = vadd.xlane.f32.xlu0 %v2401
        %v2403 = vpop.xlane.xlu0 %2402
        %v2404 = vsel %vm1415, %v2134, 0.0
        %2405 = vadd.xlane.f32.xlu0 %v2404
        %v2406 = vpop.xlane.xlu0 %2405
        %v2407 = vsel %vm1415, %v2135, 0.0
        %2408 = vadd.xlane.f32.xlu0 %v2407
        %v2409 = vpop.xlane.xlu0 %2408
        %v2410 = vsel %vm1415, %v2136, 0.0
        %2411 = vadd.xlane.f32.xlu0 %v2410
        %v2412 = vpop.xlane.xlu0 %2411
        %v2413 = vsel %vm1415, %v2137, 0.0
        %2414 = vadd.xlane.f32.xlu0 %v2413
        %v2415 = vpop.xlane.xlu0 %2414
        %v2416 = vsel %vm1415, %v2138, 0.0
        %2417 = vadd.xlane.f32.xlu0 %v2416
        %v2418 = vpop.xlane.xlu0 %2417
        %v2419 = vsel %vm1415, %v2139, 0.0
        %2420 = vadd.xlane.f32.xlu0 %v2419
        %v2421 = vpop.xlane.xlu0 %2420
        %v2422 = vsel %vm1415, %v2140, 0.0
        %2423 = vadd.xlane.f32.xlu0 %v2422
        %v2424 = vpop.xlane.xlu0 %2423
        %v2425 = vsel %vm1415, %v2141, 0.0
        %2426 = vadd.xlane.f32.xlu0 %v2425
        %v2427 = vpop.xlane.xlu0 %2426
        %v2428 = vsel %vm1415, %v2142, 0.0
        %2429 = vadd.xlane.f32.xlu0 %v2428
        %v2430 = vpop.xlane.xlu0 %2429
        %v2431 = vsel %vm1415, %v2143, 0.0
        %2432 = vadd.xlane.f32.xlu0 %v2431
        %v2433 = vpop.xlane.xlu0 %2432
        %v2434 = vsel %vm1415, %v2144, 0.0
        %2435 = vadd.xlane.f32.xlu0 %v2434
        %v2436 = vpop.xlane.xlu0 %2435
        %v2437 = vsel %vm1415, %v2145, 0.0
        %2438 = vadd.xlane.f32.xlu0 %v2437
        %v2439 = vpop.xlane.xlu0 %2438
        %v2440 = vsel %vm1415, %v2146, 0.0
        %2441 = vadd.xlane.f32.xlu0 %v2440
        %v2442 = vpop.xlane.xlu0 %2441
        %v2443 = vsel %vm1415, %v2147, 0.0
        %2444 = vadd.xlane.f32.xlu0 %v2443
        %v2445 = vpop.xlane.xlu0 %2444
        %v2446 = vsel %vm1415, %v2148, 0.0
        %2447 = vadd.xlane.f32.xlu0 %v2446
        %v2448 = vpop.xlane.xlu0 %2447
        %v2449 = vsel %vm1415, %v2149, 0.0
        %2450 = vadd.xlane.f32.xlu0 %v2449
        %v2451 = vpop.xlane.xlu0 %2450
        %v2452 = vsel %vm1415, %v2150, 0.0
        %2453 = vadd.xlane.f32.xlu0 %v2452
        %v2454 = vpop.xlane.xlu0 %2453
        %v2455 = vsel %vm1415, %v2151, 0.0
        %2456 = vadd.xlane.f32.xlu0 %v2455
        %v2457 = vpop.xlane.xlu0 %2456
        %v2458 = vsel %vm1415, %v2152, 0.0
        %2459 = vadd.xlane.f32.xlu0 %v2458
        %v2460 = vpop.xlane.xlu0 %2459
        %v2461 = vsel %vm1415, %v2153, 0.0
        %2462 = vadd.xlane.f32.xlu0 %v2461
        %v2463 = vpop.xlane.xlu0 %2462
        %v2464 = vsel %vm1415, %v2154, 0.0
        %2465 = vadd.xlane.f32.xlu0 %v2464
        %v2466 = vpop.xlane.xlu0 %2465
        %v2467 = vsel %vm1415, %v2155, 0.0
        %2468 = vadd.xlane.f32.xlu0 %v2467
        %v2469 = vpop.xlane.xlu0 %2468
        %v2470 = vsel %vm1415, %v2156, 0.0
        %2471 = vadd.xlane.f32.xlu0 %v2470
        %v2472 = vpop.xlane.xlu0 %2471
        %v2473 = vsel %vm1415, %v2157, 0.0
        %2474 = vadd.xlane.f32.xlu0 %v2473
        %v2475 = vpop.xlane.xlu0 %2474
        %v2476 = vsel %vm1415, %v2158, 0.0
        %2477 = vadd.xlane.f32.xlu0 %v2476
        %v2478 = vpop.xlane.xlu0 %2477
        %v2479 = vsel %vm1415, %v2159, 0.0
        %2480 = vadd.xlane.f32.xlu0 %v2479
        %v2481 = vpop.xlane.xlu0 %2480
        %v2482 = vsel %vm1415, %v2160, 0.0
        %2483 = vadd.xlane.f32.xlu0 %v2482
        %v2484 = vpop.xlane.xlu0 %2483
        %v2485 = vsel %vm1415, %v2161, 0.0
        %2486 = vadd.xlane.f32.xlu0 %v2485
        %v2487 = vpop.xlane.xlu0 %2486
        %v2488 = vsel %vm1415, %v2162, 0.0
        %2489 = vadd.xlane.f32.xlu0 %v2488
        %v2490 = vpop.xlane.xlu0 %2489
        %v2491 = vsel %vm1415, %v2163, 0.0
        %2492 = vadd.xlane.f32.xlu0 %v2491
        %v2493 = vpop.xlane.xlu0 %2492
        %v2494 = vsel %vm1415, %v2164, 0.0
        %2495 = vadd.xlane.f32.xlu0 %v2494
        %v2496 = vpop.xlane.xlu0 %2495
        %v2497 = vsel %vm1415, %v2165, 0.0
        %2498 = vadd.xlane.f32.xlu0 %v2497
        %v2499 = vpop.xlane.xlu0 %2498
        %v2500 = vsel %vm1415, %v2166, 0.0
        %2501 = vadd.xlane.f32.xlu0 %v2500
        %v2502 = vpop.xlane.xlu0 %2501
        %v2503 = vsel %vm1415, %v2167, 0.0
        %2504 = vadd.xlane.f32.xlu0 %v2503
        %v2505 = vpop.xlane.xlu0 %2504
        %v2506 = vsel %vm1415, %v2168, 0.0
        %2507 = vadd.xlane.f32.xlu0 %v2506
        %v2508 = vpop.xlane.xlu0 %2507
        %v2509 = vsel %vm1415, %v2169, 0.0
        %2510 = vadd.xlane.f32.xlu0 %v2509
        %v2511 = vpop.xlane.xlu0 %2510
        %v2512 = vsel %vm1415, %v2170, 0.0
        %2513 = vadd.xlane.f32.xlu0 %v2512
        %v2514 = vpop.xlane.xlu0 %2513
        %v2515 = vsel %vm1415, %v2171, 0.0
        %2516 = vadd.xlane.f32.xlu0 %v2515
        %v2517 = vpop.xlane.xlu0 %2516
        %v2518 = vsel %vm1415, %v2172, 0.0
        %2519 = vadd.xlane.f32.xlu0 %v2518
        %v2520 = vpop.xlane.xlu0 %2519
        %v2521 = vsel %vm1415, %v2173, 0.0
        %2522 = vadd.xlane.f32.xlu0 %v2521
        %v2523 = vpop.xlane.xlu0 %2522
        %v2524 = vsel %vm1415, %v2174, 0.0
        %2525 = vadd.xlane.f32.xlu0 %v2524
        %v2526 = vpop.xlane.xlu0 %2525
        %v2527 = vsel %vm1415, %v2175, 0.0
        %2528 = vadd.xlane.f32.xlu0 %v2527
        %v2529 = vpop.xlane.xlu0 %2528
        %v2530 = vsel %vm1415, %v2176, 0.0
        %2531 = vadd.xlane.f32.xlu0 %v2530
        %v2532 = vpop.xlane.xlu0 %2531
        %v2533 = vsel %vm1415, %v2177, 0.0
        %2534 = vadd.xlane.f32.xlu0 %v2533
        %v2535 = vpop.xlane.xlu0 %2534
        %v2536 = vsel %vm1415, %v2178, 0.0
        %2537 = vadd.xlane.f32.xlu0 %v2536
        %v2538 = vpop.xlane.xlu0 %2537
        %v2539 = vsel %vm1415, %v2179, 0.0
        %2540 = vadd.xlane.f32.xlu0 %v2539
        %v2541 = vpop.xlane.xlu0 %2540
        %v2542 = vsel %vm1415, %v2180, 0.0
        %2543 = vadd.xlane.f32.xlu0 %v2542
        %v2544 = vpop.xlane.xlu0 %2543
        %v2545 = vsel %vm1415, %v2181, 0.0
        %2546 = vadd.xlane.f32.xlu0 %v2545
        %v2547 = vpop.xlane.xlu0 %2546
        %v2548 = vsel %vm1415, %v2182, 0.0
        %2549 = vadd.xlane.f32.xlu0 %v2548
        %v2550 = vpop.xlane.xlu0 %2549
        %v2551 = vsel %vm1415, %v2183, 0.0
        %2552 = vadd.xlane.f32.xlu0 %v2551
        %v2553 = vpop.xlane.xlu0 %2552
        %v2554 = vsel %vm1415, %v2184, 0.0
        %2555 = vadd.xlane.f32.xlu0 %v2554
        %v2556 = vpop.xlane.xlu0 %2555
        %v2557 = vsel %vm1415, %v2185, 0.0
        %2558 = vadd.xlane.f32.xlu0 %v2557
        %v2559 = vpop.xlane.xlu0 %2558
        %v2560 = vsel %vm1415, %v2186, 0.0
        %2561 = vadd.xlane.f32.xlu0 %v2560
        %v2562 = vpop.xlane.xlu0 %2561
        %v2563 = vsel %vm1415, %v2187, 0.0
        %2564 = vadd.xlane.f32.xlu0 %v2563
        %v2565 = vpop.xlane.xlu0 %2564
        %v2566 = vsel %vm1415, %v2188, 0.0
        %2567 = vadd.xlane.f32.xlu0 %v2566
        %v2568 = vpop.xlane.xlu0 %2567
        %v2569 = vsel %vm1415, %v2189, 0.0
        %2570 = vadd.xlane.f32.xlu0 %v2569
        %v2571 = vpop.xlane.xlu0 %2570
        %v2572 = vsel %vm1415, %v2190, 0.0
        %2573 = vadd.xlane.f32.xlu0 %v2572
        %v2574 = vpop.xlane.xlu0 %2573
        %v2575 = vmul.f32 %v2193, %v1806
        %v2576 = vmul.f32 %v2196, %v1806
        %v2577 = vmul.f32 %v2199, %v1806
        %v2578 = vmul.f32 %v2202, %v1806
        %v2579 = vmul.f32 %v2205, %v1806
        %v2580 = vmul.f32 %v2208, %v1806
        %v2581 = vmul.f32 %v2211, %v1806
        %v2582 = vmul.f32 %v2214, %v1806
        %v2583 = vmul.f32 %v2217, %v1806
        %v2584 = vmul.f32 %v2220, %v1806
        %v2585 = vmul.f32 %v2223, %v1806
        %v2586 = vmul.f32 %v2226, %v1806
        %v2587 = vmul.f32 %v2229, %v1806
        %v2588 = vmul.f32 %v2232, %v1806
        %v2589 = vmul.f32 %v2235, %v1806
        %v2590 = vmul.f32 %v2238, %v1806
        %v2591 = vmul.f32 %v2241, %v1806
        %v2592 = vmul.f32 %v2244, %v1806
        %v2593 = vmul.f32 %v2247, %v1806
        %v2594 = vmul.f32 %v2250, %v1806
        %v2595 = vmul.f32 %v2253, %v1806
        %v2596 = vmul.f32 %v2256, %v1806
        %v2597 = vmul.f32 %v2259, %v1806
        %v2598 = vmul.f32 %v2262, %v1806
        %v2599 = vmul.f32 %v2265, %v1806
        %v2600 = vmul.f32 %v2268, %v1806
        %v2601 = vmul.f32 %v2271, %v1806
        %v2602 = vmul.f32 %v2274, %v1806
        %v2603 = vmul.f32 %v2277, %v1806
        %v2604 = vmul.f32 %v2280, %v1806
        %v2605 = vmul.f32 %v2283, %v1806
        %v2606 = vmul.f32 %v2286, %v1806
        %v2607 = vmul.f32 %v2289, %v1806
        %v2608 = vmul.f32 %v2292, %v1806
        %v2609 = vmul.f32 %v2295, %v1806
        %v2610 = vmul.f32 %v2298, %v1806
        %v2611 = vmul.f32 %v2301, %v1806
        %v2612 = vmul.f32 %v2304, %v1806
        %v2613 = vmul.f32 %v2307, %v1806
        %v2614 = vmul.f32 %v2310, %v1806
        %v2615 = vmul.f32 %v2313, %v1806
        %v2616 = vmul.f32 %v2316, %v1806
        %v2617 = vmul.f32 %v2319, %v1806
        %v2618 = vmul.f32 %v2322, %v1806
        %v2619 = vmul.f32 %v2325, %v1806
        %v2620 = vmul.f32 %v2328, %v1806
        %v2621 = vmul.f32 %v2331, %v1806
        %v2622 = vmul.f32 %v2334, %v1806
        %v2623 = vmul.f32 %v2337, %v1806
        %v2624 = vmul.f32 %v2340, %v1806
        %v2625 = vmul.f32 %v2343, %v1806
        %v2626 = vmul.f32 %v2346, %v1806
        %v2627 = vmul.f32 %v2349, %v1806
        %v2628 = vmul.f32 %v2352, %v1806
        %v2629 = vmul.f32 %v2355, %v1806
        %v2630 = vmul.f32 %v2358, %v1806
        %v2631 = vmul.f32 %v2361, %v1806
        %v2632 = vmul.f32 %v2364, %v1806
        %v2633 = vmul.f32 %v2367, %v1806
        %v2634 = vmul.f32 %v2370, %v1806
        %v2635 = vmul.f32 %v2373, %v1806
        %v2636 = vmul.f32 %v2376, %v1806
        %v2637 = vmul.f32 %v2379, %v1806
        %v2638 = vmul.f32 %v2382, %v1806
        %v2639 = vmul.f32 %v2385, %v1806
        %v2640 = vmul.f32 %v2388, %v1806
        %v2641 = vmul.f32 %v2391, %v1806
        %v2642 = vmul.f32 %v2394, %v1806
        %v2643 = vmul.f32 %v2397, %v1806
        %v2644 = vmul.f32 %v2400, %v1806
        %v2645 = vmul.f32 %v2403, %v1806
        %v2646 = vmul.f32 %v2406, %v1806
        %v2647 = vmul.f32 %v2409, %v1806
        %v2648 = vmul.f32 %v2412, %v1806
        %v2649 = vmul.f32 %v2415, %v1806
        %v2650 = vmul.f32 %v2418, %v1806
        %v2651 = vmul.f32 %v2421, %v1806
        %v2652 = vmul.f32 %v2424, %v1806
        %v2653 = vmul.f32 %v2427, %v1806
        %v2654 = vmul.f32 %v2430, %v1806
        %v2655 = vmul.f32 %v2433, %v1806
        %v2656 = vmul.f32 %v2436, %v1806
        %v2657 = vmul.f32 %v2439, %v1806
        %v2658 = vmul.f32 %v2442, %v1806
        %v2659 = vmul.f32 %v2445, %v1806
        %v2660 = vmul.f32 %v2448, %v1806
        %v2661 = vmul.f32 %v2451, %v1806
        %v2662 = vmul.f32 %v2454, %v1806
        %v2663 = vmul.f32 %v2457, %v1806
        %v2664 = vmul.f32 %v2460, %v1806
        %v2665 = vmul.f32 %v2463, %v1806
        %v2666 = vmul.f32 %v2466, %v1806
        %v2667 = vmul.f32 %v2469, %v1806
        %v2668 = vmul.f32 %v2472, %v1806
        %v2669 = vmul.f32 %v2475, %v1806
        %v2670 = vmul.f32 %v2478, %v1806
        %v2671 = vmul.f32 %v2481, %v1806
        %v2672 = vmul.f32 %v2484, %v1806
        %v2673 = vmul.f32 %v2487, %v1806
        %v2674 = vmul.f32 %v2490, %v1806
        %v2675 = vmul.f32 %v2493, %v1806
        %v2676 = vmul.f32 %v2496, %v1806
        %v2677 = vmul.f32 %v2499, %v1806
        %v2678 = vmul.f32 %v2502, %v1806
        %v2679 = vmul.f32 %v2505, %v1806
        %v2680 = vmul.f32 %v2508, %v1806
        %v2681 = vmul.f32 %v2511, %v1806
        %v2682 = vmul.f32 %v2514, %v1806
        %v2683 = vmul.f32 %v2517, %v1806
        %v2684 = vmul.f32 %v2520, %v1806
        %v2685 = vmul.f32 %v2523, %v1806
        %v2686 = vmul.f32 %v2526, %v1806
        %v2687 = vmul.f32 %v2529, %v1806
        %v2688 = vmul.f32 %v2532, %v1806
        %v2689 = vmul.f32 %v2535, %v1806
        %v2690 = vmul.f32 %v2538, %v1806
        %v2691 = vmul.f32 %v2541, %v1806
        %v2692 = vmul.f32 %v2544, %v1806
        %v2693 = vmul.f32 %v2547, %v1806
        %v2694 = vmul.f32 %v2550, %v1806
        %v2695 = vmul.f32 %v2553, %v1806
        %v2696 = vmul.f32 %v2556, %v1806
        %v2697 = vmul.f32 %v2559, %v1806
        %v2698 = vmul.f32 %v2562, %v1806
        %v2699 = vmul.f32 %v2565, %v1806
        %v2700 = vmul.f32 %v2568, %v1806
        %v2701 = vmul.f32 %v2571, %v1806
        %v2702 = vmul.f32 %v2574, %v1806
        %v2703 = vadd.f32 %v2575, 1e-05
        %v2704 = vadd.f32 %v2576, 1e-05
        %v2705 = vadd.f32 %v2577, 1e-05
        %v2706 = vadd.f32 %v2578, 1e-05
        %v2707 = vadd.f32 %v2579, 1e-05
        %v2708 = vadd.f32 %v2580, 1e-05
        %v2709 = vadd.f32 %v2581, 1e-05
        %v2710 = vadd.f32 %v2582, 1e-05
        %v2711 = vadd.f32 %v2583, 1e-05
        %v2712 = vadd.f32 %v2584, 1e-05
        %v2713 = vadd.f32 %v2585, 1e-05
        %v2714 = vadd.f32 %v2586, 1e-05
        %v2715 = vadd.f32 %v2587, 1e-05
        %v2716 = vadd.f32 %v2588, 1e-05
        %v2717 = vadd.f32 %v2589, 1e-05
        %v2718 = vadd.f32 %v2590, 1e-05
        %v2719 = vadd.f32 %v2591, 1e-05
        %v2720 = vadd.f32 %v2592, 1e-05
        %v2721 = vadd.f32 %v2593, 1e-05
        %v2722 = vadd.f32 %v2594, 1e-05
        %v2723 = vadd.f32 %v2595, 1e-05
        %v2724 = vadd.f32 %v2596, 1e-05
        %v2725 = vadd.f32 %v2597, 1e-05
        %v2726 = vadd.f32 %v2598, 1e-05
        %v2727 = vadd.f32 %v2599, 1e-05
        %v2728 = vadd.f32 %v2600, 1e-05
        %v2729 = vadd.f32 %v2601, 1e-05
        %v2730 = vadd.f32 %v2602, 1e-05
        %v2731 = vadd.f32 %v2603, 1e-05
        %v2732 = vadd.f32 %v2604, 1e-05
        %v2733 = vadd.f32 %v2605, 1e-05
        %v2734 = vadd.f32 %v2606, 1e-05
        %v2735 = vadd.f32 %v2607, 1e-05
        %v2736 = vadd.f32 %v2608, 1e-05
        %v2737 = vadd.f32 %v2609, 1e-05
        %v2738 = vadd.f32 %v2610, 1e-05
        %v2739 = vadd.f32 %v2611, 1e-05
        %v2740 = vadd.f32 %v2612, 1e-05
        %v2741 = vadd.f32 %v2613, 1e-05
        %v2742 = vadd.f32 %v2614, 1e-05
        %v2743 = vadd.f32 %v2615, 1e-05
        %v2744 = vadd.f32 %v2616, 1e-05
        %v2745 = vadd.f32 %v2617, 1e-05
        %v2746 = vadd.f32 %v2618, 1e-05
        %v2747 = vadd.f32 %v2619, 1e-05
        %v2748 = vadd.f32 %v2620, 1e-05
        %v2749 = vadd.f32 %v2621, 1e-05
        %v2750 = vadd.f32 %v2622, 1e-05
        %v2751 = vadd.f32 %v2623, 1e-05
        %v2752 = vadd.f32 %v2624, 1e-05
        %v2753 = vadd.f32 %v2625, 1e-05
        %v2754 = vadd.f32 %v2626, 1e-05
        %v2755 = vadd.f32 %v2627, 1e-05
        %v2756 = vadd.f32 %v2628, 1e-05
        %v2757 = vadd.f32 %v2629, 1e-05
        %v2758 = vadd.f32 %v2630, 1e-05
        %v2759 = vadd.f32 %v2631, 1e-05
        %v2760 = vadd.f32 %v2632, 1e-05
        %v2761 = vadd.f32 %v2633, 1e-05
        %v2762 = vadd.f32 %v2634, 1e-05
        %v2763 = vadd.f32 %v2635, 1e-05
        %v2764 = vadd.f32 %v2636, 1e-05
        %v2765 = vadd.f32 %v2637, 1e-05
        %v2766 = vadd.f32 %v2638, 1e-05
        %v2767 = vadd.f32 %v2639, 1e-05
        %v2768 = vadd.f32 %v2640, 1e-05
        %v2769 = vadd.f32 %v2641, 1e-05
        %v2770 = vadd.f32 %v2642, 1e-05
        %v2771 = vadd.f32 %v2643, 1e-05
        %v2772 = vadd.f32 %v2644, 1e-05
        %v2773 = vadd.f32 %v2645, 1e-05
        %v2774 = vadd.f32 %v2646, 1e-05
        %v2775 = vadd.f32 %v2647, 1e-05
        %v2776 = vadd.f32 %v2648, 1e-05
        %v2777 = vadd.f32 %v2649, 1e-05
        %v2778 = vadd.f32 %v2650, 1e-05
        %v2779 = vadd.f32 %v2651, 1e-05
        %v2780 = vadd.f32 %v2652, 1e-05
        %v2781 = vadd.f32 %v2653, 1e-05
        %v2782 = vadd.f32 %v2654, 1e-05
        %v2783 = vadd.f32 %v2655, 1e-05
        %v2784 = vadd.f32 %v2656, 1e-05
        %v2785 = vadd.f32 %v2657, 1e-05
        %v2786 = vadd.f32 %v2658, 1e-05
        %v2787 = vadd.f32 %v2659, 1e-05
        %v2788 = vadd.f32 %v2660, 1e-05
        %v2789 = vadd.f32 %v2661, 1e-05
        %v2790 = vadd.f32 %v2662, 1e-05
        %v2791 = vadd.f32 %v2663, 1e-05
        %v2792 = vadd.f32 %v2664, 1e-05
        %v2793 = vadd.f32 %v2665, 1e-05
        %v2794 = vadd.f32 %v2666, 1e-05
        %v2795 = vadd.f32 %v2667, 1e-05
        %v2796 = vadd.f32 %v2668, 1e-05
        %v2797 = vadd.f32 %v2669, 1e-05
        %v2798 = vadd.f32 %v2670, 1e-05
        %v2799 = vadd.f32 %v2671, 1e-05
        %v2800 = vadd.f32 %v2672, 1e-05
        %v2801 = vadd.f32 %v2673, 1e-05
        %v2802 = vadd.f32 %v2674, 1e-05
        %v2803 = vadd.f32 %v2675, 1e-05
        %v2804 = vadd.f32 %v2676, 1e-05
        %v2805 = vadd.f32 %v2677, 1e-05
        %v2806 = vadd.f32 %v2678, 1e-05
        %v2807 = vadd.f32 %v2679, 1e-05
        %v2808 = vadd.f32 %v2680, 1e-05
        %v2809 = vadd.f32 %v2681, 1e-05
        %v2810 = vadd.f32 %v2682, 1e-05
        %v2811 = vadd.f32 %v2683, 1e-05
        %v2812 = vadd.f32 %v2684, 1e-05
        %v2813 = vadd.f32 %v2685, 1e-05
        %v2814 = vadd.f32 %v2686, 1e-05
        %v2815 = vadd.f32 %v2687, 1e-05
        %v2816 = vadd.f32 %v2688, 1e-05
        %v2817 = vadd.f32 %v2689, 1e-05
        %v2818 = vadd.f32 %v2690, 1e-05
        %v2819 = vadd.f32 %v2691, 1e-05
        %v2820 = vadd.f32 %v2692, 1e-05
        %v2821 = vadd.f32 %v2693, 1e-05
        %v2822 = vadd.f32 %v2694, 1e-05
        %v2823 = vadd.f32 %v2695, 1e-05
        %v2824 = vadd.f32 %v2696, 1e-05
        %v2825 = vadd.f32 %v2697, 1e-05
        %v2826 = vadd.f32 %v2698, 1e-05
        %v2827 = vadd.f32 %v2699, 1e-05
        %v2828 = vadd.f32 %v2700, 1e-05
        %v2829 = vadd.f32 %v2701, 1e-05
        %v2830 = vadd.f32 %v2702, 1e-05
        %v2831 = vrsqrt.pop %v2703
        %v2832 = vmul.f32 %v2831, %v2703
        %v2833 = vmul.f32 %v2832, %v2831
        %v2834 = vmul.f32 0.5, %v2833
        %v2835 = vsub.f32 1.5, %v2834
        %v2836 = vmul.f32 %v2831, %v2835
        %vm2837 = vweird.f32 %v2703
        %vm2838 = vweird.f32 %v2831
        %vm2839 = vmor %vm2837, %vm2838
        %v2840 = vsel %vm2839, %v2831, %v2836
        %v2841 = vrsqrt.pop %v2704
        %v2842 = vmul.f32 %v2841, %v2704
        %v2843 = vmul.f32 %v2842, %v2841
        %v2844 = vmul.f32 0.5, %v2843
        %v2845 = vsub.f32 1.5, %v2844
        %v2846 = vmul.f32 %v2841, %v2845
        %vm2847 = vweird.f32 %v2704
        %vm2848 = vweird.f32 %v2841
        %vm2849 = vmor %vm2847, %vm2848
        %v2850 = vsel %vm2849, %v2841, %v2846
        %v2851 = vrsqrt.pop %v2705
        %v2852 = vmul.f32 %v2851, %v2705
        %v2853 = vmul.f32 %v2852, %v2851
        %v2854 = vmul.f32 0.5, %v2853
        %v2855 = vsub.f32 1.5, %v2854
        %v2856 = vmul.f32 %v2851, %v2855
        %vm2857 = vweird.f32 %v2705
        %vm2858 = vweird.f32 %v2851
        %vm2859 = vmor %vm2857, %vm2858
        %v2860 = vsel %vm2859, %v2851, %v2856
        %v2861 = vrsqrt.pop %v2706
        %v2862 = vmul.f32 %v2861, %v2706
        %v2863 = vmul.f32 %v2862, %v2861
        %v2864 = vmul.f32 0.5, %v2863
        %v2865 = vsub.f32 1.5, %v2864
        %v2866 = vmul.f32 %v2861, %v2865
        %vm2867 = vweird.f32 %v2706
        %vm2868 = vweird.f32 %v2861
        %vm2869 = vmor %vm2867, %vm2868
        %v2870 = vsel %vm2869, %v2861, %v2866
        %v2871 = vrsqrt.pop %v2707
        %v2872 = vmul.f32 %v2871, %v2707
        %v2873 = vmul.f32 %v2872, %v2871
        %v2874 = vmul.f32 0.5, %v2873
        %v2875 = vsub.f32 1.5, %v2874
        %v2876 = vmul.f32 %v2871, %v2875
        %vm2877 = vweird.f32 %v2707
        %vm2878 = vweird.f32 %v2871
        %vm2879 = vmor %vm2877, %vm2878
        %v2880 = vsel %vm2879, %v2871, %v2876
        %v2881 = vrsqrt.pop %v2708
        %v2882 = vmul.f32 %v2881, %v2708
        %v2883 = vmul.f32 %v2882, %v2881
        %v2884 = vmul.f32 0.5, %v2883
        %v2885 = vsub.f32 1.5, %v2884
        %v2886 = vmul.f32 %v2881, %v2885
        %vm2887 = vweird.f32 %v2708
        %vm2888 = vweird.f32 %v2881
        %vm2889 = vmor %vm2887, %vm2888
        %v2890 = vsel %vm2889, %v2881, %v2886
        %v2891 = vrsqrt.pop %v2709
        %v2892 = vmul.f32 %v2891, %v2709
        %v2893 = vmul.f32 %v2892, %v2891
        %v2894 = vmul.f32 0.5, %v2893
        %v2895 = vsub.f32 1.5, %v2894
        %v2896 = vmul.f32 %v2891, %v2895
        %vm2897 = vweird.f32 %v2709
        %vm2898 = vweird.f32 %v2891
        %vm2899 = vmor %vm2897, %vm2898
        %v2900 = vsel %vm2899, %v2891, %v2896
        %v2901 = vrsqrt.pop %v2710
        %v2902 = vmul.f32 %v2901, %v2710
        %v2903 = vmul.f32 %v2902, %v2901
        %v2904 = vmul.f32 0.5, %v2903
        %v2905 = vsub.f32 1.5, %v2904
        %v2906 = vmul.f32 %v2901, %v2905
        %vm2907 = vweird.f32 %v2710
        %vm2908 = vweird.f32 %v2901
        %vm2909 = vmor %vm2907, %vm2908
        %v2910 = vsel %vm2909, %v2901, %v2906
        %v2911 = vrsqrt.pop %v2711
        %v2912 = vmul.f32 %v2911, %v2711
        %v2913 = vmul.f32 %v2912, %v2911
        %v2914 = vmul.f32 0.5, %v2913
        %v2915 = vsub.f32 1.5, %v2914
        %v2916 = vmul.f32 %v2911, %v2915
        %vm2917 = vweird.f32 %v2711
        %vm2918 = vweird.f32 %v2911
        %vm2919 = vmor %vm2917, %vm2918
        %v2920 = vsel %vm2919, %v2911, %v2916
        %v2921 = vrsqrt.pop %v2712
        %v2922 = vmul.f32 %v2921, %v2712
        %v2923 = vmul.f32 %v2922, %v2921
        %v2924 = vmul.f32 0.5, %v2923
        %v2925 = vsub.f32 1.5, %v2924
        %v2926 = vmul.f32 %v2921, %v2925
        %vm2927 = vweird.f32 %v2712
        %vm2928 = vweird.f32 %v2921
        %vm2929 = vmor %vm2927, %vm2928
        %v2930 = vsel %vm2929, %v2921, %v2926
        %v2931 = vrsqrt.pop %v2713
        %v2932 = vmul.f32 %v2931, %v2713
        %v2933 = vmul.f32 %v2932, %v2931
        %v2934 = vmul.f32 0.5, %v2933
        %v2935 = vsub.f32 1.5, %v2934
        %v2936 = vmul.f32 %v2931, %v2935
        %vm2937 = vweird.f32 %v2713
        %vm2938 = vweird.f32 %v2931
        %vm2939 = vmor %vm2937, %vm2938
        %v2940 = vsel %vm2939, %v2931, %v2936
        %v2941 = vrsqrt.pop %v2714
        %v2942 = vmul.f32 %v2941, %v2714
        %v2943 = vmul.f32 %v2942, %v2941
        %v2944 = vmul.f32 0.5, %v2943
        %v2945 = vsub.f32 1.5, %v2944
        %v2946 = vmul.f32 %v2941, %v2945
        %vm2947 = vweird.f32 %v2714
        %vm2948 = vweird.f32 %v2941
        %vm2949 = vmor %vm2947, %vm2948
        %v2950 = vsel %vm2949, %v2941, %v2946
        %v2951 = vrsqrt.pop %v2715
        %v2952 = vmul.f32 %v2951, %v2715
        %v2953 = vmul.f32 %v2952, %v2951
        %v2954 = vmul.f32 0.5, %v2953
        %v2955 = vsub.f32 1.5, %v2954
        %v2956 = vmul.f32 %v2951, %v2955
        %vm2957 = vweird.f32 %v2715
        %vm2958 = vweird.f32 %v2951
        %vm2959 = vmor %vm2957, %vm2958
        %v2960 = vsel %vm2959, %v2951, %v2956
        %v2961 = vrsqrt.pop %v2716
        %v2962 = vmul.f32 %v2961, %v2716
        %v2963 = vmul.f32 %v2962, %v2961
        %v2964 = vmul.f32 0.5, %v2963
        %v2965 = vsub.f32 1.5, %v2964
        %v2966 = vmul.f32 %v2961, %v2965
        %vm2967 = vweird.f32 %v2716
        %vm2968 = vweird.f32 %v2961
        %vm2969 = vmor %vm2967, %vm2968
        %v2970 = vsel %vm2969, %v2961, %v2966
        %v2971 = vrsqrt.pop %v2717
        %v2972 = vmul.f32 %v2971, %v2717
        %v2973 = vmul.f32 %v2972, %v2971
        %v2974 = vmul.f32 0.5, %v2973
        %v2975 = vsub.f32 1.5, %v2974
        %v2976 = vmul.f32 %v2971, %v2975
        %vm2977 = vweird.f32 %v2717
        %vm2978 = vweird.f32 %v2971
        %vm2979 = vmor %vm2977, %vm2978
        %v2980 = vsel %vm2979, %v2971, %v2976
        %v2981 = vrsqrt.pop %v2718
        %v2982 = vmul.f32 %v2981, %v2718
        %v2983 = vmul.f32 %v2982, %v2981
        %v2984 = vmul.f32 0.5, %v2983
        %v2985 = vsub.f32 1.5, %v2984
        %v2986 = vmul.f32 %v2981, %v2985
        %vm2987 = vweird.f32 %v2718
        %vm2988 = vweird.f32 %v2981
        %vm2989 = vmor %vm2987, %vm2988
        %v2990 = vsel %vm2989, %v2981, %v2986
        %v2991 = vrsqrt.pop %v2719
        %v2992 = vmul.f32 %v2991, %v2719
        %v2993 = vmul.f32 %v2992, %v2991
        %v2994 = vmul.f32 0.5, %v2993
        %v2995 = vsub.f32 1.5, %v2994
        %v2996 = vmul.f32 %v2991, %v2995
        %vm2997 = vweird.f32 %v2719
        %vm2998 = vweird.f32 %v2991
        %vm2999 = vmor %vm2997, %vm2998
        %v3000 = vsel %vm2999, %v2991, %v2996
        %v3001 = vrsqrt.pop %v2720
        %v3002 = vmul.f32 %v3001, %v2720
        %v3003 = vmul.f32 %v3002, %v3001
        %v3004 = vmul.f32 0.5, %v3003
        %v3005 = vsub.f32 1.5, %v3004
        %v3006 = vmul.f32 %v3001, %v3005
        %vm3007 = vweird.f32 %v2720
        %vm3008 = vweird.f32 %v3001
        %vm3009 = vmor %vm3007, %vm3008
        %v3010 = vsel %vm3009, %v3001, %v3006
        %v3011 = vrsqrt.pop %v2721
        %v3012 = vmul.f32 %v3011, %v2721
        %v3013 = vmul.f32 %v3012, %v3011
        %v3014 = vmul.f32 0.5, %v3013
        %v3015 = vsub.f32 1.5, %v3014
        %v3016 = vmul.f32 %v3011, %v3015
        %vm3017 = vweird.f32 %v2721
        %vm3018 = vweird.f32 %v3011
        %vm3019 = vmor %vm3017, %vm3018
        %v3020 = vsel %vm3019, %v3011, %v3016
        %v3021 = vrsqrt.pop %v2722
        %v3022 = vmul.f32 %v3021, %v2722
        %v3023 = vmul.f32 %v3022, %v3021
        %v3024 = vmul.f32 0.5, %v3023
        %v3025 = vsub.f32 1.5, %v3024
        %v3026 = vmul.f32 %v3021, %v3025
        %vm3027 = vweird.f32 %v2722
        %vm3028 = vweird.f32 %v3021
        %vm3029 = vmor %vm3027, %vm3028
        %v3030 = vsel %vm3029, %v3021, %v3026
        %v3031 = vrsqrt.pop %v2723
        %v3032 = vmul.f32 %v3031, %v2723
        %v3033 = vmul.f32 %v3032, %v3031
        %v3034 = vmul.f32 0.5, %v3033
        %v3035 = vsub.f32 1.5, %v3034
        %v3036 = vmul.f32 %v3031, %v3035
        %vm3037 = vweird.f32 %v2723
        %vm3038 = vweird.f32 %v3031
        %vm3039 = vmor %vm3037, %vm3038
        %v3040 = vsel %vm3039, %v3031, %v3036
        %v3041 = vrsqrt.pop %v2724
        %v3042 = vmul.f32 %v3041, %v2724
        %v3043 = vmul.f32 %v3042, %v3041
        %v3044 = vmul.f32 0.5, %v3043
        %v3045 = vsub.f32 1.5, %v3044
        %v3046 = vmul.f32 %v3041, %v3045
        %vm3047 = vweird.f32 %v2724
        %vm3048 = vweird.f32 %v3041
        %vm3049 = vmor %vm3047, %vm3048
        %v3050 = vsel %vm3049, %v3041, %v3046
        %v3051 = vrsqrt.pop %v2725
        %v3052 = vmul.f32 %v3051, %v2725
        %v3053 = vmul.f32 %v3052, %v3051
        %v3054 = vmul.f32 0.5, %v3053
        %v3055 = vsub.f32 1.5, %v3054
        %v3056 = vmul.f32 %v3051, %v3055
        %vm3057 = vweird.f32 %v2725
        %vm3058 = vweird.f32 %v3051
        %vm3059 = vmor %vm3057, %vm3058
        %v3060 = vsel %vm3059, %v3051, %v3056
        %v3061 = vrsqrt.pop %v2726
        %v3062 = vmul.f32 %v3061, %v2726
        %v3063 = vmul.f32 %v3062, %v3061
        %v3064 = vmul.f32 0.5, %v3063
        %v3065 = vsub.f32 1.5, %v3064
        %v3066 = vmul.f32 %v3061, %v3065
        %vm3067 = vweird.f32 %v2726
        %vm3068 = vweird.f32 %v3061
        %vm3069 = vmor %vm3067, %vm3068
        %v3070 = vsel %vm3069, %v3061, %v3066
        %v3071 = vrsqrt.pop %v2727
        %v3072 = vmul.f32 %v3071, %v2727
        %v3073 = vmul.f32 %v3072, %v3071
        %v3074 = vmul.f32 0.5, %v3073
        %v3075 = vsub.f32 1.5, %v3074
        %v3076 = vmul.f32 %v3071, %v3075
        %vm3077 = vweird.f32 %v2727
        %vm3078 = vweird.f32 %v3071
        %vm3079 = vmor %vm3077, %vm3078
        %v3080 = vsel %vm3079, %v3071, %v3076
        %v3081 = vrsqrt.pop %v2728
        %v3082 = vmul.f32 %v3081, %v2728
        %v3083 = vmul.f32 %v3082, %v3081
        %v3084 = vmul.f32 0.5, %v3083
        %v3085 = vsub.f32 1.5, %v3084
        %v3086 = vmul.f32 %v3081, %v3085
        %vm3087 = vweird.f32 %v2728
        %vm3088 = vweird.f32 %v3081
        %vm3089 = vmor %vm3087, %vm3088
        %v3090 = vsel %vm3089, %v3081, %v3086
        %v3091 = vrsqrt.pop %v2729
        %v3092 = vmul.f32 %v3091, %v2729
        %v3093 = vmul.f32 %v3092, %v3091
        %v3094 = vmul.f32 0.5, %v3093
        %v3095 = vsub.f32 1.5, %v3094
        %v3096 = vmul.f32 %v3091, %v3095
        %vm3097 = vweird.f32 %v2729
        %vm3098 = vweird.f32 %v3091
        %vm3099 = vmor %vm3097, %vm3098
        %v3100 = vsel %vm3099, %v3091, %v3096
        %v3101 = vrsqrt.pop %v2730
        %v3102 = vmul.f32 %v3101, %v2730
        %v3103 = vmul.f32 %v3102, %v3101
        %v3104 = vmul.f32 0.5, %v3103
        %v3105 = vsub.f32 1.5, %v3104
        %v3106 = vmul.f32 %v3101, %v3105
        %vm3107 = vweird.f32 %v2730
        %vm3108 = vweird.f32 %v3101
        %vm3109 = vmor %vm3107, %vm3108
        %v3110 = vsel %vm3109, %v3101, %v3106
        %v3111 = vrsqrt.pop %v2731
        %v3112 = vmul.f32 %v3111, %v2731
        %v3113 = vmul.f32 %v3112, %v3111
        %v3114 = vmul.f32 0.5, %v3113
        %v3115 = vsub.f32 1.5, %v3114
        %v3116 = vmul.f32 %v3111, %v3115
        %vm3117 = vweird.f32 %v2731
        %vm3118 = vweird.f32 %v3111
        %vm3119 = vmor %vm3117, %vm3118
        %v3120 = vsel %vm3119, %v3111, %v3116
        %v3121 = vrsqrt.pop %v2732
        %v3122 = vmul.f32 %v3121, %v2732
        %v3123 = vmul.f32 %v3122, %v3121
        %v3124 = vmul.f32 0.5, %v3123
        %v3125 = vsub.f32 1.5, %v3124
        %v3126 = vmul.f32 %v3121, %v3125
        %vm3127 = vweird.f32 %v2732
        %vm3128 = vweird.f32 %v3121
        %vm3129 = vmor %vm3127, %vm3128
        %v3130 = vsel %vm3129, %v3121, %v3126
        %v3131 = vrsqrt.pop %v2733
        %v3132 = vmul.f32 %v3131, %v2733
        %v3133 = vmul.f32 %v3132, %v3131
        %v3134 = vmul.f32 0.5, %v3133
        %v3135 = vsub.f32 1.5, %v3134
        %v3136 = vmul.f32 %v3131, %v3135
        %vm3137 = vweird.f32 %v2733
        %vm3138 = vweird.f32 %v3131
        %vm3139 = vmor %vm3137, %vm3138
        %v3140 = vsel %vm3139, %v3131, %v3136
        %v3141 = vrsqrt.pop %v2734
        %v3142 = vmul.f32 %v3141, %v2734
        %v3143 = vmul.f32 %v3142, %v3141
        %v3144 = vmul.f32 0.5, %v3143
        %v3145 = vsub.f32 1.5, %v3144
        %v3146 = vmul.f32 %v3141, %v3145
        %vm3147 = vweird.f32 %v2734
        %vm3148 = vweird.f32 %v3141
        %vm3149 = vmor %vm3147, %vm3148
        %v3150 = vsel %vm3149, %v3141, %v3146
        %v3151 = vrsqrt.pop %v2735
        %v3152 = vmul.f32 %v3151, %v2735
        %v3153 = vmul.f32 %v3152, %v3151
        %v3154 = vmul.f32 0.5, %v3153
        %v3155 = vsub.f32 1.5, %v3154
        %v3156 = vmul.f32 %v3151, %v3155
        %vm3157 = vweird.f32 %v2735
        %vm3158 = vweird.f32 %v3151
        %vm3159 = vmor %vm3157, %vm3158
        %v3160 = vsel %vm3159, %v3151, %v3156
        %v3161 = vrsqrt.pop %v2736
        %v3162 = vmul.f32 %v3161, %v2736
        %v3163 = vmul.f32 %v3162, %v3161
        %v3164 = vmul.f32 0.5, %v3163
        %v3165 = vsub.f32 1.5, %v3164
        %v3166 = vmul.f32 %v3161, %v3165
        %vm3167 = vweird.f32 %v2736
        %vm3168 = vweird.f32 %v3161
        %vm3169 = vmor %vm3167, %vm3168
        %v3170 = vsel %vm3169, %v3161, %v3166
        %v3171 = vrsqrt.pop %v2737
        %v3172 = vmul.f32 %v3171, %v2737
        %v3173 = vmul.f32 %v3172, %v3171
        %v3174 = vmul.f32 0.5, %v3173
        %v3175 = vsub.f32 1.5, %v3174
        %v3176 = vmul.f32 %v3171, %v3175
        %vm3177 = vweird.f32 %v2737
        %vm3178 = vweird.f32 %v3171
        %vm3179 = vmor %vm3177, %vm3178
        %v3180 = vsel %vm3179, %v3171, %v3176
        %v3181 = vrsqrt.pop %v2738
        %v3182 = vmul.f32 %v3181, %v2738
        %v3183 = vmul.f32 %v3182, %v3181
        %v3184 = vmul.f32 0.5, %v3183
        %v3185 = vsub.f32 1.5, %v3184
        %v3186 = vmul.f32 %v3181, %v3185
        %vm3187 = vweird.f32 %v2738
        %vm3188 = vweird.f32 %v3181
        %vm3189 = vmor %vm3187, %vm3188
        %v3190 = vsel %vm3189, %v3181, %v3186
        %v3191 = vrsqrt.pop %v2739
        %v3192 = vmul.f32 %v3191, %v2739
        %v3193 = vmul.f32 %v3192, %v3191
        %v3194 = vmul.f32 0.5, %v3193
        %v3195 = vsub.f32 1.5, %v3194
        %v3196 = vmul.f32 %v3191, %v3195
        %vm3197 = vweird.f32 %v2739
        %vm3198 = vweird.f32 %v3191
        %vm3199 = vmor %vm3197, %vm3198
        %v3200 = vsel %vm3199, %v3191, %v3196
        %v3201 = vrsqrt.pop %v2740
        %v3202 = vmul.f32 %v3201, %v2740
        %v3203 = vmul.f32 %v3202, %v3201
        %v3204 = vmul.f32 0.5, %v3203
        %v3205 = vsub.f32 1.5, %v3204
        %v3206 = vmul.f32 %v3201, %v3205
        %vm3207 = vweird.f32 %v2740
        %vm3208 = vweird.f32 %v3201
        %vm3209 = vmor %vm3207, %vm3208
        %v3210 = vsel %vm3209, %v3201, %v3206
        %v3211 = vrsqrt.pop %v2741
        %v3212 = vmul.f32 %v3211, %v2741
        %v3213 = vmul.f32 %v3212, %v3211
        %v3214 = vmul.f32 0.5, %v3213
        %v3215 = vsub.f32 1.5, %v3214
        %v3216 = vmul.f32 %v3211, %v3215
        %vm3217 = vweird.f32 %v2741
        %vm3218 = vweird.f32 %v3211
        %vm3219 = vmor %vm3217, %vm3218
        %v3220 = vsel %vm3219, %v3211, %v3216
        %v3221 = vrsqrt.pop %v2742
        %v3222 = vmul.f32 %v3221, %v2742
        %v3223 = vmul.f32 %v3222, %v3221
        %v3224 = vmul.f32 0.5, %v3223
        %v3225 = vsub.f32 1.5, %v3224
        %v3226 = vmul.f32 %v3221, %v3225
        %vm3227 = vweird.f32 %v2742
        %vm3228 = vweird.f32 %v3221
        %vm3229 = vmor %vm3227, %vm3228
        %v3230 = vsel %vm3229, %v3221, %v3226
        %v3231 = vrsqrt.pop %v2743
        %v3232 = vmul.f32 %v3231, %v2743
        %v3233 = vmul.f32 %v3232, %v3231
        %v3234 = vmul.f32 0.5, %v3233
        %v3235 = vsub.f32 1.5, %v3234
        %v3236 = vmul.f32 %v3231, %v3235
        %vm3237 = vweird.f32 %v2743
        %vm3238 = vweird.f32 %v3231
        %vm3239 = vmor %vm3237, %vm3238
        %v3240 = vsel %vm3239, %v3231, %v3236
        %v3241 = vrsqrt.pop %v2744
        %v3242 = vmul.f32 %v3241, %v2744
        %v3243 = vmul.f32 %v3242, %v3241
        %v3244 = vmul.f32 0.5, %v3243
        %v3245 = vsub.f32 1.5, %v3244
        %v3246 = vmul.f32 %v3241, %v3245
        %vm3247 = vweird.f32 %v2744
        %vm3248 = vweird.f32 %v3241
        %vm3249 = vmor %vm3247, %vm3248
        %v3250 = vsel %vm3249, %v3241, %v3246
        %v3251 = vrsqrt.pop %v2745
        %v3252 = vmul.f32 %v3251, %v2745
        %v3253 = vmul.f32 %v3252, %v3251
        %v3254 = vmul.f32 0.5, %v3253
        %v3255 = vsub.f32 1.5, %v3254
        %v3256 = vmul.f32 %v3251, %v3255
        %vm3257 = vweird.f32 %v2745
        %vm3258 = vweird.f32 %v3251
        %vm3259 = vmor %vm3257, %vm3258
        %v3260 = vsel %vm3259, %v3251, %v3256
        %v3261 = vrsqrt.pop %v2746
        %v3262 = vmul.f32 %v3261, %v2746
        %v3263 = vmul.f32 %v3262, %v3261
        %v3264 = vmul.f32 0.5, %v3263
        %v3265 = vsub.f32 1.5, %v3264
        %v3266 = vmul.f32 %v3261, %v3265
        %vm3267 = vweird.f32 %v2746
        %vm3268 = vweird.f32 %v3261
        %vm3269 = vmor %vm3267, %vm3268
        %v3270 = vsel %vm3269, %v3261, %v3266
        %v3271 = vrsqrt.pop %v2747
        %v3272 = vmul.f32 %v3271, %v2747
        %v3273 = vmul.f32 %v3272, %v3271
        %v3274 = vmul.f32 0.5, %v3273
        %v3275 = vsub.f32 1.5, %v3274
        %v3276 = vmul.f32 %v3271, %v3275
        %vm3277 = vweird.f32 %v2747
        %vm3278 = vweird.f32 %v3271
        %vm3279 = vmor %vm3277, %vm3278
        %v3280 = vsel %vm3279, %v3271, %v3276
        %v3281 = vrsqrt.pop %v2748
        %v3282 = vmul.f32 %v3281, %v2748
        %v3283 = vmul.f32 %v3282, %v3281
        %v3284 = vmul.f32 0.5, %v3283
        %v3285 = vsub.f32 1.5, %v3284
        %v3286 = vmul.f32 %v3281, %v3285
        %vm3287 = vweird.f32 %v2748
        %vm3288 = vweird.f32 %v3281
        %vm3289 = vmor %vm3287, %vm3288
        %v3290 = vsel %vm3289, %v3281, %v3286
        %v3291 = vrsqrt.pop %v2749
        %v3292 = vmul.f32 %v3291, %v2749
        %v3293 = vmul.f32 %v3292, %v3291
        %v3294 = vmul.f32 0.5, %v3293
        %v3295 = vsub.f32 1.5, %v3294
        %v3296 = vmul.f32 %v3291, %v3295
        %vm3297 = vweird.f32 %v2749
        %vm3298 = vweird.f32 %v3291
        %vm3299 = vmor %vm3297, %vm3298
        %v3300 = vsel %vm3299, %v3291, %v3296
        %v3301 = vrsqrt.pop %v2750
        %v3302 = vmul.f32 %v3301, %v2750
        %v3303 = vmul.f32 %v3302, %v3301
        %v3304 = vmul.f32 0.5, %v3303
        %v3305 = vsub.f32 1.5, %v3304
        %v3306 = vmul.f32 %v3301, %v3305
        %vm3307 = vweird.f32 %v2750
        %vm3308 = vweird.f32 %v3301
        %vm3309 = vmor %vm3307, %vm3308
        %v3310 = vsel %vm3309, %v3301, %v3306
        %v3311 = vrsqrt.pop %v2751
        %v3312 = vmul.f32 %v3311, %v2751
        %v3313 = vmul.f32 %v3312, %v3311
        %v3314 = vmul.f32 0.5, %v3313
        %v3315 = vsub.f32 1.5, %v3314
        %v3316 = vmul.f32 %v3311, %v3315
        %vm3317 = vweird.f32 %v2751
        %vm3318 = vweird.f32 %v3311
        %vm3319 = vmor %vm3317, %vm3318
        %v3320 = vsel %vm3319, %v3311, %v3316
        %v3321 = vrsqrt.pop %v2752
        %v3322 = vmul.f32 %v3321, %v2752
        %v3323 = vmul.f32 %v3322, %v3321
        %v3324 = vmul.f32 0.5, %v3323
        %v3325 = vsub.f32 1.5, %v3324
        %v3326 = vmul.f32 %v3321, %v3325
        %vm3327 = vweird.f32 %v2752
        %vm3328 = vweird.f32 %v3321
        %vm3329 = vmor %vm3327, %vm3328
        %v3330 = vsel %vm3329, %v3321, %v3326
        %v3331 = vrsqrt.pop %v2753
        %v3332 = vmul.f32 %v3331, %v2753
        %v3333 = vmul.f32 %v3332, %v3331
        %v3334 = vmul.f32 0.5, %v3333
        %v3335 = vsub.f32 1.5, %v3334
        %v3336 = vmul.f32 %v3331, %v3335
        %vm3337 = vweird.f32 %v2753
        %vm3338 = vweird.f32 %v3331
        %vm3339 = vmor %vm3337, %vm3338
        %v3340 = vsel %vm3339, %v3331, %v3336
        %v3341 = vrsqrt.pop %v2754
        %v3342 = vmul.f32 %v3341, %v2754
        %v3343 = vmul.f32 %v3342, %v3341
        %v3344 = vmul.f32 0.5, %v3343
        %v3345 = vsub.f32 1.5, %v3344
        %v3346 = vmul.f32 %v3341, %v3345
        %vm3347 = vweird.f32 %v2754
        %vm3348 = vweird.f32 %v3341
        %vm3349 = vmor %vm3347, %vm3348
        %v3350 = vsel %vm3349, %v3341, %v3346
        %v3351 = vrsqrt.pop %v2755
        %v3352 = vmul.f32 %v3351, %v2755
        %v3353 = vmul.f32 %v3352, %v3351
        %v3354 = vmul.f32 0.5, %v3353
        %v3355 = vsub.f32 1.5, %v3354
        %v3356 = vmul.f32 %v3351, %v3355
        %vm3357 = vweird.f32 %v2755
        %vm3358 = vweird.f32 %v3351
        %vm3359 = vmor %vm3357, %vm3358
        %v3360 = vsel %vm3359, %v3351, %v3356
        %v3361 = vrsqrt.pop %v2756
        %v3362 = vmul.f32 %v3361, %v2756
        %v3363 = vmul.f32 %v3362, %v3361
        %v3364 = vmul.f32 0.5, %v3363
        %v3365 = vsub.f32 1.5, %v3364
        %v3366 = vmul.f32 %v3361, %v3365
        %vm3367 = vweird.f32 %v2756
        %vm3368 = vweird.f32 %v3361
        %vm3369 = vmor %vm3367, %vm3368
        %v3370 = vsel %vm3369, %v3361, %v3366
        %v3371 = vrsqrt.pop %v2757
        %v3372 = vmul.f32 %v3371, %v2757
        %v3373 = vmul.f32 %v3372, %v3371
        %v3374 = vmul.f32 0.5, %v3373
        %v3375 = vsub.f32 1.5, %v3374
        %v3376 = vmul.f32 %v3371, %v3375
        %vm3377 = vweird.f32 %v2757
        %vm3378 = vweird.f32 %v3371
        %vm3379 = vmor %vm3377, %vm3378
        %v3380 = vsel %vm3379, %v3371, %v3376
        %v3381 = vrsqrt.pop %v2758
        %v3382 = vmul.f32 %v3381, %v2758
        %v3383 = vmul.f32 %v3382, %v3381
        %v3384 = vmul.f32 0.5, %v3383
        %v3385 = vsub.f32 1.5, %v3384
        %v3386 = vmul.f32 %v3381, %v3385
        %vm3387 = vweird.f32 %v2758
        %vm3388 = vweird.f32 %v3381
        %vm3389 = vmor %vm3387, %vm3388
        %v3390 = vsel %vm3389, %v3381, %v3386
        %v3391 = vrsqrt.pop %v2759
        %v3392 = vmul.f32 %v3391, %v2759
        %v3393 = vmul.f32 %v3392, %v3391
        %v3394 = vmul.f32 0.5, %v3393
        %v3395 = vsub.f32 1.5, %v3394
        %v3396 = vmul.f32 %v3391, %v3395
        %vm3397 = vweird.f32 %v2759
        %vm3398 = vweird.f32 %v3391
        %vm3399 = vmor %vm3397, %vm3398
        %v3400 = vsel %vm3399, %v3391, %v3396
        %v3401 = vrsqrt.pop %v2760
        %v3402 = vmul.f32 %v3401, %v2760
        %v3403 = vmul.f32 %v3402, %v3401
        %v3404 = vmul.f32 0.5, %v3403
        %v3405 = vsub.f32 1.5, %v3404
        %v3406 = vmul.f32 %v3401, %v3405
        %vm3407 = vweird.f32 %v2760
        %vm3408 = vweird.f32 %v3401
        %vm3409 = vmor %vm3407, %vm3408
        %v3410 = vsel %vm3409, %v3401, %v3406
        %v3411 = vrsqrt.pop %v2761
        %v3412 = vmul.f32 %v3411, %v2761
        %v3413 = vmul.f32 %v3412, %v3411
        %v3414 = vmul.f32 0.5, %v3413
        %v3415 = vsub.f32 1.5, %v3414
        %v3416 = vmul.f32 %v3411, %v3415
        %vm3417 = vweird.f32 %v2761
        %vm3418 = vweird.f32 %v3411
        %vm3419 = vmor %vm3417, %vm3418
        %v3420 = vsel %vm3419, %v3411, %v3416
        %v3421 = vrsqrt.pop %v2762
        %v3422 = vmul.f32 %v3421, %v2762
        %v3423 = vmul.f32 %v3422, %v3421
        %v3424 = vmul.f32 0.5, %v3423
        %v3425 = vsub.f32 1.5, %v3424
        %v3426 = vmul.f32 %v3421, %v3425
        %vm3427 = vweird.f32 %v2762
        %vm3428 = vweird.f32 %v3421
        %vm3429 = vmor %vm3427, %vm3428
        %v3430 = vsel %vm3429, %v3421, %v3426
        %v3431 = vrsqrt.pop %v2763
        %v3432 = vmul.f32 %v3431, %v2763
        %v3433 = vmul.f32 %v3432, %v3431
        %v3434 = vmul.f32 0.5, %v3433
        %v3435 = vsub.f32 1.5, %v3434
        %v3436 = vmul.f32 %v3431, %v3435
        %vm3437 = vweird.f32 %v2763
        %vm3438 = vweird.f32 %v3431
        %vm3439 = vmor %vm3437, %vm3438
        %v3440 = vsel %vm3439, %v3431, %v3436
        %v3441 = vrsqrt.pop %v2764
        %v3442 = vmul.f32 %v3441, %v2764
        %v3443 = vmul.f32 %v3442, %v3441
        %v3444 = vmul.f32 0.5, %v3443
        %v3445 = vsub.f32 1.5, %v3444
        %v3446 = vmul.f32 %v3441, %v3445
        %vm3447 = vweird.f32 %v2764
        %vm3448 = vweird.f32 %v3441
        %vm3449 = vmor %vm3447, %vm3448
        %v3450 = vsel %vm3449, %v3441, %v3446
        %v3451 = vrsqrt.pop %v2765
        %v3452 = vmul.f32 %v3451, %v2765
        %v3453 = vmul.f32 %v3452, %v3451
        %v3454 = vmul.f32 0.5, %v3453
        %v3455 = vsub.f32 1.5, %v3454
        %v3456 = vmul.f32 %v3451, %v3455
        %vm3457 = vweird.f32 %v2765
        %vm3458 = vweird.f32 %v3451
        %vm3459 = vmor %vm3457, %vm3458
        %v3460 = vsel %vm3459, %v3451, %v3456
        %v3461 = vrsqrt.pop %v2766
        %v3462 = vmul.f32 %v3461, %v2766
        %v3463 = vmul.f32 %v3462, %v3461
        %v3464 = vmul.f32 0.5, %v3463
        %v3465 = vsub.f32 1.5, %v3464
        %v3466 = vmul.f32 %v3461, %v3465
        %vm3467 = vweird.f32 %v2766
        %vm3468 = vweird.f32 %v3461
        %vm3469 = vmor %vm3467, %vm3468
        %v3470 = vsel %vm3469, %v3461, %v3466
        %v3471 = vrsqrt.pop %v2767
        %v3472 = vmul.f32 %v3471, %v2767
        %v3473 = vmul.f32 %v3472, %v3471
        %v3474 = vmul.f32 0.5, %v3473
        %v3475 = vsub.f32 1.5, %v3474
        %v3476 = vmul.f32 %v3471, %v3475
        %vm3477 = vweird.f32 %v2767
        %vm3478 = vweird.f32 %v3471
        %vm3479 = vmor %vm3477, %vm3478
        %v3480 = vsel %vm3479, %v3471, %v3476
        %v3481 = vrsqrt.pop %v2768
        %v3482 = vmul.f32 %v3481, %v2768
        %v3483 = vmul.f32 %v3482, %v3481
        %v3484 = vmul.f32 0.5, %v3483
        %v3485 = vsub.f32 1.5, %v3484
        %v3486 = vmul.f32 %v3481, %v3485
        %vm3487 = vweird.f32 %v2768
        %vm3488 = vweird.f32 %v3481
        %vm3489 = vmor %vm3487, %vm3488
        %v3490 = vsel %vm3489, %v3481, %v3486
        %v3491 = vrsqrt.pop %v2769
        %v3492 = vmul.f32 %v3491, %v2769
        %v3493 = vmul.f32 %v3492, %v3491
        %v3494 = vmul.f32 0.5, %v3493
        %v3495 = vsub.f32 1.5, %v3494
        %v3496 = vmul.f32 %v3491, %v3495
        %vm3497 = vweird.f32 %v2769
        %vm3498 = vweird.f32 %v3491
        %vm3499 = vmor %vm3497, %vm3498
        %v3500 = vsel %vm3499, %v3491, %v3496
        %v3501 = vrsqrt.pop %v2770
        %v3502 = vmul.f32 %v3501, %v2770
        %v3503 = vmul.f32 %v3502, %v3501
        %v3504 = vmul.f32 0.5, %v3503
        %v3505 = vsub.f32 1.5, %v3504
        %v3506 = vmul.f32 %v3501, %v3505
        %vm3507 = vweird.f32 %v2770
        %vm3508 = vweird.f32 %v3501
        %vm3509 = vmor %vm3507, %vm3508
        %v3510 = vsel %vm3509, %v3501, %v3506
        %v3511 = vrsqrt.pop %v2771
        %v3512 = vmul.f32 %v3511, %v2771
        %v3513 = vmul.f32 %v3512, %v3511
        %v3514 = vmul.f32 0.5, %v3513
        %v3515 = vsub.f32 1.5, %v3514
        %v3516 = vmul.f32 %v3511, %v3515
        %vm3517 = vweird.f32 %v2771
        %vm3518 = vweird.f32 %v3511
        %vm3519 = vmor %vm3517, %vm3518
        %v3520 = vsel %vm3519, %v3511, %v3516
        %v3521 = vrsqrt.pop %v2772
        %v3522 = vmul.f32 %v3521, %v2772
        %v3523 = vmul.f32 %v3522, %v3521
        %v3524 = vmul.f32 0.5, %v3523
        %v3525 = vsub.f32 1.5, %v3524
        %v3526 = vmul.f32 %v3521, %v3525
        %vm3527 = vweird.f32 %v2772
        %vm3528 = vweird.f32 %v3521
        %vm3529 = vmor %vm3527, %vm3528
        %v3530 = vsel %vm3529, %v3521, %v3526
        %v3531 = vrsqrt.pop %v2773
        %v3532 = vmul.f32 %v3531, %v2773
        %v3533 = vmul.f32 %v3532, %v3531
        %v3534 = vmul.f32 0.5, %v3533
        %v3535 = vsub.f32 1.5, %v3534
        %v3536 = vmul.f32 %v3531, %v3535
        %vm3537 = vweird.f32 %v2773
        %vm3538 = vweird.f32 %v3531
        %vm3539 = vmor %vm3537, %vm3538
        %v3540 = vsel %vm3539, %v3531, %v3536
        %v3541 = vrsqrt.pop %v2774
        %v3542 = vmul.f32 %v3541, %v2774
        %v3543 = vmul.f32 %v3542, %v3541
        %v3544 = vmul.f32 0.5, %v3543
        %v3545 = vsub.f32 1.5, %v3544
        %v3546 = vmul.f32 %v3541, %v3545
        %vm3547 = vweird.f32 %v2774
        %vm3548 = vweird.f32 %v3541
        %vm3549 = vmor %vm3547, %vm3548
        %v3550 = vsel %vm3549, %v3541, %v3546
        %v3551 = vrsqrt.pop %v2775
        %v3552 = vmul.f32 %v3551, %v2775
        %v3553 = vmul.f32 %v3552, %v3551
        %v3554 = vmul.f32 0.5, %v3553
        %v3555 = vsub.f32 1.5, %v3554
        %v3556 = vmul.f32 %v3551, %v3555
        %vm3557 = vweird.f32 %v2775
        %vm3558 = vweird.f32 %v3551
        %vm3559 = vmor %vm3557, %vm3558
        %v3560 = vsel %vm3559, %v3551, %v3556
        %v3561 = vrsqrt.pop %v2776
        %v3562 = vmul.f32 %v3561, %v2776
        %v3563 = vmul.f32 %v3562, %v3561
        %v3564 = vmul.f32 0.5, %v3563
        %v3565 = vsub.f32 1.5, %v3564
        %v3566 = vmul.f32 %v3561, %v3565
        %vm3567 = vweird.f32 %v2776
        %vm3568 = vweird.f32 %v3561
        %vm3569 = vmor %vm3567, %vm3568
        %v3570 = vsel %vm3569, %v3561, %v3566
        %v3571 = vrsqrt.pop %v2777
        %v3572 = vmul.f32 %v3571, %v2777
        %v3573 = vmul.f32 %v3572, %v3571
        %v3574 = vmul.f32 0.5, %v3573
        %v3575 = vsub.f32 1.5, %v3574
        %v3576 = vmul.f32 %v3571, %v3575
        %vm3577 = vweird.f32 %v2777
        %vm3578 = vweird.f32 %v3571
        %vm3579 = vmor %vm3577, %vm3578
        %v3580 = vsel %vm3579, %v3571, %v3576
        %v3581 = vrsqrt.pop %v2778
        %v3582 = vmul.f32 %v3581, %v2778
        %v3583 = vmul.f32 %v3582, %v3581
        %v3584 = vmul.f32 0.5, %v3583
        %v3585 = vsub.f32 1.5, %v3584
        %v3586 = vmul.f32 %v3581, %v3585
        %vm3587 = vweird.f32 %v2778
        %vm3588 = vweird.f32 %v3581
        %vm3589 = vmor %vm3587, %vm3588
        %v3590 = vsel %vm3589, %v3581, %v3586
        %v3591 = vrsqrt.pop %v2779
        %v3592 = vmul.f32 %v3591, %v2779
        %v3593 = vmul.f32 %v3592, %v3591
        %v3594 = vmul.f32 0.5, %v3593
        %v3595 = vsub.f32 1.5, %v3594
        %v3596 = vmul.f32 %v3591, %v3595
        %vm3597 = vweird.f32 %v2779
        %vm3598 = vweird.f32 %v3591
        %vm3599 = vmor %vm3597, %vm3598
        %v3600 = vsel %vm3599, %v3591, %v3596
        %v3601 = vrsqrt.pop %v2780
        %v3602 = vmul.f32 %v3601, %v2780
        %v3603 = vmul.f32 %v3602, %v3601
        %v3604 = vmul.f32 0.5, %v3603
        %v3605 = vsub.f32 1.5, %v3604
        %v3606 = vmul.f32 %v3601, %v3605
        %vm3607 = vweird.f32 %v2780
        %vm3608 = vweird.f32 %v3601
        %vm3609 = vmor %vm3607, %vm3608
        %v3610 = vsel %vm3609, %v3601, %v3606
        %v3611 = vrsqrt.pop %v2781
        %v3612 = vmul.f32 %v3611, %v2781
        %v3613 = vmul.f32 %v3612, %v3611
        %v3614 = vmul.f32 0.5, %v3613
        %v3615 = vsub.f32 1.5, %v3614
        %v3616 = vmul.f32 %v3611, %v3615
        %vm3617 = vweird.f32 %v2781
        %vm3618 = vweird.f32 %v3611
        %vm3619 = vmor %vm3617, %vm3618
        %v3620 = vsel %vm3619, %v3611, %v3616
        %v3621 = vrsqrt.pop %v2782
        %v3622 = vmul.f32 %v3621, %v2782
        %v3623 = vmul.f32 %v3622, %v3621
        %v3624 = vmul.f32 0.5, %v3623
        %v3625 = vsub.f32 1.5, %v3624
        %v3626 = vmul.f32 %v3621, %v3625
        %vm3627 = vweird.f32 %v2782
        %vm3628 = vweird.f32 %v3621
        %vm3629 = vmor %vm3627, %vm3628
        %v3630 = vsel %vm3629, %v3621, %v3626
        %v3631 = vrsqrt.pop %v2783
        %v3632 = vmul.f32 %v3631, %v2783
        %v3633 = vmul.f32 %v3632, %v3631
        %v3634 = vmul.f32 0.5, %v3633
        %v3635 = vsub.f32 1.5, %v3634
        %v3636 = vmul.f32 %v3631, %v3635
        %vm3637 = vweird.f32 %v2783
        %vm3638 = vweird.f32 %v3631
        %vm3639 = vmor %vm3637, %vm3638
        %v3640 = vsel %vm3639, %v3631, %v3636
        %v3641 = vrsqrt.pop %v2784
        %v3642 = vmul.f32 %v3641, %v2784
        %v3643 = vmul.f32 %v3642, %v3641
        %v3644 = vmul.f32 0.5, %v3643
        %v3645 = vsub.f32 1.5, %v3644
        %v3646 = vmul.f32 %v3641, %v3645
        %vm3647 = vweird.f32 %v2784
        %vm3648 = vweird.f32 %v3641
        %vm3649 = vmor %vm3647, %vm3648
        %v3650 = vsel %vm3649, %v3641, %v3646
        %v3651 = vrsqrt.pop %v2785
        %v3652 = vmul.f32 %v3651, %v2785
        %v3653 = vmul.f32 %v3652, %v3651
        %v3654 = vmul.f32 0.5, %v3653
        %v3655 = vsub.f32 1.5, %v3654
        %v3656 = vmul.f32 %v3651, %v3655
        %vm3657 = vweird.f32 %v2785
        %vm3658 = vweird.f32 %v3651
        %vm3659 = vmor %vm3657, %vm3658
        %v3660 = vsel %vm3659, %v3651, %v3656
        %v3661 = vrsqrt.pop %v2786
        %v3662 = vmul.f32 %v3661, %v2786
        %v3663 = vmul.f32 %v3662, %v3661
        %v3664 = vmul.f32 0.5, %v3663
        %v3665 = vsub.f32 1.5, %v3664
        %v3666 = vmul.f32 %v3661, %v3665
        %vm3667 = vweird.f32 %v2786
        %vm3668 = vweird.f32 %v3661
        %vm3669 = vmor %vm3667, %vm3668
        %v3670 = vsel %vm3669, %v3661, %v3666
        %v3671 = vrsqrt.pop %v2787
        %v3672 = vmul.f32 %v3671, %v2787
        %v3673 = vmul.f32 %v3672, %v3671
        %v3674 = vmul.f32 0.5, %v3673
        %v3675 = vsub.f32 1.5, %v3674
        %v3676 = vmul.f32 %v3671, %v3675
        %vm3677 = vweird.f32 %v2787
        %vm3678 = vweird.f32 %v3671
        %vm3679 = vmor %vm3677, %vm3678
        %v3680 = vsel %vm3679, %v3671, %v3676
        %v3681 = vrsqrt.pop %v2788
        %v3682 = vmul.f32 %v3681, %v2788
        %v3683 = vmul.f32 %v3682, %v3681
        %v3684 = vmul.f32 0.5, %v3683
        %v3685 = vsub.f32 1.5, %v3684
        %v3686 = vmul.f32 %v3681, %v3685
        %vm3687 = vweird.f32 %v2788
        %vm3688 = vweird.f32 %v3681
        %vm3689 = vmor %vm3687, %vm3688
        %v3690 = vsel %vm3689, %v3681, %v3686
        %v3691 = vrsqrt.pop %v2789
        %v3692 = vmul.f32 %v3691, %v2789
        %v3693 = vmul.f32 %v3692, %v3691
        %v3694 = vmul.f32 0.5, %v3693
        %v3695 = vsub.f32 1.5, %v3694
        %v3696 = vmul.f32 %v3691, %v3695
        %vm3697 = vweird.f32 %v2789
        %vm3698 = vweird.f32 %v3691
        %vm3699 = vmor %vm3697, %vm3698
        %v3700 = vsel %vm3699, %v3691, %v3696
        %v3701 = vrsqrt.pop %v2790
        %v3702 = vmul.f32 %v3701, %v2790
        %v3703 = vmul.f32 %v3702, %v3701
        %v3704 = vmul.f32 0.5, %v3703
        %v3705 = vsub.f32 1.5, %v3704
        %v3706 = vmul.f32 %v3701, %v3705
        %vm3707 = vweird.f32 %v2790
        %vm3708 = vweird.f32 %v3701
        %vm3709 = vmor %vm3707, %vm3708
        %v3710 = vsel %vm3709, %v3701, %v3706
        %v3711 = vrsqrt.pop %v2791
        %v3712 = vmul.f32 %v3711, %v2791
        %v3713 = vmul.f32 %v3712, %v3711
        %v3714 = vmul.f32 0.5, %v3713
        %v3715 = vsub.f32 1.5, %v3714
        %v3716 = vmul.f32 %v3711, %v3715
        %vm3717 = vweird.f32 %v2791
        %vm3718 = vweird.f32 %v3711
        %vm3719 = vmor %vm3717, %vm3718
        %v3720 = vsel %vm3719, %v3711, %v3716
        %v3721 = vrsqrt.pop %v2792
        %v3722 = vmul.f32 %v3721, %v2792
        %v3723 = vmul.f32 %v3722, %v3721
        %v3724 = vmul.f32 0.5, %v3723
        %v3725 = vsub.f32 1.5, %v3724
        %v3726 = vmul.f32 %v3721, %v3725
        %vm3727 = vweird.f32 %v2792
        %vm3728 = vweird.f32 %v3721
        %vm3729 = vmor %vm3727, %vm3728
        %v3730 = vsel %vm3729, %v3721, %v3726
        %v3731 = vrsqrt.pop %v2793
        %v3732 = vmul.f32 %v3731, %v2793
        %v3733 = vmul.f32 %v3732, %v3731
        %v3734 = vmul.f32 0.5, %v3733
        %v3735 = vsub.f32 1.5, %v3734
        %v3736 = vmul.f32 %v3731, %v3735
        %vm3737 = vweird.f32 %v2793
        %vm3738 = vweird.f32 %v3731
        %vm3739 = vmor %vm3737, %vm3738
        %v3740 = vsel %vm3739, %v3731, %v3736
        %v3741 = vrsqrt.pop %v2794
        %v3742 = vmul.f32 %v3741, %v2794
        %v3743 = vmul.f32 %v3742, %v3741
        %v3744 = vmul.f32 0.5, %v3743
        %v3745 = vsub.f32 1.5, %v3744
        %v3746 = vmul.f32 %v3741, %v3745
        %vm3747 = vweird.f32 %v2794
        %vm3748 = vweird.f32 %v3741
        %vm3749 = vmor %vm3747, %vm3748
        %v3750 = vsel %vm3749, %v3741, %v3746
        %v3751 = vrsqrt.pop %v2795
        %v3752 = vmul.f32 %v3751, %v2795
        %v3753 = vmul.f32 %v3752, %v3751
        %v3754 = vmul.f32 0.5, %v3753
        %v3755 = vsub.f32 1.5, %v3754
        %v3756 = vmul.f32 %v3751, %v3755
        %vm3757 = vweird.f32 %v2795
        %vm3758 = vweird.f32 %v3751
        %vm3759 = vmor %vm3757, %vm3758
        %v3760 = vsel %vm3759, %v3751, %v3756
        %v3761 = vrsqrt.pop %v2796
        %v3762 = vmul.f32 %v3761, %v2796
        %v3763 = vmul.f32 %v3762, %v3761
        %v3764 = vmul.f32 0.5, %v3763
        %v3765 = vsub.f32 1.5, %v3764
        %v3766 = vmul.f32 %v3761, %v3765
        %vm3767 = vweird.f32 %v2796
        %vm3768 = vweird.f32 %v3761
        %vm3769 = vmor %vm3767, %vm3768
        %v3770 = vsel %vm3769, %v3761, %v3766
        %v3771 = vrsqrt.pop %v2797
        %v3772 = vmul.f32 %v3771, %v2797
        %v3773 = vmul.f32 %v3772, %v3771
        %v3774 = vmul.f32 0.5, %v3773
        %v3775 = vsub.f32 1.5, %v3774
        %v3776 = vmul.f32 %v3771, %v3775
        %vm3777 = vweird.f32 %v2797
        %vm3778 = vweird.f32 %v3771
        %vm3779 = vmor %vm3777, %vm3778
        %v3780 = vsel %vm3779, %v3771, %v3776
        %v3781 = vrsqrt.pop %v2798
        %v3782 = vmul.f32 %v3781, %v2798
        %v3783 = vmul.f32 %v3782, %v3781
        %v3784 = vmul.f32 0.5, %v3783
        %v3785 = vsub.f32 1.5, %v3784
        %v3786 = vmul.f32 %v3781, %v3785
        %vm3787 = vweird.f32 %v2798
        %vm3788 = vweird.f32 %v3781
        %vm3789 = vmor %vm3787, %vm3788
        %v3790 = vsel %vm3789, %v3781, %v3786
        %v3791 = vrsqrt.pop %v2799
        %v3792 = vmul.f32 %v3791, %v2799
        %v3793 = vmul.f32 %v3792, %v3791
        %v3794 = vmul.f32 0.5, %v3793
        %v3795 = vsub.f32 1.5, %v3794
        %v3796 = vmul.f32 %v3791, %v3795
        %vm3797 = vweird.f32 %v2799
        %vm3798 = vweird.f32 %v3791
        %vm3799 = vmor %vm3797, %vm3798
        %v3800 = vsel %vm3799, %v3791, %v3796
        %v3801 = vrsqrt.pop %v2800
        %v3802 = vmul.f32 %v3801, %v2800
        %v3803 = vmul.f32 %v3802, %v3801
        %v3804 = vmul.f32 0.5, %v3803
        %v3805 = vsub.f32 1.5, %v3804
        %v3806 = vmul.f32 %v3801, %v3805
        %vm3807 = vweird.f32 %v2800
        %vm3808 = vweird.f32 %v3801
        %vm3809 = vmor %vm3807, %vm3808
        %v3810 = vsel %vm3809, %v3801, %v3806
        %v3811 = vrsqrt.pop %v2801
        %v3812 = vmul.f32 %v3811, %v2801
        %v3813 = vmul.f32 %v3812, %v3811
        %v3814 = vmul.f32 0.5, %v3813
        %v3815 = vsub.f32 1.5, %v3814
        %v3816 = vmul.f32 %v3811, %v3815
        %vm3817 = vweird.f32 %v2801
        %vm3818 = vweird.f32 %v3811
        %vm3819 = vmor %vm3817, %vm3818
        %v3820 = vsel %vm3819, %v3811, %v3816
        %v3821 = vrsqrt.pop %v2802
        %v3822 = vmul.f32 %v3821, %v2802
        %v3823 = vmul.f32 %v3822, %v3821
        %v3824 = vmul.f32 0.5, %v3823
        %v3825 = vsub.f32 1.5, %v3824
        %v3826 = vmul.f32 %v3821, %v3825
        %vm3827 = vweird.f32 %v2802
        %vm3828 = vweird.f32 %v3821
        %vm3829 = vmor %vm3827, %vm3828
        %v3830 = vsel %vm3829, %v3821, %v3826
        %v3831 = vrsqrt.pop %v2803
        %v3832 = vmul.f32 %v3831, %v2803
        %v3833 = vmul.f32 %v3832, %v3831
        %v3834 = vmul.f32 0.5, %v3833
        %v3835 = vsub.f32 1.5, %v3834
        %v3836 = vmul.f32 %v3831, %v3835
        %vm3837 = vweird.f32 %v2803
        %vm3838 = vweird.f32 %v3831
        %vm3839 = vmor %vm3837, %vm3838
        %v3840 = vsel %vm3839, %v3831, %v3836
        %v3841 = vrsqrt.pop %v2804
        %v3842 = vmul.f32 %v3841, %v2804
        %v3843 = vmul.f32 %v3842, %v3841
        %v3844 = vmul.f32 0.5, %v3843
        %v3845 = vsub.f32 1.5, %v3844
        %v3846 = vmul.f32 %v3841, %v3845
        %vm3847 = vweird.f32 %v2804
        %vm3848 = vweird.f32 %v3841
        %vm3849 = vmor %vm3847, %vm3848
        %v3850 = vsel %vm3849, %v3841, %v3846
        %v3851 = vrsqrt.pop %v2805
        %v3852 = vmul.f32 %v3851, %v2805
        %v3853 = vmul.f32 %v3852, %v3851
        %v3854 = vmul.f32 0.5, %v3853
        %v3855 = vsub.f32 1.5, %v3854
        %v3856 = vmul.f32 %v3851, %v3855
        %vm3857 = vweird.f32 %v2805
        %vm3858 = vweird.f32 %v3851
        %vm3859 = vmor %vm3857, %vm3858
        %v3860 = vsel %vm3859, %v3851, %v3856
        %v3861 = vrsqrt.pop %v2806
        %v3862 = vmul.f32 %v3861, %v2806
        %v3863 = vmul.f32 %v3862, %v3861
        %v3864 = vmul.f32 0.5, %v3863
        %v3865 = vsub.f32 1.5, %v3864
        %v3866 = vmul.f32 %v3861, %v3865
        %vm3867 = vweird.f32 %v2806
        %vm3868 = vweird.f32 %v3861
        %vm3869 = vmor %vm3867, %vm3868
        %v3870 = vsel %vm3869, %v3861, %v3866
        %v3871 = vrsqrt.pop %v2807
        %v3872 = vmul.f32 %v3871, %v2807
        %v3873 = vmul.f32 %v3872, %v3871
        %v3874 = vmul.f32 0.5, %v3873
        %v3875 = vsub.f32 1.5, %v3874
        %v3876 = vmul.f32 %v3871, %v3875
        %vm3877 = vweird.f32 %v2807
        %vm3878 = vweird.f32 %v3871
        %vm3879 = vmor %vm3877, %vm3878
        %v3880 = vsel %vm3879, %v3871, %v3876
        %v3881 = vrsqrt.pop %v2808
        %v3882 = vmul.f32 %v3881, %v2808
        %v3883 = vmul.f32 %v3882, %v3881
        %v3884 = vmul.f32 0.5, %v3883
        %v3885 = vsub.f32 1.5, %v3884
        %v3886 = vmul.f32 %v3881, %v3885
        %vm3887 = vweird.f32 %v2808
        %vm3888 = vweird.f32 %v3881
        %vm3889 = vmor %vm3887, %vm3888
        %v3890 = vsel %vm3889, %v3881, %v3886
        %v3891 = vrsqrt.pop %v2809
        %v3892 = vmul.f32 %v3891, %v2809
        %v3893 = vmul.f32 %v3892, %v3891
        %v3894 = vmul.f32 0.5, %v3893
        %v3895 = vsub.f32 1.5, %v3894
        %v3896 = vmul.f32 %v3891, %v3895
        %vm3897 = vweird.f32 %v2809
        %vm3898 = vweird.f32 %v3891
        %vm3899 = vmor %vm3897, %vm3898
        %v3900 = vsel %vm3899, %v3891, %v3896
        %v3901 = vrsqrt.pop %v2810
        %v3902 = vmul.f32 %v3901, %v2810
        %v3903 = vmul.f32 %v3902, %v3901
        %v3904 = vmul.f32 0.5, %v3903
        %v3905 = vsub.f32 1.5, %v3904
        %v3906 = vmul.f32 %v3901, %v3905
        %vm3907 = vweird.f32 %v2810
        %vm3908 = vweird.f32 %v3901
        %vm3909 = vmor %vm3907, %vm3908
        %v3910 = vsel %vm3909, %v3901, %v3906
        %v3911 = vrsqrt.pop %v2811
        %v3912 = vmul.f32 %v3911, %v2811
        %v3913 = vmul.f32 %v3912, %v3911
        %v3914 = vmul.f32 0.5, %v3913
        %v3915 = vsub.f32 1.5, %v3914
        %v3916 = vmul.f32 %v3911, %v3915
        %vm3917 = vweird.f32 %v2811
        %vm3918 = vweird.f32 %v3911
        %vm3919 = vmor %vm3917, %vm3918
        %v3920 = vsel %vm3919, %v3911, %v3916
        %v3921 = vrsqrt.pop %v2812
        %v3922 = vmul.f32 %v3921, %v2812
        %v3923 = vmul.f32 %v3922, %v3921
        %v3924 = vmul.f32 0.5, %v3923
        %v3925 = vsub.f32 1.5, %v3924
        %v3926 = vmul.f32 %v3921, %v3925
        %vm3927 = vweird.f32 %v2812
        %vm3928 = vweird.f32 %v3921
        %vm3929 = vmor %vm3927, %vm3928
        %v3930 = vsel %vm3929, %v3921, %v3926
        %v3931 = vrsqrt.pop %v2813
        %v3932 = vmul.f32 %v3931, %v2813
        %v3933 = vmul.f32 %v3932, %v3931
        %v3934 = vmul.f32 0.5, %v3933
        %v3935 = vsub.f32 1.5, %v3934
        %v3936 = vmul.f32 %v3931, %v3935
        %vm3937 = vweird.f32 %v2813
        %vm3938 = vweird.f32 %v3931
        %vm3939 = vmor %vm3937, %vm3938
        %v3940 = vsel %vm3939, %v3931, %v3936
        %v3941 = vrsqrt.pop %v2814
        %v3942 = vmul.f32 %v3941, %v2814
        %v3943 = vmul.f32 %v3942, %v3941
        %v3944 = vmul.f32 0.5, %v3943
        %v3945 = vsub.f32 1.5, %v3944
        %v3946 = vmul.f32 %v3941, %v3945
        %vm3947 = vweird.f32 %v2814
        %vm3948 = vweird.f32 %v3941
        %vm3949 = vmor %vm3947, %vm3948
        %v3950 = vsel %vm3949, %v3941, %v3946
        %v3951 = vrsqrt.pop %v2815
        %v3952 = vmul.f32 %v3951, %v2815
        %v3953 = vmul.f32 %v3952, %v3951
        %v3954 = vmul.f32 0.5, %v3953
        %v3955 = vsub.f32 1.5, %v3954
        %v3956 = vmul.f32 %v3951, %v3955
        %vm3957 = vweird.f32 %v2815
        %vm3958 = vweird.f32 %v3951
        %vm3959 = vmor %vm3957, %vm3958
        %v3960 = vsel %vm3959, %v3951, %v3956
        %v3961 = vrsqrt.pop %v2816
        %v3962 = vmul.f32 %v3961, %v2816
        %v3963 = vmul.f32 %v3962, %v3961
        %v3964 = vmul.f32 0.5, %v3963
        %v3965 = vsub.f32 1.5, %v3964
        %v3966 = vmul.f32 %v3961, %v3965
        %vm3967 = vweird.f32 %v2816
        %vm3968 = vweird.f32 %v3961
        %vm3969 = vmor %vm3967, %vm3968
        %v3970 = vsel %vm3969, %v3961, %v3966
        %v3971 = vrsqrt.pop %v2817
        %v3972 = vmul.f32 %v3971, %v2817
        %v3973 = vmul.f32 %v3972, %v3971
        %v3974 = vmul.f32 0.5, %v3973
        %v3975 = vsub.f32 1.5, %v3974
        %v3976 = vmul.f32 %v3971, %v3975
        %vm3977 = vweird.f32 %v2817
        %vm3978 = vweird.f32 %v3971
        %vm3979 = vmor %vm3977, %vm3978
        %v3980 = vsel %vm3979, %v3971, %v3976
        %v3981 = vrsqrt.pop %v2818
        %v3982 = vmul.f32 %v3981, %v2818
        %v3983 = vmul.f32 %v3982, %v3981
        %v3984 = vmul.f32 0.5, %v3983
        %v3985 = vsub.f32 1.5, %v3984
        %v3986 = vmul.f32 %v3981, %v3985
        %vm3987 = vweird.f32 %v2818
        %vm3988 = vweird.f32 %v3981
        %vm3989 = vmor %vm3987, %vm3988
        %v3990 = vsel %vm3989, %v3981, %v3986
        %v3991 = vrsqrt.pop %v2819
        %v3992 = vmul.f32 %v3991, %v2819
        %v3993 = vmul.f32 %v3992, %v3991
        %v3994 = vmul.f32 0.5, %v3993
        %v3995 = vsub.f32 1.5, %v3994
        %v3996 = vmul.f32 %v3991, %v3995
        %vm3997 = vweird.f32 %v2819
        %vm3998 = vweird.f32 %v3991
        %vm3999 = vmor %vm3997, %vm3998
        %v4000 = vsel %vm3999, %v3991, %v3996
        %v4001 = vrsqrt.pop %v2820
        %v4002 = vmul.f32 %v4001, %v2820
        %v4003 = vmul.f32 %v4002, %v4001
        %v4004 = vmul.f32 0.5, %v4003
        %v4005 = vsub.f32 1.5, %v4004
        %v4006 = vmul.f32 %v4001, %v4005
        %vm4007 = vweird.f32 %v2820
        %vm4008 = vweird.f32 %v4001
        %vm4009 = vmor %vm4007, %vm4008
        %v4010 = vsel %vm4009, %v4001, %v4006
        %v4011 = vrsqrt.pop %v2821
        %v4012 = vmul.f32 %v4011, %v2821
        %v4013 = vmul.f32 %v4012, %v4011
        %v4014 = vmul.f32 0.5, %v4013
        %v4015 = vsub.f32 1.5, %v4014
        %v4016 = vmul.f32 %v4011, %v4015
        %vm4017 = vweird.f32 %v2821
        %vm4018 = vweird.f32 %v4011
        %vm4019 = vmor %vm4017, %vm4018
        %v4020 = vsel %vm4019, %v4011, %v4016
        %v4021 = vrsqrt.pop %v2822
        %v4022 = vmul.f32 %v4021, %v2822
        %v4023 = vmul.f32 %v4022, %v4021
        %v4024 = vmul.f32 0.5, %v4023
        %v4025 = vsub.f32 1.5, %v4024
        %v4026 = vmul.f32 %v4021, %v4025
        %vm4027 = vweird.f32 %v2822
        %vm4028 = vweird.f32 %v4021
        %vm4029 = vmor %vm4027, %vm4028
        %v4030 = vsel %vm4029, %v4021, %v4026
        %v4031 = vrsqrt.pop %v2823
        %v4032 = vmul.f32 %v4031, %v2823
        %v4033 = vmul.f32 %v4032, %v4031
        %v4034 = vmul.f32 0.5, %v4033
        %v4035 = vsub.f32 1.5, %v4034
        %v4036 = vmul.f32 %v4031, %v4035
        %vm4037 = vweird.f32 %v2823
        %vm4038 = vweird.f32 %v4031
        %vm4039 = vmor %vm4037, %vm4038
        %v4040 = vsel %vm4039, %v4031, %v4036
        %v4041 = vrsqrt.pop %v2824
        %v4042 = vmul.f32 %v4041, %v2824
        %v4043 = vmul.f32 %v4042, %v4041
        %v4044 = vmul.f32 0.5, %v4043
        %v4045 = vsub.f32 1.5, %v4044
        %v4046 = vmul.f32 %v4041, %v4045
        %vm4047 = vweird.f32 %v2824
        %vm4048 = vweird.f32 %v4041
        %vm4049 = vmor %vm4047, %vm4048
        %v4050 = vsel %vm4049, %v4041, %v4046
        %v4051 = vrsqrt.pop %v2825
        %v4052 = vmul.f32 %v4051, %v2825
        %v4053 = vmul.f32 %v4052, %v4051
        %v4054 = vmul.f32 0.5, %v4053
        %v4055 = vsub.f32 1.5, %v4054
        %v4056 = vmul.f32 %v4051, %v4055
        %vm4057 = vweird.f32 %v2825
        %vm4058 = vweird.f32 %v4051
        %vm4059 = vmor %vm4057, %vm4058
        %v4060 = vsel %vm4059, %v4051, %v4056
        %v4061 = vrsqrt.pop %v2826
        %v4062 = vmul.f32 %v4061, %v2826
        %v4063 = vmul.f32 %v4062, %v4061
        %v4064 = vmul.f32 0.5, %v4063
        %v4065 = vsub.f32 1.5, %v4064
        %v4066 = vmul.f32 %v4061, %v4065
        %vm4067 = vweird.f32 %v2826
        %vm4068 = vweird.f32 %v4061
        %vm4069 = vmor %vm4067, %vm4068
        %v4070 = vsel %vm4069, %v4061, %v4066
        %v4071 = vrsqrt.pop %v2827
        %v4072 = vmul.f32 %v4071, %v2827
        %v4073 = vmul.f32 %v4072, %v4071
        %v4074 = vmul.f32 0.5, %v4073
        %v4075 = vsub.f32 1.5, %v4074
        %v4076 = vmul.f32 %v4071, %v4075
        %vm4077 = vweird.f32 %v2827
        %vm4078 = vweird.f32 %v4071
        %vm4079 = vmor %vm4077, %vm4078
        %v4080 = vsel %vm4079, %v4071, %v4076
        %v4081 = vrsqrt.pop %v2828
        %v4082 = vmul.f32 %v4081, %v2828
        %v4083 = vmul.f32 %v4082, %v4081
        %v4084 = vmul.f32 0.5, %v4083
        %v4085 = vsub.f32 1.5, %v4084
        %v4086 = vmul.f32 %v4081, %v4085
        %vm4087 = vweird.f32 %v2828
        %vm4088 = vweird.f32 %v4081
        %vm4089 = vmor %vm4087, %vm4088
        %v4090 = vsel %vm4089, %v4081, %v4086
        %v4091 = vrsqrt.pop %v2829
        %v4092 = vmul.f32 %v4091, %v2829
        %v4093 = vmul.f32 %v4092, %v4091
        %v4094 = vmul.f32 0.5, %v4093
        %v4095 = vsub.f32 1.5, %v4094
        %v4096 = vmul.f32 %v4091, %v4095
        %vm4097 = vweird.f32 %v2829
        %vm4098 = vweird.f32 %v4091
        %vm4099 = vmor %vm4097, %vm4098
        %v4100 = vsel %vm4099, %v4091, %v4096
        %v4101 = vrsqrt.pop %v2830
        %v4102 = vmul.f32 %v4101, %v2830
        %v4103 = vmul.f32 %v4102, %v4101
        %v4104 = vmul.f32 0.5, %v4103
        %v4105 = vsub.f32 1.5, %v4104
        %v4106 = vmul.f32 %v4101, %v4105
        %vm4107 = vweird.f32 %v2830
        %vm4108 = vweird.f32 %v4101
        %vm4109 = vmor %vm4107, %vm4108
        %v4110 = vsel %vm4109, %v4101, %v4106
        %v4111 = vmul.f32 %v1935, %v2840
        %v4112 = vmul.f32 %v1936, %v2850
        %v4113 = vmul.f32 %v1937, %v2860
        %v4114 = vmul.f32 %v1938, %v2870
        %v4115 = vmul.f32 %v1939, %v2880
        %v4116 = vmul.f32 %v1940, %v2890
        %v4117 = vmul.f32 %v1941, %v2900
        %v4118 = vmul.f32 %v1942, %v2910
        %v4119 = vmul.f32 %v1943, %v2920
        %v4120 = vmul.f32 %v1944, %v2930
        %v4121 = vmul.f32 %v1945, %v2940
        %v4122 = vmul.f32 %v1946, %v2950
        %v4123 = vmul.f32 %v1947, %v2960
        %v4124 = vmul.f32 %v1948, %v2970
        %v4125 = vmul.f32 %v1949, %v2980
        %v4126 = vmul.f32 %v1950, %v2990
        %v4127 = vmul.f32 %v1951, %v3000
        %v4128 = vmul.f32 %v1952, %v3010
        %v4129 = vmul.f32 %v1953, %v3020
        %v4130 = vmul.f32 %v1954, %v3030
        %v4131 = vmul.f32 %v1955, %v3040
        %v4132 = vmul.f32 %v1956, %v3050
        %v4133 = vmul.f32 %v1957, %v3060
        %v4134 = vmul.f32 %v1958, %v3070
        %v4135 = vmul.f32 %v1959, %v3080
        %v4136 = vmul.f32 %v1960, %v3090
        %v4137 = vmul.f32 %v1961, %v3100
        %v4138 = vmul.f32 %v1962, %v3110
        %v4139 = vmul.f32 %v1963, %v3120
        %v4140 = vmul.f32 %v1964, %v3130
        %v4141 = vmul.f32 %v1965, %v3140
        %v4142 = vmul.f32 %v1966, %v3150
        %v4143 = vmul.f32 %v1967, %v3160
        %v4144 = vmul.f32 %v1968, %v3170
        %v4145 = vmul.f32 %v1969, %v3180
        %v4146 = vmul.f32 %v1970, %v3190
        %v4147 = vmul.f32 %v1971, %v3200
        %v4148 = vmul.f32 %v1972, %v3210
        %v4149 = vmul.f32 %v1973, %v3220
        %v4150 = vmul.f32 %v1974, %v3230
        %v4151 = vmul.f32 %v1975, %v3240
        %v4152 = vmul.f32 %v1976, %v3250
        %v4153 = vmul.f32 %v1977, %v3260
        %v4154 = vmul.f32 %v1978, %v3270
        %v4155 = vmul.f32 %v1979, %v3280
        %v4156 = vmul.f32 %v1980, %v3290
        %v4157 = vmul.f32 %v1981, %v3300
        %v4158 = vmul.f32 %v1982, %v3310
        %v4159 = vmul.f32 %v1983, %v3320
        %v4160 = vmul.f32 %v1984, %v3330
        %v4161 = vmul.f32 %v1985, %v3340
        %v4162 = vmul.f32 %v1986, %v3350
        %v4163 = vmul.f32 %v1987, %v3360
        %v4164 = vmul.f32 %v1988, %v3370
        %v4165 = vmul.f32 %v1989, %v3380
        %v4166 = vmul.f32 %v1990, %v3390
        %v4167 = vmul.f32 %v1991, %v3400
        %v4168 = vmul.f32 %v1992, %v3410
        %v4169 = vmul.f32 %v1993, %v3420
        %v4170 = vmul.f32 %v1994, %v3430
        %v4171 = vmul.f32 %v1995, %v3440
        %v4172 = vmul.f32 %v1996, %v3450
        %v4173 = vmul.f32 %v1997, %v3460
        %v4174 = vmul.f32 %v1998, %v3470
        %v4175 = vmul.f32 %v1999, %v3480
        %v4176 = vmul.f32 %v2000, %v3490
        %v4177 = vmul.f32 %v2001, %v3500
        %v4178 = vmul.f32 %v2002, %v3510
        %v4179 = vmul.f32 %v2003, %v3520
        %v4180 = vmul.f32 %v2004, %v3530
        %v4181 = vmul.f32 %v2005, %v3540
        %v4182 = vmul.f32 %v2006, %v3550
        %v4183 = vmul.f32 %v2007, %v3560
        %v4184 = vmul.f32 %v2008, %v3570
        %v4185 = vmul.f32 %v2009, %v3580
        %v4186 = vmul.f32 %v2010, %v3590
        %v4187 = vmul.f32 %v2011, %v3600
        %v4188 = vmul.f32 %v2012, %v3610
        %v4189 = vmul.f32 %v2013, %v3620
        %v4190 = vmul.f32 %v2014, %v3630
        %v4191 = vmul.f32 %v2015, %v3640
        %v4192 = vmul.f32 %v2016, %v3650
        %v4193 = vmul.f32 %v2017, %v3660
        %v4194 = vmul.f32 %v2018, %v3670
        %v4195 = vmul.f32 %v2019, %v3680
        %v4196 = vmul.f32 %v2020, %v3690
        %v4197 = vmul.f32 %v2021, %v3700
        %v4198 = vmul.f32 %v2022, %v3710
        %v4199 = vmul.f32 %v2023, %v3720
        %v4200 = vmul.f32 %v2024, %v3730
        %v4201 = vmul.f32 %v2025, %v3740
        %v4202 = vmul.f32 %v2026, %v3750
        %v4203 = vmul.f32 %v2027, %v3760
        %v4204 = vmul.f32 %v2028, %v3770
        %v4205 = vmul.f32 %v2029, %v3780
        %v4206 = vmul.f32 %v2030, %v3790
        %v4207 = vmul.f32 %v2031, %v3800
        %v4208 = vmul.f32 %v2032, %v3810
        %v4209 = vmul.f32 %v2033, %v3820
        %v4210 = vmul.f32 %v2034, %v3830
        %v4211 = vmul.f32 %v2035, %v3840
        %v4212 = vmul.f32 %v2036, %v3850
        %v4213 = vmul.f32 %v2037, %v3860
        %v4214 = vmul.f32 %v2038, %v3870
        %v4215 = vmul.f32 %v2039, %v3880
        %v4216 = vmul.f32 %v2040, %v3890
        %v4217 = vmul.f32 %v2041, %v3900
        %v4218 = vmul.f32 %v2042, %v3910
        %v4219 = vmul.f32 %v2043, %v3920
        %v4220 = vmul.f32 %v2044, %v3930
        %v4221 = vmul.f32 %v2045, %v3940
        %v4222 = vmul.f32 %v2046, %v3950
        %v4223 = vmul.f32 %v2047, %v3960
        %v4224 = vmul.f32 %v2048, %v3970
        %v4225 = vmul.f32 %v2049, %v3980
        %v4226 = vmul.f32 %v2050, %v3990
        %v4227 = vmul.f32 %v2051, %v4000
        %v4228 = vmul.f32 %v2052, %v4010
        %v4229 = vmul.f32 %v2053, %v4020
        %v4230 = vmul.f32 %v2054, %v4030
        %v4231 = vmul.f32 %v2055, %v4040
        %v4232 = vmul.f32 %v2056, %v4050
        %v4233 = vmul.f32 %v2057, %v4060
        %v4234 = vmul.f32 %v2058, %v4070
        %v4235 = vmul.f32 %v2059, %v4080
        %v4236 = vmul.f32 %v2060, %v4090
        %v4237 = vmul.f32 %v2061, %v4100
        %v4238 = vmul.f32 %v2062, %v4110
        %v4239 = vld [vmem:[%s2] sm:$0x1]
        %v4241 = vperm.slane %v4239, 0
        %v4243 = vmul.f32 %v4111, %v4241
        %v4244 = vmul.f32 %v4112, %v4241
        %v4245 = vmul.f32 %v4113, %v4241
        %v4246 = vmul.f32 %v4114, %v4241
        %v4247 = vmul.f32 %v4115, %v4241
        %v4248 = vmul.f32 %v4116, %v4241
        %v4249 = vmul.f32 %v4117, %v4241
        %v4250 = vmul.f32 %v4118, %v4241
        %v4251 = vmul.f32 %v4119, %v4241
        %v4252 = vmul.f32 %v4120, %v4241
        %v4253 = vmul.f32 %v4121, %v4241
        %v4254 = vmul.f32 %v4122, %v4241
        %v4255 = vmul.f32 %v4123, %v4241
        %v4256 = vmul.f32 %v4124, %v4241
        %v4257 = vmul.f32 %v4125, %v4241
        %v4258 = vmul.f32 %v4126, %v4241
        %v4259 = vmul.f32 %v4127, %v4241
        %v4260 = vmul.f32 %v4128, %v4241
        %v4261 = vmul.f32 %v4129, %v4241
        %v4262 = vmul.f32 %v4130, %v4241
        %v4263 = vmul.f32 %v4131, %v4241
        %v4264 = vmul.f32 %v4132, %v4241
        %v4265 = vmul.f32 %v4133, %v4241
        %v4266 = vmul.f32 %v4134, %v4241
        %v4267 = vmul.f32 %v4135, %v4241
        %v4268 = vmul.f32 %v4136, %v4241
        %v4269 = vmul.f32 %v4137, %v4241
        %v4270 = vmul.f32 %v4138, %v4241
        %v4271 = vmul.f32 %v4139, %v4241
        %v4272 = vmul.f32 %v4140, %v4241
        %v4273 = vmul.f32 %v4141, %v4241
        %v4274 = vmul.f32 %v4142, %v4241
        %v4275 = vmul.f32 %v4143, %v4241
        %v4276 = vmul.f32 %v4144, %v4241
        %v4277 = vmul.f32 %v4145, %v4241
        %v4278 = vmul.f32 %v4146, %v4241
        %v4279 = vmul.f32 %v4147, %v4241
        %v4280 = vmul.f32 %v4148, %v4241
        %v4281 = vmul.f32 %v4149, %v4241
        %v4282 = vmul.f32 %v4150, %v4241
        %v4283 = vmul.f32 %v4151, %v4241
        %v4284 = vmul.f32 %v4152, %v4241
        %v4285 = vmul.f32 %v4153, %v4241
        %v4286 = vmul.f32 %v4154, %v4241
        %v4287 = vmul.f32 %v4155, %v4241
        %v4288 = vmul.f32 %v4156, %v4241
        %v4289 = vmul.f32 %v4157, %v4241
        %v4290 = vmul.f32 %v4158, %v4241
        %v4291 = vmul.f32 %v4159, %v4241
        %v4292 = vmul.f32 %v4160, %v4241
        %v4293 = vmul.f32 %v4161, %v4241
        %v4294 = vmul.f32 %v4162, %v4241
        %v4295 = vmul.f32 %v4163, %v4241
        %v4296 = vmul.f32 %v4164, %v4241
        %v4297 = vmul.f32 %v4165, %v4241
        %v4298 = vmul.f32 %v4166, %v4241
        %v4299 = vmul.f32 %v4167, %v4241
        %v4300 = vmul.f32 %v4168, %v4241
        %v4301 = vmul.f32 %v4169, %v4241
        %v4302 = vmul.f32 %v4170, %v4241
        %v4303 = vmul.f32 %v4171, %v4241
        %v4304 = vmul.f32 %v4172, %v4241
        %v4305 = vmul.f32 %v4173, %v4241
        %v4306 = vmul.f32 %v4174, %v4241
        %v4307 = vmul.f32 %v4175, %v4241
        %v4308 = vmul.f32 %v4176, %v4241
        %v4309 = vmul.f32 %v4177, %v4241
        %v4310 = vmul.f32 %v4178, %v4241
        %v4311 = vmul.f32 %v4179, %v4241
        %v4312 = vmul.f32 %v4180, %v4241
        %v4313 = vmul.f32 %v4181, %v4241
        %v4314 = vmul.f32 %v4182, %v4241
        %v4315 = vmul.f32 %v4183, %v4241
        %v4316 = vmul.f32 %v4184, %v4241
        %v4317 = vmul.f32 %v4185, %v4241
        %v4318 = vmul.f32 %v4186, %v4241
        %v4319 = vmul.f32 %v4187, %v4241
        %v4320 = vmul.f32 %v4188, %v4241
        %v4321 = vmul.f32 %v4189, %v4241
        %v4322 = vmul.f32 %v4190, %v4241
        %v4323 = vmul.f32 %v4191, %v4241
        %v4324 = vmul.f32 %v4192, %v4241
        %v4325 = vmul.f32 %v4193, %v4241
        %v4326 = vmul.f32 %v4194, %v4241
        %v4327 = vmul.f32 %v4195, %v4241
        %v4328 = vmul.f32 %v4196, %v4241
        %v4329 = vmul.f32 %v4197, %v4241
        %v4330 = vmul.f32 %v4198, %v4241
        %v4331 = vmul.f32 %v4199, %v4241
        %v4332 = vmul.f32 %v4200, %v4241
        %v4333 = vmul.f32 %v4201, %v4241
        %v4334 = vmul.f32 %v4202, %v4241
        %v4335 = vmul.f32 %v4203, %v4241
        %v4336 = vmul.f32 %v4204, %v4241
        %v4337 = vmul.f32 %v4205, %v4241
        %v4338 = vmul.f32 %v4206, %v4241
        %v4339 = vmul.f32 %v4207, %v4241
        %v4340 = vmul.f32 %v4208, %v4241
        %v4341 = vmul.f32 %v4209, %v4241
        %v4342 = vmul.f32 %v4210, %v4241
        %v4343 = vmul.f32 %v4211, %v4241
        %v4344 = vmul.f32 %v4212, %v4241
        %v4345 = vmul.f32 %v4213, %v4241
        %v4346 = vmul.f32 %v4214, %v4241
        %v4347 = vmul.f32 %v4215, %v4241
        %v4348 = vmul.f32 %v4216, %v4241
        %v4349 = vmul.f32 %v4217, %v4241
        %v4350 = vmul.f32 %v4218, %v4241
        %v4351 = vmul.f32 %v4219, %v4241
        %v4352 = vmul.f32 %v4220, %v4241
        %v4353 = vmul.f32 %v4221, %v4241
        %v4354 = vmul.f32 %v4222, %v4241
        %v4355 = vmul.f32 %v4223, %v4241
        %v4356 = vmul.f32 %v4224, %v4241
        %v4357 = vmul.f32 %v4225, %v4241
        %v4358 = vmul.f32 %v4226, %v4241
        %v4359 = vmul.f32 %v4227, %v4241
        %v4360 = vmul.f32 %v4228, %v4241
        %v4361 = vmul.f32 %v4229, %v4241
        %v4362 = vmul.f32 %v4230, %v4241
        %v4363 = vmul.f32 %v4231, %v4241
        %v4364 = vmul.f32 %v4232, %v4241
        %v4365 = vmul.f32 %v4233, %v4241
        %v4366 = vmul.f32 %v4234, %v4241
        %v4367 = vmul.f32 %v4235, %v4241
        %v4368 = vmul.f32 %v4236, %v4241
        %v4369 = vmul.f32 %v4237, %v4241
        %v4370 = vmul.f32 %v4238, %v4241
        %v4371 = vld [vmem:[%s3] sm:$0x1]
        %v4373 = vperm.slane %v4371, 0
        %v4375 = vadd.f32 %v4243, %v4373
        %v4376 = vadd.f32 %v4244, %v4373
        %v4377 = vadd.f32 %v4245, %v4373
        %v4378 = vadd.f32 %v4246, %v4373
        %v4379 = vadd.f32 %v4247, %v4373
        %v4380 = vadd.f32 %v4248, %v4373
        %v4381 = vadd.f32 %v4249, %v4373
        %v4382 = vadd.f32 %v4250, %v4373
        %v4383 = vadd.f32 %v4251, %v4373
        %v4384 = vadd.f32 %v4252, %v4373
        %v4385 = vadd.f32 %v4253, %v4373
        %v4386 = vadd.f32 %v4254, %v4373
        %v4387 = vadd.f32 %v4255, %v4373
        %v4388 = vadd.f32 %v4256, %v4373
        %v4389 = vadd.f32 %v4257, %v4373
        %v4390 = vadd.f32 %v4258, %v4373
        %v4391 = vadd.f32 %v4259, %v4373
        %v4392 = vadd.f32 %v4260, %v4373
        %v4393 = vadd.f32 %v4261, %v4373
        %v4394 = vadd.f32 %v4262, %v4373
        %v4395 = vadd.f32 %v4263, %v4373
        %v4396 = vadd.f32 %v4264, %v4373
        %v4397 = vadd.f32 %v4265, %v4373
        %v4398 = vadd.f32 %v4266, %v4373
        %v4399 = vadd.f32 %v4267, %v4373
        %v4400 = vadd.f32 %v4268, %v4373
        %v4401 = vadd.f32 %v4269, %v4373
        %v4402 = vadd.f32 %v4270, %v4373
        %v4403 = vadd.f32 %v4271, %v4373
        %v4404 = vadd.f32 %v4272, %v4373
        %v4405 = vadd.f32 %v4273, %v4373
        %v4406 = vadd.f32 %v4274, %v4373
        %v4407 = vadd.f32 %v4275, %v4373
        %v4408 = vadd.f32 %v4276, %v4373
        %v4409 = vadd.f32 %v4277, %v4373
        %v4410 = vadd.f32 %v4278, %v4373
        %v4411 = vadd.f32 %v4279, %v4373
        %v4412 = vadd.f32 %v4280, %v4373
        %v4413 = vadd.f32 %v4281, %v4373
        %v4414 = vadd.f32 %v4282, %v4373
        %v4415 = vadd.f32 %v4283, %v4373
        %v4416 = vadd.f32 %v4284, %v4373
        %v4417 = vadd.f32 %v4285, %v4373
        %v4418 = vadd.f32 %v4286, %v4373
        %v4419 = vadd.f32 %v4287, %v4373
        %v4420 = vadd.f32 %v4288, %v4373
        %v4421 = vadd.f32 %v4289, %v4373
        %v4422 = vadd.f32 %v4290, %v4373
        %v4423 = vadd.f32 %v4291, %v4373
        %v4424 = vadd.f32 %v4292, %v4373
        %v4425 = vadd.f32 %v4293, %v4373
        %v4426 = vadd.f32 %v4294, %v4373
        %v4427 = vadd.f32 %v4295, %v4373
        %v4428 = vadd.f32 %v4296, %v4373
        %v4429 = vadd.f32 %v4297, %v4373
        %v4430 = vadd.f32 %v4298, %v4373
        %v4431 = vadd.f32 %v4299, %v4373
        %v4432 = vadd.f32 %v4300, %v4373
        %v4433 = vadd.f32 %v4301, %v4373
        %v4434 = vadd.f32 %v4302, %v4373
        %v4435 = vadd.f32 %v4303, %v4373
        %v4436 = vadd.f32 %v4304, %v4373
        %v4437 = vadd.f32 %v4305, %v4373
        %v4438 = vadd.f32 %v4306, %v4373
        %v4439 = vadd.f32 %v4307, %v4373
        %v4440 = vadd.f32 %v4308, %v4373
        %v4441 = vadd.f32 %v4309, %v4373
        %v4442 = vadd.f32 %v4310, %v4373
        %v4443 = vadd.f32 %v4311, %v4373
        %v4444 = vadd.f32 %v4312, %v4373
        %v4445 = vadd.f32 %v4313, %v4373
        %v4446 = vadd.f32 %v4314, %v4373
        %v4447 = vadd.f32 %v4315, %v4373
        %v4448 = vadd.f32 %v4316, %v4373
        %v4449 = vadd.f32 %v4317, %v4373
        %v4450 = vadd.f32 %v4318, %v4373
        %v4451 = vadd.f32 %v4319, %v4373
        %v4452 = vadd.f32 %v4320, %v4373
        %v4453 = vadd.f32 %v4321, %v4373
        %v4454 = vadd.f32 %v4322, %v4373
        %v4455 = vadd.f32 %v4323, %v4373
        %v4456 = vadd.f32 %v4324, %v4373
        %v4457 = vadd.f32 %v4325, %v4373
        %v4458 = vadd.f32 %v4326, %v4373
        %v4459 = vadd.f32 %v4327, %v4373
        %v4460 = vadd.f32 %v4328, %v4373
        %v4461 = vadd.f32 %v4329, %v4373
        %v4462 = vadd.f32 %v4330, %v4373
        %v4463 = vadd.f32 %v4331, %v4373
        %v4464 = vadd.f32 %v4332, %v4373
        %v4465 = vadd.f32 %v4333, %v4373
        %v4466 = vadd.f32 %v4334, %v4373
        %v4467 = vadd.f32 %v4335, %v4373
        %v4468 = vadd.f32 %v4336, %v4373
        %v4469 = vadd.f32 %v4337, %v4373
        %v4470 = vadd.f32 %v4338, %v4373
        %v4471 = vadd.f32 %v4339, %v4373
        %v4472 = vadd.f32 %v4340, %v4373
        %v4473 = vadd.f32 %v4341, %v4373
        %v4474 = vadd.f32 %v4342, %v4373
        %v4475 = vadd.f32 %v4343, %v4373
        %v4476 = vadd.f32 %v4344, %v4373
        %v4477 = vadd.f32 %v4345, %v4373
        %v4478 = vadd.f32 %v4346, %v4373
        %v4479 = vadd.f32 %v4347, %v4373
        %v4480 = vadd.f32 %v4348, %v4373
        %v4481 = vadd.f32 %v4349, %v4373
        %v4482 = vadd.f32 %v4350, %v4373
        %v4483 = vadd.f32 %v4351, %v4373
        %v4484 = vadd.f32 %v4352, %v4373
        %v4485 = vadd.f32 %v4353, %v4373
        %v4486 = vadd.f32 %v4354, %v4373
        %v4487 = vadd.f32 %v4355, %v4373
        %v4488 = vadd.f32 %v4356, %v4373
        %v4489 = vadd.f32 %v4357, %v4373
        %v4490 = vadd.f32 %v4358, %v4373
        %v4491 = vadd.f32 %v4359, %v4373
        %v4492 = vadd.f32 %v4360, %v4373
        %v4493 = vadd.f32 %v4361, %v4373
        %v4494 = vadd.f32 %v4362, %v4373
        %v4495 = vadd.f32 %v4363, %v4373
        %v4496 = vadd.f32 %v4364, %v4373
        %v4497 = vadd.f32 %v4365, %v4373
        %v4498 = vadd.f32 %v4366, %v4373
        %v4499 = vadd.f32 %v4367, %v4373
        %v4500 = vadd.f32 %v4368, %v4373
        %v4501 = vadd.f32 %v4369, %v4373
        %v4502 = vadd.f32 %v4370, %v4373
        %v4503 = vld [vmem:[%s4] sm:$0xff]
        %v4504 = vld [vmem:[%s4 + $0x8] sm:$0xff]
        %v4505 = vld [vmem:[%s4 + $0x10] sm:$0xff]
        %v4506 = vld [vmem:[%s4 + $0x18] sm:$0xff]
        %v4507 = vld [vmem:[%s5] sm:$0x1]
        %v4509 = vperm.slane %v4507, 0
        %v4512 = vsel %vm1415, %v4375, 0
        %v4515 = vsel %vm1415, %v4376, 0
        %v4518 = vsel %vm1415, %v4377, 0
        %v4521 = vsel %vm1415, %v4378, 0
        %v4524 = vsel %vm1415, %v4379, 0
        %v4527 = vsel %vm1415, %v4380, 0
        %v4530 = vsel %vm1415, %v4381, 0
        %v4533 = vsel %vm1415, %v4382, 0
        %v4536 = vsel %vm1415, %v4383, 0
        %v4539 = vsel %vm1415, %v4384, 0
        %v4542 = vsel %vm1415, %v4385, 0
        %v4545 = vsel %vm1415, %v4386, 0
        %v4548 = vsel %vm1415, %v4387, 0
        %v4551 = vsel %vm1415, %v4388, 0
        %v4554 = vsel %vm1415, %v4389, 0
        %v4557 = vsel %vm1415, %v4390, 0
        %v4560 = vsel %vm1415, %v4391, 0
        %v4563 = vsel %vm1415, %v4392, 0
        %v4566 = vsel %vm1415, %v4393, 0
        %v4569 = vsel %vm1415, %v4394, 0
        %v4572 = vsel %vm1415, %v4395, 0
        %v4575 = vsel %vm1415, %v4396, 0
        %v4578 = vsel %vm1415, %v4397, 0
        %v4581 = vsel %vm1415, %v4398, 0
        %v4584 = vsel %vm1415, %v4399, 0
        %v4587 = vsel %vm1415, %v4400, 0
        %v4590 = vsel %vm1415, %v4401, 0
        %v4593 = vsel %vm1415, %v4402, 0
        %v4596 = vsel %vm1415, %v4403, 0
        %v4599 = vsel %vm1415, %v4404, 0
        %v4602 = vsel %vm1415, %v4405, 0
        %v4605 = vsel %vm1415, %v4406, 0
        %v4608 = vsel %vm1415, %v4407, 0
        %v4611 = vsel %vm1415, %v4408, 0
        %v4614 = vsel %vm1415, %v4409, 0
        %v4617 = vsel %vm1415, %v4410, 0
        %v4620 = vsel %vm1415, %v4411, 0
        %v4623 = vsel %vm1415, %v4412, 0
        %v4626 = vsel %vm1415, %v4413, 0
        %v4629 = vsel %vm1415, %v4414, 0
        %v4632 = vsel %vm1415, %v4415, 0
        %v4635 = vsel %vm1415, %v4416, 0
        %v4638 = vsel %vm1415, %v4417, 0
        %v4641 = vsel %vm1415, %v4418, 0
        %v4644 = vsel %vm1415, %v4419, 0
        %v4647 = vsel %vm1415, %v4420, 0
        %v4650 = vsel %vm1415, %v4421, 0
        %v4653 = vsel %vm1415, %v4422, 0
        %v4656 = vsel %vm1415, %v4423, 0
        %v4659 = vsel %vm1415, %v4424, 0
        %v4662 = vsel %vm1415, %v4425, 0
        %v4665 = vsel %vm1415, %v4426, 0
        %v4668 = vsel %vm1415, %v4427, 0
        %v4671 = vsel %vm1415, %v4428, 0
        %v4674 = vsel %vm1415, %v4429, 0
        %v4677 = vsel %vm1415, %v4430, 0
        %v4680 = vsel %vm1415, %v4431, 0
        %v4683 = vsel %vm1415, %v4432, 0
        %v4686 = vsel %vm1415, %v4433, 0
        %v4689 = vsel %vm1415, %v4434, 0
        %v4692 = vsel %vm1415, %v4435, 0
        %v4695 = vsel %vm1415, %v4436, 0
        %v4698 = vsel %vm1415, %v4437, 0
        %v4701 = vsel %vm1415, %v4438, 0
        %v4704 = vsel %vm1415, %v4439, 0
        %v4707 = vsel %vm1415, %v4440, 0
        %v4710 = vsel %vm1415, %v4441, 0
        %v4713 = vsel %vm1415, %v4442, 0
        %v4716 = vsel %vm1415, %v4443, 0
        %v4719 = vsel %vm1415, %v4444, 0
        %v4722 = vsel %vm1415, %v4445, 0
        %v4725 = vsel %vm1415, %v4446, 0
        %v4728 = vsel %vm1415, %v4447, 0
        %v4731 = vsel %vm1415, %v4448, 0
        %v4734 = vsel %vm1415, %v4449, 0
        %v4737 = vsel %vm1415, %v4450, 0
        %v4740 = vsel %vm1415, %v4451, 0
        %v4743 = vsel %vm1415, %v4452, 0
        %v4746 = vsel %vm1415, %v4453, 0
        %v4749 = vsel %vm1415, %v4454, 0
        %v4752 = vsel %vm1415, %v4455, 0
        %v4755 = vsel %vm1415, %v4456, 0
        %v4758 = vsel %vm1415, %v4457, 0
        %v4761 = vsel %vm1415, %v4458, 0
        %v4764 = vsel %vm1415, %v4459, 0
        %v4767 = vsel %vm1415, %v4460, 0
        %v4770 = vsel %vm1415, %v4461, 0
        %v4773 = vsel %vm1415, %v4462, 0
        %v4776 = vsel %vm1415, %v4463, 0
        %v4779 = vsel %vm1415, %v4464, 0
        %v4782 = vsel %vm1415, %v4465, 0
        %v4785 = vsel %vm1415, %v4466, 0
        %v4788 = vsel %vm1415, %v4467, 0
        %v4791 = vsel %vm1415, %v4468, 0
        %v4794 = vsel %vm1415, %v4469, 0
        %v4797 = vsel %vm1415, %v4470, 0
        %v4800 = vsel %vm1415, %v4471, 0
        %v4803 = vsel %vm1415, %v4472, 0
        %v4806 = vsel %vm1415, %v4473, 0
        %v4809 = vsel %vm1415, %v4474, 0
        %v4812 = vsel %vm1415, %v4475, 0
        %v4815 = vsel %vm1415, %v4476, 0
        %v4818 = vsel %vm1415, %v4477, 0
        %v4821 = vsel %vm1415, %v4478, 0
        %v4824 = vsel %vm1415, %v4479, 0
        %v4827 = vsel %vm1415, %v4480, 0
        %v4830 = vsel %vm1415, %v4481, 0
        %v4833 = vsel %vm1415, %v4482, 0
        %v4836 = vsel %vm1415, %v4483, 0
        %v4839 = vsel %vm1415, %v4484, 0
        %v4842 = vsel %vm1415, %v4485, 0
        %v4845 = vsel %vm1415, %v4486, 0
        %v4848 = vsel %vm1415, %v4487, 0
        %v4851 = vsel %vm1415, %v4488, 0
        %v4854 = vsel %vm1415, %v4489, 0
        %v4857 = vsel %vm1415, %v4490, 0
        %v4860 = vsel %vm1415, %v4491, 0
        %v4863 = vsel %vm1415, %v4492, 0
        %v4866 = vsel %vm1415, %v4493, 0
        %v4869 = vsel %vm1415, %v4494, 0
        %v4872 = vsel %vm1415, %v4495, 0
        %v4875 = vsel %vm1415, %v4496, 0
        %v4878 = vsel %vm1415, %v4497, 0
        %v4881 = vsel %vm1415, %v4498, 0
        %v4884 = vsel %vm1415, %v4499, 0
        %v4887 = vsel %vm1415, %v4500, 0
        %v4890 = vsel %vm1415, %v4501, 0
        %v4893 = vsel %vm1415, %v4502, 0
        %4895 = vmatpush.msra.mxu0 0.0
        %4896 = vmatpush.msra.mxu0 0.0
        %4897 = vmatpush.msra.mxu0 0.0
        %4898 = vmatpush.msra.mxu0 0.0
        %4899 = vmatpush.msra.mxu0 0.0
        %4900 = vmatpush.msra.mxu0 0.0
        %4901 = vmatpush.msra.mxu0 0.0
        %4902 = vmatpush.msra.mxu0 0.0
        %4903 = vmatpush.msra.mxu0 0.0
        %4904 = vmatpush.msra.mxu0 0.0
        %4905 = vmatpush.msra.mxu0 0.0
        %4906 = vmatpush.msra.mxu0 0.0
        %4907 = vmatpush.msra.mxu0 %v4506
        %4908 = vmatpush.msra.mxu0 %v4505
        %4909 = vmatpush.msra.mxu0 %v4504
        %4910 = vmatpush.msra.mxu0 %v4503
        %4911 = vmatmul.f32.gmra.mxu0 %v4512
        %v4912 = vpop.f32.mrf.mxu0
        %v4913 = vadd.f32 %v4509, %v4912
        %4914 = vmatmul.f32.gmra.mxu0 %v4515
        %v4915 = vpop.f32.mrf.mxu0
        %v4916 = vadd.f32 %v4509, %v4915
        %4917 = vmatmul.f32.gmra.mxu0 %v4518
        %v4918 = vpop.f32.mrf.mxu0
        %v4919 = vadd.f32 %v4509, %v4918
        %4920 = vmatmul.f32.gmra.mxu0 %v4521
        %v4921 = vpop.f32.mrf.mxu0
        %v4922 = vadd.f32 %v4509, %v4921
        %4923 = vmatmul.f32.gmra.mxu0 %v4524
        %v4924 = vpop.f32.mrf.mxu0
        %v4925 = vadd.f32 %v4509, %v4924
        %4926 = vmatmul.f32.gmra.mxu0 %v4527
        %v4927 = vpop.f32.mrf.mxu0
        %v4928 = vadd.f32 %v4509, %v4927
        %4929 = vmatmul.f32.gmra.mxu0 %v4530
        %v4930 = vpop.f32.mrf.mxu0
        %v4931 = vadd.f32 %v4509, %v4930
        %4932 = vmatmul.f32.gmra.mxu0 %v4533
        %v4933 = vpop.f32.mrf.mxu0
        %v4934 = vadd.f32 %v4509, %v4933
        %4935 = vmatmul.f32.gmra.mxu0 %v4536
        %v4936 = vpop.f32.mrf.mxu0
        %v4937 = vadd.f32 %v4509, %v4936
        %4938 = vmatmul.f32.gmra.mxu0 %v4539
        %v4939 = vpop.f32.mrf.mxu0
        %v4940 = vadd.f32 %v4509, %v4939
        %4941 = vmatmul.f32.gmra.mxu0 %v4542
        %v4942 = vpop.f32.mrf.mxu0
        %v4943 = vadd.f32 %v4509, %v4942
        %4944 = vmatmul.f32.gmra.mxu0 %v4545
        %v4945 = vpop.f32.mrf.mxu0
        %v4946 = vadd.f32 %v4509, %v4945
        %4947 = vmatmul.f32.gmra.mxu0 %v4548
        %v4948 = vpop.f32.mrf.mxu0
        %v4949 = vadd.f32 %v4509, %v4948
        %4950 = vmatmul.f32.gmra.mxu0 %v4551
        %v4951 = vpop.f32.mrf.mxu0
        %v4952 = vadd.f32 %v4509, %v4951
        %4953 = vmatmul.f32.gmra.mxu0 %v4554
        %v4954 = vpop.f32.mrf.mxu0
        %v4955 = vadd.f32 %v4509, %v4954
        %4956 = vmatmul.f32.gmra.mxu0 %v4557
        %v4957 = vpop.f32.mrf.mxu0
        %v4958 = vadd.f32 %v4509, %v4957
        %4959 = vmatmul.f32.gmra.mxu0 %v4560
        %v4960 = vpop.f32.mrf.mxu0
        %v4961 = vadd.f32 %v4509, %v4960
        %4962 = vmatmul.f32.gmra.mxu0 %v4563
        %v4963 = vpop.f32.mrf.mxu0
        %v4964 = vadd.f32 %v4509, %v4963
        %4965 = vmatmul.f32.gmra.mxu0 %v4566
        %v4966 = vpop.f32.mrf.mxu0
        %v4967 = vadd.f32 %v4509, %v4966
        %4968 = vmatmul.f32.gmra.mxu0 %v4569
        %v4969 = vpop.f32.mrf.mxu0
        %v4970 = vadd.f32 %v4509, %v4969
        %4971 = vmatmul.f32.gmra.mxu0 %v4572
        %v4972 = vpop.f32.mrf.mxu0
        %v4973 = vadd.f32 %v4509, %v4972
        %4974 = vmatmul.f32.gmra.mxu0 %v4575
        %v4975 = vpop.f32.mrf.mxu0
        %v4976 = vadd.f32 %v4509, %v4975
        %4977 = vmatmul.f32.gmra.mxu0 %v4578
        %v4978 = vpop.f32.mrf.mxu0
        %v4979 = vadd.f32 %v4509, %v4978
        %4980 = vmatmul.f32.gmra.mxu0 %v4581
        %v4981 = vpop.f32.mrf.mxu0
        %v4982 = vadd.f32 %v4509, %v4981
        %4983 = vmatmul.f32.gmra.mxu0 %v4584
        %v4984 = vpop.f32.mrf.mxu0
        %v4985 = vadd.f32 %v4509, %v4984
        %4986 = vmatmul.f32.gmra.mxu0 %v4587
        %v4987 = vpop.f32.mrf.mxu0
        %v4988 = vadd.f32 %v4509, %v4987
        %4989 = vmatmul.f32.gmra.mxu0 %v4590
        %v4990 = vpop.f32.mrf.mxu0
        %v4991 = vadd.f32 %v4509, %v4990
        %4992 = vmatmul.f32.gmra.mxu0 %v4593
        %v4993 = vpop.f32.mrf.mxu0
        %v4994 = vadd.f32 %v4509, %v4993
        %4995 = vmatmul.f32.gmra.mxu0 %v4596
        %v4996 = vpop.f32.mrf.mxu0
        %v4997 = vadd.f32 %v4509, %v4996
        %4998 = vmatmul.f32.gmra.mxu0 %v4599
        %v4999 = vpop.f32.mrf.mxu0
        %v5000 = vadd.f32 %v4509, %v4999
        %5001 = vmatmul.f32.gmra.mxu0 %v4602
        %v5002 = vpop.f32.mrf.mxu0
        %v5003 = vadd.f32 %v4509, %v5002
        %5004 = vmatmul.f32.gmra.mxu0 %v4605
        %v5005 = vpop.f32.mrf.mxu0
        %v5006 = vadd.f32 %v4509, %v5005
        %5007 = vmatmul.f32.gmra.mxu0 %v4608
        %v5008 = vpop.f32.mrf.mxu0
        %v5009 = vadd.f32 %v4509, %v5008
        %5010 = vmatmul.f32.gmra.mxu0 %v4611
        %v5011 = vpop.f32.mrf.mxu0
        %v5012 = vadd.f32 %v4509, %v5011
        %5013 = vmatmul.f32.gmra.mxu0 %v4614
        %v5014 = vpop.f32.mrf.mxu0
        %v5015 = vadd.f32 %v4509, %v5014
        %5016 = vmatmul.f32.gmra.mxu0 %v4617
        %v5017 = vpop.f32.mrf.mxu0
        %v5018 = vadd.f32 %v4509, %v5017
        %5019 = vmatmul.f32.gmra.mxu0 %v4620
        %v5020 = vpop.f32.mrf.mxu0
        %v5021 = vadd.f32 %v4509, %v5020
        %5022 = vmatmul.f32.gmra.mxu0 %v4623
        %v5023 = vpop.f32.mrf.mxu0
        %v5024 = vadd.f32 %v4509, %v5023
        %5025 = vmatmul.f32.gmra.mxu0 %v4626
        %v5026 = vpop.f32.mrf.mxu0
        %v5027 = vadd.f32 %v4509, %v5026
        %5028 = vmatmul.f32.gmra.mxu0 %v4629
        %v5029 = vpop.f32.mrf.mxu0
        %v5030 = vadd.f32 %v4509, %v5029
        %5031 = vmatmul.f32.gmra.mxu0 %v4632
        %v5032 = vpop.f32.mrf.mxu0
        %v5033 = vadd.f32 %v4509, %v5032
        %5034 = vmatmul.f32.gmra.mxu0 %v4635
        %v5035 = vpop.f32.mrf.mxu0
        %v5036 = vadd.f32 %v4509, %v5035
        %5037 = vmatmul.f32.gmra.mxu0 %v4638
        %v5038 = vpop.f32.mrf.mxu0
        %v5039 = vadd.f32 %v4509, %v5038
        %5040 = vmatmul.f32.gmra.mxu0 %v4641
        %v5041 = vpop.f32.mrf.mxu0
        %v5042 = vadd.f32 %v4509, %v5041
        %5043 = vmatmul.f32.gmra.mxu0 %v4644
        %v5044 = vpop.f32.mrf.mxu0
        %v5045 = vadd.f32 %v4509, %v5044
        %5046 = vmatmul.f32.gmra.mxu0 %v4647
        %v5047 = vpop.f32.mrf.mxu0
        %v5048 = vadd.f32 %v4509, %v5047
        %5049 = vmatmul.f32.gmra.mxu0 %v4650
        %v5050 = vpop.f32.mrf.mxu0
        %v5051 = vadd.f32 %v4509, %v5050
        %5052 = vmatmul.f32.gmra.mxu0 %v4653
        %v5053 = vpop.f32.mrf.mxu0
        %v5054 = vadd.f32 %v4509, %v5053
        %5055 = vmatmul.f32.gmra.mxu0 %v4656
        %v5056 = vpop.f32.mrf.mxu0
        %v5057 = vadd.f32 %v4509, %v5056
        %5058 = vmatmul.f32.gmra.mxu0 %v4659
        %v5059 = vpop.f32.mrf.mxu0
        %v5060 = vadd.f32 %v4509, %v5059
        %5061 = vmatmul.f32.gmra.mxu0 %v4662
        %v5062 = vpop.f32.mrf.mxu0
        %v5063 = vadd.f32 %v4509, %v5062
        %5064 = vmatmul.f32.gmra.mxu0 %v4665
        %v5065 = vpop.f32.mrf.mxu0
        %v5066 = vadd.f32 %v4509, %v5065
        %5067 = vmatmul.f32.gmra.mxu0 %v4668
        %v5068 = vpop.f32.mrf.mxu0
        %v5069 = vadd.f32 %v4509, %v5068
        %5070 = vmatmul.f32.gmra.mxu0 %v4671
        %v5071 = vpop.f32.mrf.mxu0
        %v5072 = vadd.f32 %v4509, %v5071
        %5073 = vmatmul.f32.gmra.mxu0 %v4674
        %v5074 = vpop.f32.mrf.mxu0
        %v5075 = vadd.f32 %v4509, %v5074
        %5076 = vmatmul.f32.gmra.mxu0 %v4677
        %v5077 = vpop.f32.mrf.mxu0
        %v5078 = vadd.f32 %v4509, %v5077
        %5079 = vmatmul.f32.gmra.mxu0 %v4680
        %v5080 = vpop.f32.mrf.mxu0
        %v5081 = vadd.f32 %v4509, %v5080
        %5082 = vmatmul.f32.gmra.mxu0 %v4683
        %v5083 = vpop.f32.mrf.mxu0
        %v5084 = vadd.f32 %v4509, %v5083
        %5085 = vmatmul.f32.gmra.mxu0 %v4686
        %v5086 = vpop.f32.mrf.mxu0
        %v5087 = vadd.f32 %v4509, %v5086
        %5088 = vmatmul.f32.gmra.mxu0 %v4689
        %v5089 = vpop.f32.mrf.mxu0
        %v5090 = vadd.f32 %v4509, %v5089
        %5091 = vmatmul.f32.gmra.mxu0 %v4692
        %v5092 = vpop.f32.mrf.mxu0
        %v5093 = vadd.f32 %v4509, %v5092
        %5094 = vmatmul.f32.gmra.mxu0 %v4695
        %v5095 = vpop.f32.mrf.mxu0
        %v5096 = vadd.f32 %v4509, %v5095
        %5097 = vmatmul.f32.gmra.mxu0 %v4698
        %v5098 = vpop.f32.mrf.mxu0
        %v5099 = vadd.f32 %v4509, %v5098
        %5100 = vmatmul.f32.gmra.mxu0 %v4701
        %v5101 = vpop.f32.mrf.mxu0
        %v5102 = vadd.f32 %v4509, %v5101
        %5103 = vmatmul.f32.gmra.mxu0 %v4704
        %v5104 = vpop.f32.mrf.mxu0
        %v5105 = vadd.f32 %v4509, %v5104
        %5106 = vmatmul.f32.gmra.mxu0 %v4707
        %v5107 = vpop.f32.mrf.mxu0
        %v5108 = vadd.f32 %v4509, %v5107
        %5109 = vmatmul.f32.gmra.mxu0 %v4710
        %v5110 = vpop.f32.mrf.mxu0
        %v5111 = vadd.f32 %v4509, %v5110
        %5112 = vmatmul.f32.gmra.mxu0 %v4713
        %v5113 = vpop.f32.mrf.mxu0
        %v5114 = vadd.f32 %v4509, %v5113
        %5115 = vmatmul.f32.gmra.mxu0 %v4716
        %v5116 = vpop.f32.mrf.mxu0
        %v5117 = vadd.f32 %v4509, %v5116
        %5118 = vmatmul.f32.gmra.mxu0 %v4719
        %v5119 = vpop.f32.mrf.mxu0
        %v5120 = vadd.f32 %v4509, %v5119
        %5121 = vmatmul.f32.gmra.mxu0 %v4722
        %v5122 = vpop.f32.mrf.mxu0
        %v5123 = vadd.f32 %v4509, %v5122
        %5124 = vmatmul.f32.gmra.mxu0 %v4725
        %v5125 = vpop.f32.mrf.mxu0
        %v5126 = vadd.f32 %v4509, %v5125
        %5127 = vmatmul.f32.gmra.mxu0 %v4728
        %v5128 = vpop.f32.mrf.mxu0
        %v5129 = vadd.f32 %v4509, %v5128
        %5130 = vmatmul.f32.gmra.mxu0 %v4731
        %v5131 = vpop.f32.mrf.mxu0
        %v5132 = vadd.f32 %v4509, %v5131
        %5133 = vmatmul.f32.gmra.mxu0 %v4734
        %v5134 = vpop.f32.mrf.mxu0
        %v5135 = vadd.f32 %v4509, %v5134
        %5136 = vmatmul.f32.gmra.mxu0 %v4737
        %v5137 = vpop.f32.mrf.mxu0
        %v5138 = vadd.f32 %v4509, %v5137
        %5139 = vmatmul.f32.gmra.mxu0 %v4740
        %v5140 = vpop.f32.mrf.mxu0
        %v5141 = vadd.f32 %v4509, %v5140
        %5142 = vmatmul.f32.gmra.mxu0 %v4743
        %v5143 = vpop.f32.mrf.mxu0
        %v5144 = vadd.f32 %v4509, %v5143
        %5145 = vmatmul.f32.gmra.mxu0 %v4746
        %v5146 = vpop.f32.mrf.mxu0
        %v5147 = vadd.f32 %v4509, %v5146
        %5148 = vmatmul.f32.gmra.mxu0 %v4749
        %v5149 = vpop.f32.mrf.mxu0
        %v5150 = vadd.f32 %v4509, %v5149
        %5151 = vmatmul.f32.gmra.mxu0 %v4752
        %v5152 = vpop.f32.mrf.mxu0
        %v5153 = vadd.f32 %v4509, %v5152
        %5154 = vmatmul.f32.gmra.mxu0 %v4755
        %v5155 = vpop.f32.mrf.mxu0
        %v5156 = vadd.f32 %v4509, %v5155
        %5157 = vmatmul.f32.gmra.mxu0 %v4758
        %v5158 = vpop.f32.mrf.mxu0
        %v5159 = vadd.f32 %v4509, %v5158
        %5160 = vmatmul.f32.gmra.mxu0 %v4761
        %v5161 = vpop.f32.mrf.mxu0
        %v5162 = vadd.f32 %v4509, %v5161
        %5163 = vmatmul.f32.gmra.mxu0 %v4764
        %v5164 = vpop.f32.mrf.mxu0
        %v5165 = vadd.f32 %v4509, %v5164
        %5166 = vmatmul.f32.gmra.mxu0 %v4767
        %v5167 = vpop.f32.mrf.mxu0
        %v5168 = vadd.f32 %v4509, %v5167
        %5169 = vmatmul.f32.gmra.mxu0 %v4770
        %v5170 = vpop.f32.mrf.mxu0
        %v5171 = vadd.f32 %v4509, %v5170
        %5172 = vmatmul.f32.gmra.mxu0 %v4773
        %v5173 = vpop.f32.mrf.mxu0
        %v5174 = vadd.f32 %v4509, %v5173
        %5175 = vmatmul.f32.gmra.mxu0 %v4776
        %v5176 = vpop.f32.mrf.mxu0
        %v5177 = vadd.f32 %v4509, %v5176
        %5178 = vmatmul.f32.gmra.mxu0 %v4779
        %v5179 = vpop.f32.mrf.mxu0
        %v5180 = vadd.f32 %v4509, %v5179
        %5181 = vmatmul.f32.gmra.mxu0 %v4782
        %v5182 = vpop.f32.mrf.mxu0
        %v5183 = vadd.f32 %v4509, %v5182
        %5184 = vmatmul.f32.gmra.mxu0 %v4785
        %v5185 = vpop.f32.mrf.mxu0
        %v5186 = vadd.f32 %v4509, %v5185
        %5187 = vmatmul.f32.gmra.mxu0 %v4788
        %v5188 = vpop.f32.mrf.mxu0
        %v5189 = vadd.f32 %v4509, %v5188
        %5190 = vmatmul.f32.gmra.mxu0 %v4791
        %v5191 = vpop.f32.mrf.mxu0
        %v5192 = vadd.f32 %v4509, %v5191
        %5193 = vmatmul.f32.gmra.mxu0 %v4794
        %v5194 = vpop.f32.mrf.mxu0
        %v5195 = vadd.f32 %v4509, %v5194
        %5196 = vmatmul.f32.gmra.mxu0 %v4797
        %v5197 = vpop.f32.mrf.mxu0
        %v5198 = vadd.f32 %v4509, %v5197
        %5199 = vmatmul.f32.gmra.mxu0 %v4800
        %v5200 = vpop.f32.mrf.mxu0
        %v5201 = vadd.f32 %v4509, %v5200
        %5202 = vmatmul.f32.gmra.mxu0 %v4803
        %v5203 = vpop.f32.mrf.mxu0
        %v5204 = vadd.f32 %v4509, %v5203
        %5205 = vmatmul.f32.gmra.mxu0 %v4806
        %v5206 = vpop.f32.mrf.mxu0
        %v5207 = vadd.f32 %v4509, %v5206
        %5208 = vmatmul.f32.gmra.mxu0 %v4809
        %v5209 = vpop.f32.mrf.mxu0
        %v5210 = vadd.f32 %v4509, %v5209
        %5211 = vmatmul.f32.gmra.mxu0 %v4812
        %v5212 = vpop.f32.mrf.mxu0
        %v5213 = vadd.f32 %v4509, %v5212
        %5214 = vmatmul.f32.gmra.mxu0 %v4815
        %v5215 = vpop.f32.mrf.mxu0
        %v5216 = vadd.f32 %v4509, %v5215
        %5217 = vmatmul.f32.gmra.mxu0 %v4818
        %v5218 = vpop.f32.mrf.mxu0
        %v5219 = vadd.f32 %v4509, %v5218
        %5220 = vmatmul.f32.gmra.mxu0 %v4821
        %v5221 = vpop.f32.mrf.mxu0
        %v5222 = vadd.f32 %v4509, %v5221
        %5223 = vmatmul.f32.gmra.mxu0 %v4824
        %v5224 = vpop.f32.mrf.mxu0
        %v5225 = vadd.f32 %v4509, %v5224
        %5226 = vmatmul.f32.gmra.mxu0 %v4827
        %v5227 = vpop.f32.mrf.mxu0
        %v5228 = vadd.f32 %v4509, %v5227
        %5229 = vmatmul.f32.gmra.mxu0 %v4830
        %v5230 = vpop.f32.mrf.mxu0
        %v5231 = vadd.f32 %v4509, %v5230
        %5232 = vmatmul.f32.gmra.mxu0 %v4833
        %v5233 = vpop.f32.mrf.mxu0
        %v5234 = vadd.f32 %v4509, %v5233
        %5235 = vmatmul.f32.gmra.mxu0 %v4836
        %v5236 = vpop.f32.mrf.mxu0
        %v5237 = vadd.f32 %v4509, %v5236
        %5238 = vmatmul.f32.gmra.mxu0 %v4839
        %v5239 = vpop.f32.mrf.mxu0
        %v5240 = vadd.f32 %v4509, %v5239
        %5241 = vmatmul.f32.gmra.mxu0 %v4842
        %v5242 = vpop.f32.mrf.mxu0
        %v5243 = vadd.f32 %v4509, %v5242
        %5244 = vmatmul.f32.gmra.mxu0 %v4845
        %v5245 = vpop.f32.mrf.mxu0
        %v5246 = vadd.f32 %v4509, %v5245
        %5247 = vmatmul.f32.gmra.mxu0 %v4848
        %v5248 = vpop.f32.mrf.mxu0
        %v5249 = vadd.f32 %v4509, %v5248
        %5250 = vmatmul.f32.gmra.mxu0 %v4851
        %v5251 = vpop.f32.mrf.mxu0
        %v5252 = vadd.f32 %v4509, %v5251
        %5253 = vmatmul.f32.gmra.mxu0 %v4854
        %v5254 = vpop.f32.mrf.mxu0
        %v5255 = vadd.f32 %v4509, %v5254
        %5256 = vmatmul.f32.gmra.mxu0 %v4857
        %v5257 = vpop.f32.mrf.mxu0
        %v5258 = vadd.f32 %v4509, %v5257
        %5259 = vmatmul.f32.gmra.mxu0 %v4860
        %v5260 = vpop.f32.mrf.mxu0
        %v5261 = vadd.f32 %v4509, %v5260
        %5262 = vmatmul.f32.gmra.mxu0 %v4863
        %v5263 = vpop.f32.mrf.mxu0
        %v5264 = vadd.f32 %v4509, %v5263
        %5265 = vmatmul.f32.gmra.mxu0 %v4866
        %v5266 = vpop.f32.mrf.mxu0
        %v5267 = vadd.f32 %v4509, %v5266
        %5268 = vmatmul.f32.gmra.mxu0 %v4869
        %v5269 = vpop.f32.mrf.mxu0
        %v5270 = vadd.f32 %v4509, %v5269
        %5271 = vmatmul.f32.gmra.mxu0 %v4872
        %v5272 = vpop.f32.mrf.mxu0
        %v5273 = vadd.f32 %v4509, %v5272
        %5274 = vmatmul.f32.gmra.mxu0 %v4875
        %v5275 = vpop.f32.mrf.mxu0
        %v5276 = vadd.f32 %v4509, %v5275
        %5277 = vmatmul.f32.gmra.mxu0 %v4878
        %v5278 = vpop.f32.mrf.mxu0
        %v5279 = vadd.f32 %v4509, %v5278
        %5280 = vmatmul.f32.gmra.mxu0 %v4881
        %v5281 = vpop.f32.mrf.mxu0
        %v5282 = vadd.f32 %v4509, %v5281
        %5283 = vmatmul.f32.gmra.mxu0 %v4884
        %v5284 = vpop.f32.mrf.mxu0
        %v5285 = vadd.f32 %v4509, %v5284
        %5286 = vmatmul.f32.gmra.mxu0 %v4887
        %v5287 = vpop.f32.mrf.mxu0
        %v5288 = vadd.f32 %v4509, %v5287
        %5289 = vmatmul.f32.gmra.mxu0 %v4890
        %v5290 = vpop.f32.mrf.mxu0
        %v5291 = vadd.f32 %v4509, %v5290
        %5292 = vmatmul.f32.gmra.mxu0 %v4893
        %v5293 = vpop.f32.mrf.mxu0
        %v5294 = vadd.f32 %v4509, %v5293
        %5295 = vdwg.mxu0
        %v5296 = vld [vmem:[#allocation2] sm:$0x1]
        %v5297 = vld [vmem:[%s6] sm:$0xff]
        %v5298 = vld [vmem:[%s6 + $0x8] sm:$0xff]
        %v5299 = vld [vmem:[%s6 + $0x10] sm:$0xff]
        %v5300 = vld [vmem:[%s6 + $0x18] sm:$0xff]
        %v5301 = vld [vmem:[%s6 + $0x20] sm:$0xff]
        %v5302 = vld [vmem:[%s6 + $0x28] sm:$0xff]
        %v5303 = vld [vmem:[%s6 + $0x30] sm:$0xff]
        %v5304 = vld [vmem:[%s6 + $0x38] sm:$0xff]
        %v5305 = vld [vmem:[%s6 + $0x40] sm:$0xff]
        %v5306 = vld [vmem:[%s6 + $0x48] sm:$0xff]
        %v5307 = vld [vmem:[%s6 + $0x50] sm:$0xff]
        %v5308 = vld [vmem:[%s6 + $0x58] sm:$0xff]
        %v5309 = vld [vmem:[%s6 + $0x60] sm:$0xff]
        %v5310 = vld [vmem:[%s6 + $0x68] sm:$0xff]
        %v5311 = vld [vmem:[%s6 + $0x70] sm:$0xff]
        %v5312 = vld [vmem:[%s6 + $0x78] sm:$0xff]
        %v5313 = vld [vmem:[%s6 + $0x80] sm:$0xff]
        %v5314 = vld [vmem:[%s6 + $0x88] sm:$0xff]
        %v5315 = vld [vmem:[%s6 + $0x90] sm:$0xff]
        %v5316 = vld [vmem:[%s6 + $0x98] sm:$0xff]
        %v5317 = vld [vmem:[%s6 + $0xa0] sm:$0xff]
        %v5318 = vld [vmem:[%s6 + $0xa8] sm:$0xff]
        %v5319 = vld [vmem:[%s6 + $0xb0] sm:$0xff]
        %v5320 = vld [vmem:[%s6 + $0xb8] sm:$0xff]
        %v5321 = vld [vmem:[%s6 + $0xc0] sm:$0xff]
        %v5322 = vld [vmem:[%s6 + $0xc8] sm:$0xff]
        %v5323 = vld [vmem:[%s6 + $0xd0] sm:$0xff]
        %v5324 = vld [vmem:[%s6 + $0xd8] sm:$0xff]
        %v5325 = vld [vmem:[%s6 + $0xe0] sm:$0xff]
        %v5326 = vld [vmem:[%s6 + $0xe8] sm:$0xff]
        %v5327 = vld [vmem:[%s6 + $0xf0] sm:$0xff]
        %v5328 = vld [vmem:[%s6 + $0xf8] sm:$0xff]
        %v5329 = vld [vmem:[%s6 + $0x100] sm:$0xff]
        %v5330 = vld [vmem:[%s6 + $0x108] sm:$0xff]
        %v5331 = vld [vmem:[%s6 + $0x110] sm:$0xff]
        %v5332 = vld [vmem:[%s6 + $0x118] sm:$0xff]
        %v5333 = vld [vmem:[%s6 + $0x120] sm:$0xff]
        %v5334 = vld [vmem:[%s6 + $0x128] sm:$0xff]
        %v5335 = vld [vmem:[%s6 + $0x130] sm:$0xff]
        %v5336 = vld [vmem:[%s6 + $0x138] sm:$0xff]
        %v5337 = vld [vmem:[%s6 + $0x140] sm:$0xff]
        %v5338 = vld [vmem:[%s6 + $0x148] sm:$0xff]
        %v5339 = vld [vmem:[%s6 + $0x150] sm:$0xff]
        %v5340 = vld [vmem:[%s6 + $0x158] sm:$0xff]
        %v5341 = vld [vmem:[%s6 + $0x160] sm:$0xff]
        %v5342 = vld [vmem:[%s6 + $0x168] sm:$0xff]
        %v5343 = vld [vmem:[%s6 + $0x170] sm:$0xff]
        %v5344 = vld [vmem:[%s6 + $0x178] sm:$0xff]
        %v5345 = vld [vmem:[%s6 + $0x180] sm:$0xff]
        %v5346 = vld [vmem:[%s6 + $0x188] sm:$0xff]
        %v5347 = vld [vmem:[%s6 + $0x190] sm:$0xff]
        %v5348 = vld [vmem:[%s6 + $0x198] sm:$0xff]
        %v5349 = vld [vmem:[%s6 + $0x1a0] sm:$0xff]
        %v5350 = vld [vmem:[%s6 + $0x1a8] sm:$0xff]
        %v5351 = vld [vmem:[%s6 + $0x1b0] sm:$0xff]
        %v5352 = vld [vmem:[%s6 + $0x1b8] sm:$0xff]
        %v5353 = vld [vmem:[%s6 + $0x1c0] sm:$0xff]
        %v5354 = vld [vmem:[%s6 + $0x1c8] sm:$0xff]
        %v5355 = vld [vmem:[%s6 + $0x1d0] sm:$0xff]
        %v5356 = vld [vmem:[%s6 + $0x1d8] sm:$0xff]
        %v5357 = vld [vmem:[%s6 + $0x1e0] sm:$0xff]
        %v5358 = vld [vmem:[%s6 + $0x1e8] sm:$0xff]
        %v5359 = vld [vmem:[%s6 + $0x1f0] sm:$0xff]
        %v5360 = vld [vmem:[%s6 + $0x1f8] sm:$0xff]
        %v5361 = vld [vmem:[%s6 + $0x200] sm:$0xff]
        %v5362 = vld [vmem:[%s6 + $0x208] sm:$0xff]
        %v5363 = vld [vmem:[%s6 + $0x210] sm:$0xff]
        %v5364 = vld [vmem:[%s6 + $0x218] sm:$0xff]
        %v5365 = vld [vmem:[%s6 + $0x220] sm:$0xff]
        %v5366 = vld [vmem:[%s6 + $0x228] sm:$0xff]
        %v5367 = vld [vmem:[%s6 + $0x230] sm:$0xff]
        %v5368 = vld [vmem:[%s6 + $0x238] sm:$0xff]
        %v5369 = vld [vmem:[%s6 + $0x240] sm:$0xff]
        %v5370 = vld [vmem:[%s6 + $0x248] sm:$0xff]
        %v5371 = vld [vmem:[%s6 + $0x250] sm:$0xff]
        %v5372 = vld [vmem:[%s6 + $0x258] sm:$0xff]
        %v5373 = vld [vmem:[%s6 + $0x260] sm:$0xff]
        %v5374 = vld [vmem:[%s6 + $0x268] sm:$0xff]
        %v5375 = vld [vmem:[%s6 + $0x270] sm:$0xff]
        %v5376 = vld [vmem:[%s6 + $0x278] sm:$0xff]
        %v5377 = vld [vmem:[%s6 + $0x280] sm:$0xff]
        %v5378 = vld [vmem:[%s6 + $0x288] sm:$0xff]
        %v5379 = vld [vmem:[%s6 + $0x290] sm:$0xff]
        %v5380 = vld [vmem:[%s6 + $0x298] sm:$0xff]
        %v5381 = vld [vmem:[%s6 + $0x2a0] sm:$0xff]
        %v5382 = vld [vmem:[%s6 + $0x2a8] sm:$0xff]
        %v5383 = vld [vmem:[%s6 + $0x2b0] sm:$0xff]
        %v5384 = vld [vmem:[%s6 + $0x2b8] sm:$0xff]
        %v5385 = vld [vmem:[%s6 + $0x2c0] sm:$0xff]
        %v5386 = vld [vmem:[%s6 + $0x2c8] sm:$0xff]
        %v5387 = vld [vmem:[%s6 + $0x2d0] sm:$0xff]
        %v5388 = vld [vmem:[%s6 + $0x2d8] sm:$0xff]
        %v5389 = vld [vmem:[%s6 + $0x2e0] sm:$0xff]
        %v5390 = vld [vmem:[%s6 + $0x2e8] sm:$0xff]
        %v5391 = vld [vmem:[%s6 + $0x2f0] sm:$0xff]
        %v5392 = vld [vmem:[%s6 + $0x2f8] sm:$0xff]
        %v5393 = vld [vmem:[%s6 + $0x300] sm:$0xff]
        %v5394 = vld [vmem:[%s6 + $0x308] sm:$0xff]
        %v5395 = vld [vmem:[%s6 + $0x310] sm:$0xff]
        %v5396 = vld [vmem:[%s6 + $0x318] sm:$0xff]
        %v5397 = vld [vmem:[%s6 + $0x320] sm:$0xff]
        %v5398 = vld [vmem:[%s6 + $0x328] sm:$0xff]
        %v5399 = vld [vmem:[%s6 + $0x330] sm:$0xff]
        %v5400 = vld [vmem:[%s6 + $0x338] sm:$0xff]
        %v5401 = vld [vmem:[%s6 + $0x340] sm:$0xff]
        %v5402 = vld [vmem:[%s6 + $0x348] sm:$0xff]
        %v5403 = vld [vmem:[%s6 + $0x350] sm:$0xff]
        %v5404 = vld [vmem:[%s6 + $0x358] sm:$0xff]
        %v5405 = vld [vmem:[%s6 + $0x360] sm:$0xff]
        %v5406 = vld [vmem:[%s6 + $0x368] sm:$0xff]
        %v5407 = vld [vmem:[%s6 + $0x370] sm:$0xff]
        %v5408 = vld [vmem:[%s6 + $0x378] sm:$0xff]
        %v5409 = vld [vmem:[%s6 + $0x380] sm:$0xff]
        %v5410 = vld [vmem:[%s6 + $0x388] sm:$0xff]
        %v5411 = vld [vmem:[%s6 + $0x390] sm:$0xff]
        %v5412 = vld [vmem:[%s6 + $0x398] sm:$0xff]
        %v5413 = vld [vmem:[%s6 + $0x3a0] sm:$0xff]
        %v5414 = vld [vmem:[%s6 + $0x3a8] sm:$0xff]
        %v5415 = vld [vmem:[%s6 + $0x3b0] sm:$0xff]
        %v5416 = vld [vmem:[%s6 + $0x3b8] sm:$0xff]
        %v5417 = vld [vmem:[%s6 + $0x3c0] sm:$0xff]
        %v5418 = vld [vmem:[%s6 + $0x3c8] sm:$0xff]
        %v5419 = vld [vmem:[%s6 + $0x3d0] sm:$0xff]
        %v5420 = vld [vmem:[%s6 + $0x3d8] sm:$0xff]
        %v5421 = vld [vmem:[%s6 + $0x3e0] sm:$0xff]
        %v5422 = vld [vmem:[%s6 + $0x3e8] sm:$0xff]
        %v5423 = vld [vmem:[%s6 + $0x3f0] sm:$0xff]
        %v5424 = vld [vmem:[%s6 + $0x3f8] sm:$0xff]
        %v5426 = vperm.slane %v5296, 0
        %5427 = vset.pattern.permute.xlu0 0
        %5428 = vperm.xlu0 %5427, %v5426
        %v5429 = vpop.permute.xlu0 %5428
        %v5431 = vmul.f32 %v5429, %v5297
        %v5432 = vmul.f32 %v5429, %v5298
        %v5433 = vmul.f32 %v5429, %v5299
        %v5434 = vmul.f32 %v5429, %v5300
        %v5435 = vmul.f32 %v5429, %v5301
        %v5436 = vmul.f32 %v5429, %v5302
        %v5437 = vmul.f32 %v5429, %v5303
        %v5438 = vmul.f32 %v5429, %v5304
        %v5439 = vmul.f32 %v5429, %v5305
        %v5440 = vmul.f32 %v5429, %v5306
        %v5441 = vmul.f32 %v5429, %v5307
        %v5442 = vmul.f32 %v5429, %v5308
        %v5443 = vmul.f32 %v5429, %v5309
        %v5444 = vmul.f32 %v5429, %v5310
        %v5445 = vmul.f32 %v5429, %v5311
        %v5446 = vmul.f32 %v5429, %v5312
        %v5447 = vmul.f32 %v5429, %v5313
        %v5448 = vmul.f32 %v5429, %v5314
        %v5449 = vmul.f32 %v5429, %v5315
        %v5450 = vmul.f32 %v5429, %v5316
        %v5451 = vmul.f32 %v5429, %v5317
        %v5452 = vmul.f32 %v5429, %v5318
        %v5453 = vmul.f32 %v5429, %v5319
        %v5454 = vmul.f32 %v5429, %v5320
        %v5455 = vmul.f32 %v5429, %v5321
        %v5456 = vmul.f32 %v5429, %v5322
        %v5457 = vmul.f32 %v5429, %v5323
        %v5458 = vmul.f32 %v5429, %v5324
        %v5459 = vmul.f32 %v5429, %v5325
        %v5460 = vmul.f32 %v5429, %v5326
        %v5461 = vmul.f32 %v5429, %v5327
        %v5462 = vmul.f32 %v5429, %v5328
        %v5463 = vmul.f32 %v5429, %v5329
        %v5464 = vmul.f32 %v5429, %v5330
        %v5465 = vmul.f32 %v5429, %v5331
        %v5466 = vmul.f32 %v5429, %v5332
        %v5467 = vmul.f32 %v5429, %v5333
        %v5468 = vmul.f32 %v5429, %v5334
        %v5469 = vmul.f32 %v5429, %v5335
        %v5470 = vmul.f32 %v5429, %v5336
        %v5471 = vmul.f32 %v5429, %v5337
        %v5472 = vmul.f32 %v5429, %v5338
        %v5473 = vmul.f32 %v5429, %v5339
        %v5474 = vmul.f32 %v5429, %v5340
        %v5475 = vmul.f32 %v5429, %v5341
        %v5476 = vmul.f32 %v5429, %v5342
        %v5477 = vmul.f32 %v5429, %v5343
        %v5478 = vmul.f32 %v5429, %v5344
        %v5479 = vmul.f32 %v5429, %v5345
        %v5480 = vmul.f32 %v5429, %v5346
        %v5481 = vmul.f32 %v5429, %v5347
        %v5482 = vmul.f32 %v5429, %v5348
        %v5483 = vmul.f32 %v5429, %v5349
        %v5484 = vmul.f32 %v5429, %v5350
        %v5485 = vmul.f32 %v5429, %v5351
        %v5486 = vmul.f32 %v5429, %v5352
        %v5487 = vmul.f32 %v5429, %v5353
        %v5488 = vmul.f32 %v5429, %v5354
        %v5489 = vmul.f32 %v5429, %v5355
        %v5490 = vmul.f32 %v5429, %v5356
        %v5491 = vmul.f32 %v5429, %v5357
        %v5492 = vmul.f32 %v5429, %v5358
        %v5493 = vmul.f32 %v5429, %v5359
        %v5494 = vmul.f32 %v5429, %v5360
        %v5495 = vmul.f32 %v5429, %v5361
        %v5496 = vmul.f32 %v5429, %v5362
        %v5497 = vmul.f32 %v5429, %v5363
        %v5498 = vmul.f32 %v5429, %v5364
        %v5499 = vmul.f32 %v5429, %v5365
        %v5500 = vmul.f32 %v5429, %v5366
        %v5501 = vmul.f32 %v5429, %v5367
        %v5502 = vmul.f32 %v5429, %v5368
        %v5503 = vmul.f32 %v5429, %v5369
        %v5504 = vmul.f32 %v5429, %v5370
        %v5505 = vmul.f32 %v5429, %v5371
        %v5506 = vmul.f32 %v5429, %v5372
        %v5507 = vmul.f32 %v5429, %v5373
        %v5508 = vmul.f32 %v5429, %v5374
        %v5509 = vmul.f32 %v5429, %v5375
        %v5510 = vmul.f32 %v5429, %v5376
        %v5511 = vmul.f32 %v5429, %v5377
        %v5512 = vmul.f32 %v5429, %v5378
        %v5513 = vmul.f32 %v5429, %v5379
        %v5514 = vmul.f32 %v5429, %v5380
        %v5515 = vmul.f32 %v5429, %v5381
        %v5516 = vmul.f32 %v5429, %v5382
        %v5517 = vmul.f32 %v5429, %v5383
        %v5518 = vmul.f32 %v5429, %v5384
        %v5519 = vmul.f32 %v5429, %v5385
        %v5520 = vmul.f32 %v5429, %v5386
        %v5521 = vmul.f32 %v5429, %v5387
        %v5522 = vmul.f32 %v5429, %v5388
        %v5523 = vmul.f32 %v5429, %v5389
        %v5524 = vmul.f32 %v5429, %v5390
        %v5525 = vmul.f32 %v5429, %v5391
        %v5526 = vmul.f32 %v5429, %v5392
        %v5527 = vmul.f32 %v5429, %v5393
        %v5528 = vmul.f32 %v5429, %v5394
        %v5529 = vmul.f32 %v5429, %v5395
        %v5530 = vmul.f32 %v5429, %v5396
        %v5531 = vmul.f32 %v5429, %v5397
        %v5532 = vmul.f32 %v5429, %v5398
        %v5533 = vmul.f32 %v5429, %v5399
        %v5534 = vmul.f32 %v5429, %v5400
        %v5535 = vmul.f32 %v5429, %v5401
        %v5536 = vmul.f32 %v5429, %v5402
        %v5537 = vmul.f32 %v5429, %v5403
        %v5538 = vmul.f32 %v5429, %v5404
        %v5539 = vmul.f32 %v5429, %v5405
        %v5540 = vmul.f32 %v5429, %v5406
        %v5541 = vmul.f32 %v5429, %v5407
        %v5542 = vmul.f32 %v5429, %v5408
        %v5543 = vmul.f32 %v5429, %v5409
        %v5544 = vmul.f32 %v5429, %v5410
        %v5545 = vmul.f32 %v5429, %v5411
        %v5546 = vmul.f32 %v5429, %v5412
        %v5547 = vmul.f32 %v5429, %v5413
        %v5548 = vmul.f32 %v5429, %v5414
        %v5549 = vmul.f32 %v5429, %v5415
        %v5550 = vmul.f32 %v5429, %v5416
        %v5551 = vmul.f32 %v5429, %v5417
        %v5552 = vmul.f32 %v5429, %v5418
        %v5553 = vmul.f32 %v5429, %v5419
        %v5554 = vmul.f32 %v5429, %v5420
        %v5555 = vmul.f32 %v5429, %v5421
        %v5556 = vmul.f32 %v5429, %v5422
        %v5557 = vmul.f32 %v5429, %v5423
        %v5558 = vmul.f32 %v5429, %v5424
        %v5559 = vadd.f32 %v4913, %v5431
        %v5560 = vadd.f32 %v4916, %v5432
        %v5561 = vadd.f32 %v4919, %v5433
        %v5562 = vadd.f32 %v4922, %v5434
        %v5563 = vadd.f32 %v4925, %v5435
        %v5564 = vadd.f32 %v4928, %v5436
        %v5565 = vadd.f32 %v4931, %v5437
        %v5566 = vadd.f32 %v4934, %v5438
        %v5567 = vadd.f32 %v4937, %v5439
        %v5568 = vadd.f32 %v4940, %v5440
        %v5569 = vadd.f32 %v4943, %v5441
        %v5570 = vadd.f32 %v4946, %v5442
        %v5571 = vadd.f32 %v4949, %v5443
        %v5572 = vadd.f32 %v4952, %v5444
        %v5573 = vadd.f32 %v4955, %v5445
        %v5574 = vadd.f32 %v4958, %v5446
        %v5575 = vadd.f32 %v4961, %v5447
        %v5576 = vadd.f32 %v4964, %v5448
        %v5577 = vadd.f32 %v4967, %v5449
        %v5578 = vadd.f32 %v4970, %v5450
        %v5579 = vadd.f32 %v4973, %v5451
        %v5580 = vadd.f32 %v4976, %v5452
        %v5581 = vadd.f32 %v4979, %v5453
        %v5582 = vadd.f32 %v4982, %v5454
        %v5583 = vadd.f32 %v4985, %v5455
        %v5584 = vadd.f32 %v4988, %v5456
        %v5585 = vadd.f32 %v4991, %v5457
        %v5586 = vadd.f32 %v4994, %v5458
        %v5587 = vadd.f32 %v4997, %v5459
        %v5588 = vadd.f32 %v5000, %v5460
        %v5589 = vadd.f32 %v5003, %v5461
        %v5590 = vadd.f32 %v5006, %v5462
        %v5591 = vadd.f32 %v5009, %v5463
        %v5592 = vadd.f32 %v5012, %v5464
        %v5593 = vadd.f32 %v5015, %v5465
        %v5594 = vadd.f32 %v5018, %v5466
        %v5595 = vadd.f32 %v5021, %v5467
        %v5596 = vadd.f32 %v5024, %v5468
        %v5597 = vadd.f32 %v5027, %v5469
        %v5598 = vadd.f32 %v5030, %v5470
        %v5599 = vadd.f32 %v5033, %v5471
        %v5600 = vadd.f32 %v5036, %v5472
        %v5601 = vadd.f32 %v5039, %v5473
        %v5602 = vadd.f32 %v5042, %v5474
        %v5603 = vadd.f32 %v5045, %v5475
        %v5604 = vadd.f32 %v5048, %v5476
        %v5605 = vadd.f32 %v5051, %v5477
        %v5606 = vadd.f32 %v5054, %v5478
        %v5607 = vadd.f32 %v5057, %v5479
        %v5608 = vadd.f32 %v5060, %v5480
        %v5609 = vadd.f32 %v5063, %v5481
        %v5610 = vadd.f32 %v5066, %v5482
        %v5611 = vadd.f32 %v5069, %v5483
        %v5612 = vadd.f32 %v5072, %v5484
        %v5613 = vadd.f32 %v5075, %v5485
        %v5614 = vadd.f32 %v5078, %v5486
        %v5615 = vadd.f32 %v5081, %v5487
        %v5616 = vadd.f32 %v5084, %v5488
        %v5617 = vadd.f32 %v5087, %v5489
        %v5618 = vadd.f32 %v5090, %v5490
        %v5619 = vadd.f32 %v5093, %v5491
        %v5620 = vadd.f32 %v5096, %v5492
        %v5621 = vadd.f32 %v5099, %v5493
        %v5622 = vadd.f32 %v5102, %v5494
        %v5623 = vadd.f32 %v5105, %v5495
        %v5624 = vadd.f32 %v5108, %v5496
        %v5625 = vadd.f32 %v5111, %v5497
        %v5626 = vadd.f32 %v5114, %v5498
        %v5627 = vadd.f32 %v5117, %v5499
        %v5628 = vadd.f32 %v5120, %v5500
        %v5629 = vadd.f32 %v5123, %v5501
        %v5630 = vadd.f32 %v5126, %v5502
        %v5631 = vadd.f32 %v5129, %v5503
        %v5632 = vadd.f32 %v5132, %v5504
        %v5633 = vadd.f32 %v5135, %v5505
        %v5634 = vadd.f32 %v5138, %v5506
        %v5635 = vadd.f32 %v5141, %v5507
        %v5636 = vadd.f32 %v5144, %v5508
        %v5637 = vadd.f32 %v5147, %v5509
        %v5638 = vadd.f32 %v5150, %v5510
        %v5639 = vadd.f32 %v5153, %v5511
        %v5640 = vadd.f32 %v5156, %v5512
        %v5641 = vadd.f32 %v5159, %v5513
        %v5642 = vadd.f32 %v5162, %v5514
        %v5643 = vadd.f32 %v5165, %v5515
        %v5644 = vadd.f32 %v5168, %v5516
        %v5645 = vadd.f32 %v5171, %v5517
        %v5646 = vadd.f32 %v5174, %v5518
        %v5647 = vadd.f32 %v5177, %v5519
        %v5648 = vadd.f32 %v5180, %v5520
        %v5649 = vadd.f32 %v5183, %v5521
        %v5650 = vadd.f32 %v5186, %v5522
        %v5651 = vadd.f32 %v5189, %v5523
        %v5652 = vadd.f32 %v5192, %v5524
        %v5653 = vadd.f32 %v5195, %v5525
        %v5654 = vadd.f32 %v5198, %v5526
        %v5655 = vadd.f32 %v5201, %v5527
        %v5656 = vadd.f32 %v5204, %v5528
        %v5657 = vadd.f32 %v5207, %v5529
        %v5658 = vadd.f32 %v5210, %v5530
        %v5659 = vadd.f32 %v5213, %v5531
        %v5660 = vadd.f32 %v5216, %v5532
        %v5661 = vadd.f32 %v5219, %v5533
        %v5662 = vadd.f32 %v5222, %v5534
        %v5663 = vadd.f32 %v5225, %v5535
        %v5664 = vadd.f32 %v5228, %v5536
        %v5665 = vadd.f32 %v5231, %v5537
        %v5666 = vadd.f32 %v5234, %v5538
        %v5667 = vadd.f32 %v5237, %v5539
        %v5668 = vadd.f32 %v5240, %v5540
        %v5669 = vadd.f32 %v5243, %v5541
        %v5670 = vadd.f32 %v5246, %v5542
        %v5671 = vadd.f32 %v5249, %v5543
        %v5672 = vadd.f32 %v5252, %v5544
        %v5673 = vadd.f32 %v5255, %v5545
        %v5674 = vadd.f32 %v5258, %v5546
        %v5675 = vadd.f32 %v5261, %v5547
        %v5676 = vadd.f32 %v5264, %v5548
        %v5677 = vadd.f32 %v5267, %v5549
        %v5678 = vadd.f32 %v5270, %v5550
        %v5679 = vadd.f32 %v5273, %v5551
        %v5680 = vadd.f32 %v5276, %v5552
        %v5681 = vadd.f32 %v5279, %v5553
        %v5682 = vadd.f32 %v5282, %v5554
        %v5683 = vadd.f32 %v5285, %v5555
        %v5684 = vadd.f32 %v5288, %v5556
        %v5685 = vadd.f32 %v5291, %v5557
        %v5686 = vadd.f32 %v5294, %v5558
        %vm5687 = vcmask 130048
        %5688 = vst.msk [vmem:[%s324] sm:$0xff] %vm5687, %v5559
        %5689 = vst.msk [vmem:[%s324 + $0x8] sm:$0xff] %vm5687, %v5560
        %5690 = vst.msk [vmem:[%s324 + $0x10] sm:$0xff] %vm5687, %v5561
        %5691 = vst.msk [vmem:[%s324 + $0x18] sm:$0xff] %vm5687, %v5562
        %5692 = vst.msk [vmem:[%s324 + $0x20] sm:$0xff] %vm5687, %v5563
        %5693 = vst.msk [vmem:[%s324 + $0x28] sm:$0xff] %vm5687, %v5564
        %5694 = vst.msk [vmem:[%s324 + $0x30] sm:$0xff] %vm5687, %v5565
        %5695 = vst.msk [vmem:[%s324 + $0x38] sm:$0xff] %vm5687, %v5566
        %5696 = vst.msk [vmem:[%s324 + $0x40] sm:$0xff] %vm5687, %v5567
        %5697 = vst.msk [vmem:[%s324 + $0x48] sm:$0xff] %vm5687, %v5568
        %5698 = vst.msk [vmem:[%s324 + $0x50] sm:$0xff] %vm5687, %v5569
        %5699 = vst.msk [vmem:[%s324 + $0x58] sm:$0xff] %vm5687, %v5570
        %5700 = vst.msk [vmem:[%s324 + $0x60] sm:$0xff] %vm5687, %v5571
        %5701 = vst.msk [vmem:[%s324 + $0x68] sm:$0xff] %vm5687, %v5572
        %5702 = vst.msk [vmem:[%s324 + $0x70] sm:$0xff] %vm5687, %v5573
        %5703 = vst.msk [vmem:[%s324 + $0x78] sm:$0xff] %vm5687, %v5574
        %5704 = vst.msk [vmem:[%s324 + $0x80] sm:$0xff] %vm5687, %v5575
        %5705 = vst.msk [vmem:[%s324 + $0x88] sm:$0xff] %vm5687, %v5576
        %5706 = vst.msk [vmem:[%s324 + $0x90] sm:$0xff] %vm5687, %v5577
        %5707 = vst.msk [vmem:[%s324 + $0x98] sm:$0xff] %vm5687, %v5578
        %5708 = vst.msk [vmem:[%s324 + $0xa0] sm:$0xff] %vm5687, %v5579
        %5709 = vst.msk [vmem:[%s324 + $0xa8] sm:$0xff] %vm5687, %v5580
        %5710 = vst.msk [vmem:[%s324 + $0xb0] sm:$0xff] %vm5687, %v5581
        %5711 = vst.msk [vmem:[%s324 + $0xb8] sm:$0xff] %vm5687, %v5582
        %5712 = vst.msk [vmem:[%s324 + $0xc0] sm:$0xff] %vm5687, %v5583
        %5713 = vst.msk [vmem:[%s324 + $0xc8] sm:$0xff] %vm5687, %v5584
        %5714 = vst.msk [vmem:[%s324 + $0xd0] sm:$0xff] %vm5687, %v5585
        %5715 = vst.msk [vmem:[%s324 + $0xd8] sm:$0xff] %vm5687, %v5586
        %5716 = vst.msk [vmem:[%s324 + $0xe0] sm:$0xff] %vm5687, %v5587
        %5717 = vst.msk [vmem:[%s324 + $0xe8] sm:$0xff] %vm5687, %v5588
        %5718 = vst.msk [vmem:[%s324 + $0xf0] sm:$0xff] %vm5687, %v5589
        %5719 = vst.msk [vmem:[%s324 + $0xf8] sm:$0xff] %vm5687, %v5590
        %5720 = vst.msk [vmem:[%s324 + $0x100] sm:$0xff] %vm5687, %v5591
        %5721 = vst.msk [vmem:[%s324 + $0x108] sm:$0xff] %vm5687, %v5592
        %5722 = vst.msk [vmem:[%s324 + $0x110] sm:$0xff] %vm5687, %v5593
        %5723 = vst.msk [vmem:[%s324 + $0x118] sm:$0xff] %vm5687, %v5594
        %5724 = vst.msk [vmem:[%s324 + $0x120] sm:$0xff] %vm5687, %v5595
        %5725 = vst.msk [vmem:[%s324 + $0x128] sm:$0xff] %vm5687, %v5596
        %5726 = vst.msk [vmem:[%s324 + $0x130] sm:$0xff] %vm5687, %v5597
        %5727 = vst.msk [vmem:[%s324 + $0x138] sm:$0xff] %vm5687, %v5598
        %5728 = vst.msk [vmem:[%s324 + $0x140] sm:$0xff] %vm5687, %v5599
        %5729 = vst.msk [vmem:[%s324 + $0x148] sm:$0xff] %vm5687, %v5600
        %5730 = vst.msk [vmem:[%s324 + $0x150] sm:$0xff] %vm5687, %v5601
        %5731 = vst.msk [vmem:[%s324 + $0x158] sm:$0xff] %vm5687, %v5602
        %5732 = vst.msk [vmem:[%s324 + $0x160] sm:$0xff] %vm5687, %v5603
        %5733 = vst.msk [vmem:[%s324 + $0x168] sm:$0xff] %vm5687, %v5604
        %5734 = vst.msk [vmem:[%s324 + $0x170] sm:$0xff] %vm5687, %v5605
        %5735 = vst.msk [vmem:[%s324 + $0x178] sm:$0xff] %vm5687, %v5606
        %5736 = vst.msk [vmem:[%s324 + $0x180] sm:$0xff] %vm5687, %v5607
        %5737 = vst.msk [vmem:[%s324 + $0x188] sm:$0xff] %vm5687, %v5608
        %5738 = vst.msk [vmem:[%s324 + $0x190] sm:$0xff] %vm5687, %v5609
        %5739 = vst.msk [vmem:[%s324 + $0x198] sm:$0xff] %vm5687, %v5610
        %5740 = vst.msk [vmem:[%s324 + $0x1a0] sm:$0xff] %vm5687, %v5611
        %5741 = vst.msk [vmem:[%s324 + $0x1a8] sm:$0xff] %vm5687, %v5612
        %5742 = vst.msk [vmem:[%s324 + $0x1b0] sm:$0xff] %vm5687, %v5613
        %5743 = vst.msk [vmem:[%s324 + $0x1b8] sm:$0xff] %vm5687, %v5614
        %5744 = vst.msk [vmem:[%s324 + $0x1c0] sm:$0xff] %vm5687, %v5615
        %5745 = vst.msk [vmem:[%s324 + $0x1c8] sm:$0xff] %vm5687, %v5616
        %5746 = vst.msk [vmem:[%s324 + $0x1d0] sm:$0xff] %vm5687, %v5617
        %5747 = vst.msk [vmem:[%s324 + $0x1d8] sm:$0xff] %vm5687, %v5618
        %5748 = vst.msk [vmem:[%s324 + $0x1e0] sm:$0xff] %vm5687, %v5619
        %5749 = vst.msk [vmem:[%s324 + $0x1e8] sm:$0xff] %vm5687, %v5620
        %5750 = vst.msk [vmem:[%s324 + $0x1f0] sm:$0xff] %vm5687, %v5621
        %5751 = vst.msk [vmem:[%s324 + $0x1f8] sm:$0xff] %vm5687, %v5622
        %5752 = vst.msk [vmem:[%s324 + $0x200] sm:$0xff] %vm5687, %v5623
        %5753 = vst.msk [vmem:[%s324 + $0x208] sm:$0xff] %vm5687, %v5624
        %5754 = vst.msk [vmem:[%s324 + $0x210] sm:$0xff] %vm5687, %v5625
        %5755 = vst.msk [vmem:[%s324 + $0x218] sm:$0xff] %vm5687, %v5626
        %5756 = vst.msk [vmem:[%s324 + $0x220] sm:$0xff] %vm5687, %v5627
        %5757 = vst.msk [vmem:[%s324 + $0x228] sm:$0xff] %vm5687, %v5628
        %5758 = vst.msk [vmem:[%s324 + $0x230] sm:$0xff] %vm5687, %v5629
        %5759 = vst.msk [vmem:[%s324 + $0x238] sm:$0xff] %vm5687, %v5630
        %5760 = vst.msk [vmem:[%s324 + $0x240] sm:$0xff] %vm5687, %v5631
        %5761 = vst.msk [vmem:[%s324 + $0x248] sm:$0xff] %vm5687, %v5632
        %5762 = vst.msk [vmem:[%s324 + $0x250] sm:$0xff] %vm5687, %v5633
        %5763 = vst.msk [vmem:[%s324 + $0x258] sm:$0xff] %vm5687, %v5634
        %5764 = vst.msk [vmem:[%s324 + $0x260] sm:$0xff] %vm5687, %v5635
        %5765 = vst.msk [vmem:[%s324 + $0x268] sm:$0xff] %vm5687, %v5636
        %5766 = vst.msk [vmem:[%s324 + $0x270] sm:$0xff] %vm5687, %v5637
        %5767 = vst.msk [vmem:[%s324 + $0x278] sm:$0xff] %vm5687, %v5638
        %5768 = vst.msk [vmem:[%s324 + $0x280] sm:$0xff] %vm5687, %v5639
        %5769 = vst.msk [vmem:[%s324 + $0x288] sm:$0xff] %vm5687, %v5640
        %5770 = vst.msk [vmem:[%s324 + $0x290] sm:$0xff] %vm5687, %v5641
        %5771 = vst.msk [vmem:[%s324 + $0x298] sm:$0xff] %vm5687, %v5642
        %5772 = vst.msk [vmem:[%s324 + $0x2a0] sm:$0xff] %vm5687, %v5643
        %5773 = vst.msk [vmem:[%s324 + $0x2a8] sm:$0xff] %vm5687, %v5644
        %5774 = vst.msk [vmem:[%s324 + $0x2b0] sm:$0xff] %vm5687, %v5645
        %5775 = vst.msk [vmem:[%s324 + $0x2b8] sm:$0xff] %vm5687, %v5646
        %5776 = vst.msk [vmem:[%s324 + $0x2c0] sm:$0xff] %vm5687, %v5647
        %5777 = vst.msk [vmem:[%s324 + $0x2c8] sm:$0xff] %vm5687, %v5648
        %5778 = vst.msk [vmem:[%s324 + $0x2d0] sm:$0xff] %vm5687, %v5649
        %5779 = vst.msk [vmem:[%s324 + $0x2d8] sm:$0xff] %vm5687, %v5650
        %5780 = vst.msk [vmem:[%s324 + $0x2e0] sm:$0xff] %vm5687, %v5651
        %5781 = vst.msk [vmem:[%s324 + $0x2e8] sm:$0xff] %vm5687, %v5652
        %5782 = vst.msk [vmem:[%s324 + $0x2f0] sm:$0xff] %vm5687, %v5653
        %5783 = vst.msk [vmem:[%s324 + $0x2f8] sm:$0xff] %vm5687, %v5654
        %5784 = vst.msk [vmem:[%s324 + $0x300] sm:$0xff] %vm5687, %v5655
        %5785 = vst.msk [vmem:[%s324 + $0x308] sm:$0xff] %vm5687, %v5656
        %5786 = vst.msk [vmem:[%s324 + $0x310] sm:$0xff] %vm5687, %v5657
        %5787 = vst.msk [vmem:[%s324 + $0x318] sm:$0xff] %vm5687, %v5658
        %5788 = vst.msk [vmem:[%s324 + $0x320] sm:$0xff] %vm5687, %v5659
        %5789 = vst.msk [vmem:[%s324 + $0x328] sm:$0xff] %vm5687, %v5660
        %5790 = vst.msk [vmem:[%s324 + $0x330] sm:$0xff] %vm5687, %v5661
        %5791 = vst.msk [vmem:[%s324 + $0x338] sm:$0xff] %vm5687, %v5662
        %5792 = vst.msk [vmem:[%s324 + $0x340] sm:$0xff] %vm5687, %v5663
        %5793 = vst.msk [vmem:[%s324 + $0x348] sm:$0xff] %vm5687, %v5664
        %5794 = vst.msk [vmem:[%s324 + $0x350] sm:$0xff] %vm5687, %v5665
        %5795 = vst.msk [vmem:[%s324 + $0x358] sm:$0xff] %vm5687, %v5666
        %5796 = vst.msk [vmem:[%s324 + $0x360] sm:$0xff] %vm5687, %v5667
        %5797 = vst.msk [vmem:[%s324 + $0x368] sm:$0xff] %vm5687, %v5668
        %5798 = vst.msk [vmem:[%s324 + $0x370] sm:$0xff] %vm5687, %v5669
        %5799 = vst.msk [vmem:[%s324 + $0x378] sm:$0xff] %vm5687, %v5670
        %5800 = vst.msk [vmem:[%s324 + $0x380] sm:$0xff] %vm5687, %v5671
        %5801 = vst.msk [vmem:[%s324 + $0x388] sm:$0xff] %vm5687, %v5672
        %5802 = vst.msk [vmem:[%s324 + $0x390] sm:$0xff] %vm5687, %v5673
        %5803 = vst.msk [vmem:[%s324 + $0x398] sm:$0xff] %vm5687, %v5674
        %5804 = vst.msk [vmem:[%s324 + $0x3a0] sm:$0xff] %vm5687, %v5675
        %5805 = vst.msk [vmem:[%s324 + $0x3a8] sm:$0xff] %vm5687, %v5676
        %5806 = vst.msk [vmem:[%s324 + $0x3b0] sm:$0xff] %vm5687, %v5677
        %5807 = vst.msk [vmem:[%s324 + $0x3b8] sm:$0xff] %vm5687, %v5678
        %5808 = vst.msk [vmem:[%s324 + $0x3c0] sm:$0xff] %vm5687, %v5679
        %5809 = vst.msk [vmem:[%s324 + $0x3c8] sm:$0xff] %vm5687, %v5680
        %5810 = vst.msk [vmem:[%s324 + $0x3d0] sm:$0xff] %vm5687, %v5681
        %5811 = vst.msk [vmem:[%s324 + $0x3d8] sm:$0xff] %vm5687, %v5682
        %5812 = vst.msk [vmem:[%s324 + $0x3e0] sm:$0xff] %vm5687, %v5683
        %5813 = vst.msk [vmem:[%s324 + $0x3e8] sm:$0xff] %vm5687, %v5684
        %5814 = vst.msk [vmem:[%s324 + $0x3f0] sm:$0xff] %vm5687, %v5685
        %5815 = vst.msk [vmem:[%s324 + $0x3f8] sm:$0xff] %vm5687, %v5686
        %p5816 = scmp.lt.s32.totalorder %s22, 1
        %s5817 = scalar_select %p5816, %s22, 1
        %s5818 = smul.addr %s5817, 128
        %s5819 = smul.addr %s5818, 8
        %s5820 = scalar_lea.vmem %s8, %s5819
        // Predicated region
        $region57: #{tpu_custom_call.1} parent=51 // pred_check
          %p5821 = pneg %p213
        $region58: #{tpu_custom_call.1} parent=51 // pred_check_branch
          %5823 = sbr.rel (%p5821) target = $region60
        $region59: #{tpu_custom_call.1} parent=51 // pred_region
          _
        $region60: #{tpu_custom_call.1} parent=51 // pred_fallthru
          _
      $region52: #{tpu_custom_call.1} parent=5 // pred_fallthru
        _
      %p5824 = scmp.le.s32.totalorder 2, %s17
      // Predicated region
      $region61: #{tpu_custom_call.1} parent=5 // pred_check
        %p5825 = pneg %p5824
      $region62: #{tpu_custom_call.1} parent=5 // pred_check_branch
        %5827 = sbr.rel (%p5825) target = $region64
      $region63: #{tpu_custom_call.1} parent=5 // pred_region
        %s5828 = ssub.s32 %s17, 2
        // Predicated region
        $region65: #{tpu_custom_call.1} parent=63 // pred_check
          %p5829 = pneg %p219
        $region66: #{tpu_custom_call.1} parent=63 // pred_check_branch
          %5831 = sbr.rel (%p5829) target = $region68
        $region67: #{tpu_custom_call.1} parent=63 // pred_region
          %p5832 = scmp.lt.s32.totalorder %s23, 1
          %s5833 = scalar_select %p5832, %s23, 1
          %s5834 = smul.addr %s5833, 128
          %s5835 = smul.addr %s5834, 8
          %s5836 = scalar_lea.vmem %s8, %s5835
        $region68: #{tpu_custom_call.1} parent=63 // pred_fallthru
          _
      $region64: #{tpu_custom_call.1} parent=5 // pred_fallthru
        _
    $region6: #{tpu_custom_call.1} parent=1 // loop_footer
      %s21 = sadd.s32 1, %s17
    $region7: #{tpu_custom_call.1} parent=1 // loop_footer_branch
      %16 = sbr.rel target = $region3
    $region8: #{tpu_custom_call.1} parent=1 // loop_exit
      _
    %5837 = vsyncpa [#allocation4], 1
    %s5838 = scalar_lea.sflag [#allocation4], 1
    %5839 = vsyncpa %s5838, 1

</llo_original>
